<compile_context>
chip_gen: v6e
topology: v6e:2x2x1
jax: 0.10.0
libtpu: 0.0.40
codegen_flags: <defaults>
</compile_context>

<pallas_src>
import functools

import jax
import jax.numpy as jnp
from jax.experimental import pallas as pl
from jax.experimental.pallas import tpu as pltpu


def _round_up(x, m):
    return ((x + m - 1) // m) * m


# ----------------------------------------------------------------------------
# Fused Pallas kernel: matmul (ConvTranspose as im2col GEMM) + bias
#                      + InstanceNorm (over rows = spatial) + LeakyReLU
# ----------------------------------------------------------------------------
def _up_fused_kernel(x_ref, w_ref, b_ref, o_ref, *, alpha, eps):
    # x_ref: (1, M, K_pad)  compute dtype (f32 or bf16)
    # w_ref: (K_pad, C_pad) compute dtype
    # b_ref: (1, C_pad)     f32
    # o_ref: (1, M, C_pad)  f32
    y = jnp.dot(x_ref[0], w_ref[...], preferred_element_type=jnp.float32)
    y = y + b_ref[...]                                   # f32 epilogue
    # InstanceNorm2d (affine=False): per-channel stats over the spatial rows.
    mean = jnp.mean(y, axis=0, keepdims=True)
    var = jnp.mean(jnp.square(y - mean), axis=0, keepdims=True)
    y = (y - mean) * jax.lax.rsqrt(var + eps)
    # LeakyReLU(alpha)
    y = jnp.where(y >= 0, y, alpha * y)
    o_ref[0] = y.astype(o_ref.dtype)


# ----------------------------------------------------------------------------
# Host wrapper: ConvTranspose2d(dim_in, dim_out, k, s, p) -> IN -> LeakyReLU
# ----------------------------------------------------------------------------
@functools.partial(
    jax.jit,
    static_argnames=("stride", "padding", "alpha", "eps", "compute_dtype"),
)
def up_forward(x, wt, b, *, stride, padding, alpha=0.01, eps=1e-5,
               compute_dtype=jnp.float32):
    """x: (N, C_in, H, W); wt: (C_in, C_out, kh, kw) (PyTorch ConvTranspose2d layout)."""
    N, C_in, H, W = x.shape
    ci_w, C_out, kh, kw = wt.shape
    assert ci_w == C_in
    q_h = kh - 1 - padding
    q_w = kw - 1 - padding
    assert q_h >= 0 and q_w >= 0, "padding must be <= kernel_size - 1"
    Ho = (H - 1) * stride - 2 * padding + kh
    Wo = (W - 1) * stride - 2 * padding + kw
    M = Ho * Wo

    if b is None:
        b = jnp.zeros((C_out,), jnp.float32)

    # ConvTranspose == dilate input by stride, pad by (k-1-p), then stride-1 conv
    # with the spatially-flipped, channel-swapped kernel.  One lax.pad does both
    # the interior (dilation) and edge padding.
    xp = jax.lax.pad(
        x, jnp.array(0.0, x.dtype),
        ((0, 0, 0), (0, 0, 0), (q_h, q_h, stride - 1), (q_w, q_w, stride - 1)),
    )
    x_nhwc = jnp.transpose(xp, (0, 2, 3, 1))             # (N, Hp, Wp, C_in)

    # im2col of the dilated/padded input (conv stride is 1 now). K order = (u, v, c).
    cols = [x_nhwc[:, u:u + Ho, v:v + Wo, :] for u in range(kh) for v in range(kw)]
    patches = jnp.stack(cols, axis=3).reshape(N, M, kh * kw * C_in)

    # Equivalent GEMM weight, matching the (u, v, c) column order:
    # w2[(u*kw+v)*C_in + c, o] = wt[c, o, kh-1-u, kw-1-v]
    w2 = jnp.transpose(wt[:, :, ::-1, ::-1], (2, 3, 0, 1)).reshape(kh * kw * C_in, C_out)

    # Lane-dense padding: K and C_out up to multiples of 128 (zero contribution).
    K = kh * kw * C_in
    K_pad = _round_up(K, 128)
    C_pad = _round_up(C_out, 128)
    patches = jnp.pad(patches, ((0, 0), (0, 0), (0, K_pad - K)))
    w2 = jnp.pad(w2, ((0, K_pad - K), (0, C_pad - C_out)))
    b_pad = jnp.pad(b.astype(jnp.float32), (0, C_pad - C_out)).reshape(1, C_pad)

    # bf16 MXU operands on v6e/v7x (accumulation stays f32 inside the kernel).
    patches = patches.astype(compute_dtype)
    w2 = w2.astype(compute_dtype)

    kernel = functools.partial(_up_fused_kernel, alpha=alpha, eps=eps)
    out = pl.pallas_call(
        kernel,
        out_shape=jax.ShapeDtypeStruct((N, M, C_pad), jnp.float32),
        grid=(N,),
        in_specs=[
            pl.BlockSpec((1, M, K_pad), lambda n: (n, 0, 0)),
            pl.BlockSpec((K_pad, C_pad), lambda n: (0, 0)),
            pl.BlockSpec((1, C_pad), lambda n: (0, 0)),
        ],
        out_specs=pl.BlockSpec((1, M, C_pad), lambda n: (n, 0, 0)),
        compiler_params=pltpu.CompilerParams(
            dimension_semantics=("parallel",),   # 2 TCs on v7x each take a sample
        ),
    )(patches, w2, b_pad)

    # Strip channel padding, back to NCHW exactly once.
    out = out[:, :, :C_out].reshape(N, Ho, Wo, C_out)
    return jnp.transpose(out, (0, 3, 1, 2))


# ----------------------------------------------------------------------------
# Pure-JAX reference (independent path: XLA dilated conv) for self-check
# ----------------------------------------------------------------------------
def _ref_forward(x, wt, b, *, stride, padding, alpha=0.01, eps=1e-5):
    C_in, C_out, kh, kw = wt.shape
    q_h = kh - 1 - padding
    q_w = kw - 1 - padding
    w_conv = jnp.transpose(wt[:, :, ::-1, ::-1], (1, 0, 2, 3))   # (C_out, C_in, kh, kw)
    y = jax.lax.conv_general_dilated(
        x, w_conv, window_strides=(1, 1),
        padding=[(q_h, q_h), (q_w, q_w)],
        lhs_dilation=(stride, stride),
        dimension_numbers=("NCHW", "OIHW", "NCHW"),
    )
    if b is not None:
        y = y + b.reshape(1, -1, 1, 1)
    mean = y.mean(axis=(2, 3), keepdims=True)
    var = jnp.square(y - mean).mean(axis=(2, 3), keepdims=True)
    y = (y - mean) * jax.lax.rsqrt(var + eps)
    return jnp.where(y >= 0, y, alpha * y)


if __name__ == "__main__":
    key = jax.random.PRNGKey(0)
    kx, kw_, kb_ = jax.random.split(key, 3)

    # up(dim_in=32, dim_out=16, kernel_size=4, stride=2, padding=1)
    N, dim_in, Hs, Ws = 2, 32, 16, 16
    dim_out, ksz, stride, padding = 16, 4, 2, 1

    x = jax.random.normal(kx, (N, dim_in, Hs, Ws), dtype=jnp.float32)
    fan_in = dim_out * ksz * ksz
    bound = 1.0 / (fan_in ** 0.5)
    wt = jax.random.uniform(kw_, (dim_in, dim_out, ksz, ksz), jnp.float32, -bound, bound)
    b = jax.random.uniform(kb_, (dim_out,), jnp.float32, -bound, bound)

    # f32 path (exact self-check against XLA dilated-conv reference).
    out = jax.block_until_ready(up_forward(x, wt, b, stride=stride, padding=padding))
    ref = jax.block_until_ready(_ref_forward(x, wt, b, stride=stride, padding=padding))
    assert out.shape == (N, dim_out, 32, 32), out.shape
    assert jnp.allclose(out, ref, rtol=2e-4, atol=2e-4), \
        float(jnp.max(jnp.abs(out - ref)))

    # bf16 MXU-operand path (recommended on v6e/v7x); f32 accumulate + epilogue.
    out_bf16 = jax.block_until_ready(
        up_forward(x, wt, b, stride=stride, padding=padding,
                   compute_dtype=jnp.bfloat16))
    assert jnp.allclose(out_bf16, ref, rtol=5e-2, atol=6e-2), \
        float(jnp.max(jnp.abs(out_bf16 - ref)))

    print("KERNEL_OK")
</pallas_src>

<mosaic_0001>
module attributes {stable_mosaic.version = 11 : i64} {
  func.func @_up_fused_kernel(%arg0: i32, %arg1: memref<1x1024x512xf32, #tpu.memory_space<vmem>>, %arg2: memref<512x128xf32, #tpu.memory_space<vmem>>, %arg3: memref<1x128xf32, #tpu.memory_space<vmem>>, %arg4: memref<1x1024x128xf32, #tpu.memory_space<vmem>>) attributes {dimension_semantics = [#tpu.dimension_semantics<parallel>], iteration_bounds = array<i64: 2>, scalar_prefetch = 0 : i64, scratch_operands = 0 : i64, tpu.core_type = #tpu.core_type<tc>, window_params = [{transform_indices = @transform_0, window_bounds = array<i64: 1, 1024, 512>}, {pipeline_mode = #tpu.pipeline_mode<synchronous>, transform_indices = @transform_1, window_bounds = array<i64: 512, 128>}, {pipeline_mode = #tpu.pipeline_mode<synchronous>, transform_indices = @transform_2, window_bounds = array<i64: 1, 128>}, {transform_indices = @transform_3, window_bounds = array<i64: 1, 1024, 128>}]} {
    %c0 = arith.constant 0 : index
    %c0_0 = arith.constant 0 : index
    %c0_1 = arith.constant 0 : index
    %0 = vector.load %arg1[%c0, %c0_0, %c0_1] : memref<1x1024x512xf32, #tpu.memory_space<vmem>>, vector<1x1024x512xf32>
    %1 = vector.shape_cast %0 : vector<1x1024x512xf32> to vector<1024x512xf32>
    %c0_2 = arith.constant 0 : index
    %c0_3 = arith.constant 0 : index
    %2 = vector.load %arg2[%c0_2, %c0_3] : memref<512x128xf32, #tpu.memory_space<vmem>>, vector<512x128xf32>
    %cst = arith.constant dense<0.000000e+00> : vector<1024x128xf32>
    %3 = tpu.matmul %1, %2, %cst {dimension_numbers = #tpu.dot_dimension_numbers<[1], [0], [0], [1], [0, 0, 1, 1], [], []>} : vector<1024x512xf32>, vector<512x128xf32>, vector<1024x128xf32> -> vector<1024x128xf32>
    %c0_4 = arith.constant 0 : index
    %c0_5 = arith.constant 0 : index
    %4 = vector.load %arg3[%c0_4, %c0_5] : memref<1x128xf32, #tpu.memory_space<vmem>>, vector<1x128xf32>
    %5 = vector.broadcast %4 : vector<1x128xf32> to vector<1024x128xf32>
    %6 = arith.addf %3, %5 : vector<1024x128xf32>
    %cst_6 = arith.constant dense<0.000000e+00> : vector<128xf32>
    %7 = vector.multi_reduction <add>, %6, %cst_6 [0] : vector<1024x128xf32> to vector<128xf32>
    %8 = vector.shape_cast %7 : vector<128xf32> to vector<1x128xf32>
    %cst_7 = arith.constant 1.024000e+03 : f32
    %9 = vector.broadcast %cst_7 : f32 to vector<1x128xf32>
    %10 = arith.divf %8, %9 : vector<1x128xf32>
    %11 = vector.broadcast %10 : vector<1x128xf32> to vector<1024x128xf32>
    %12 = arith.subf %6, %11 : vector<1024x128xf32>
    %13 = arith.mulf %12, %12 : vector<1024x128xf32>
    %cst_8 = arith.constant dense<0.000000e+00> : vector<128xf32>
    %14 = vector.multi_reduction <add>, %13, %cst_8 [0] : vector<1024x128xf32> to vector<128xf32>
    %15 = vector.shape_cast %14 : vector<128xf32> to vector<1x128xf32>
    %cst_9 = arith.constant 1.024000e+03 : f32
    %16 = vector.broadcast %cst_9 : f32 to vector<1x128xf32>
    %17 = arith.divf %15, %16 : vector<1x128xf32>
    %18 = vector.broadcast %10 : vector<1x128xf32> to vector<1024x128xf32>
    %19 = arith.subf %6, %18 : vector<1024x128xf32>
    %cst_10 = arith.constant 9.99999974E-6 : f32
    %20 = vector.broadcast %cst_10 : f32 to vector<1x128xf32>
    %21 = arith.addf %17, %20 : vector<1x128xf32>
    %22 = math.rsqrt %21 : vector<1x128xf32>
    %23 = vector.broadcast %22 : vector<1x128xf32> to vector<1024x128xf32>
    %24 = arith.mulf %19, %23 : vector<1024x128xf32>
    %cst_11 = arith.constant 0.000000e+00 : f32
    %25 = vector.broadcast %cst_11 : f32 to vector<1024x128xf32>
    %26 = arith.cmpf oge, %24, %25 : vector<1024x128xf32>
    %cst_12 = arith.constant 0.00999999977 : f32
    %27 = vector.broadcast %cst_12 : f32 to vector<1024x128xf32>
    %28 = arith.mulf %27, %24 : vector<1024x128xf32>
    %29 = arith.select %26, %24, %28 : vector<1024x128xi1>, vector<1024x128xf32>
    %c0_13 = arith.constant 0 : index
    %c0_14 = arith.constant 0 : index
    %c0_15 = arith.constant 0 : index
    %30 = vector.load %arg4[%c0_13, %c0_14, %c0_15] : memref<1x1024x128xf32, #tpu.memory_space<vmem>>, vector<1x1024x128xf32>
    %31 = vector.shape_cast %30 : vector<1x1024x128xf32> to vector<1024x128xf32>
    %32 = vector.shape_cast %29 : vector<1024x128xf32> to vector<1x1024x128xf32>
    tpu.vector_store %arg4[%c0_13, %c0_14, %c0_15], %32 {strides = array<i32>} : memref<1x1024x128xf32, #tpu.memory_space<vmem>>, vector<1x1024x128xf32>,
    return
  }
  func.func @transform_0(%arg0: i32) -> (i32, i32, i32) {
    %c0_i32 = arith.constant 0 : i32
    %c0_i32_0 = arith.constant 0 : i32
    %c0_i32_1 = arith.constant 0 : i32
    return %arg0, %c0_i32, %c0_i32_0 : i32, i32, i32
  }
  func.func @transform_1(%arg0: i32) -> (i32, i32) {
    %c0_i32 = arith.constant 0 : i32
    %c0_i32_0 = arith.constant 0 : i32
    %c0_i32_1 = arith.constant 0 : i32
    return %c0_i32, %c0_i32_0 : i32, i32
  }
  func.func @transform_2(%arg0: i32) -> (i32, i32) {
    %c0_i32 = arith.constant 0 : i32
    %c0_i32_0 = arith.constant 0 : i32
    %c0_i32_1 = arith.constant 0 : i32
    return %c0_i32, %c0_i32_0 : i32, i32
  }
  func.func @transform_3(%arg0: i32) -> (i32, i32, i32) {
    %c0_i32 = arith.constant 0 : i32
    %c0_i32_0 = arith.constant 0 : i32
    %c0_i32_1 = arith.constant 0 : i32
    return %arg0, %c0_i32, %c0_i32_0 : i32, i32, i32
  }
}

</mosaic_0001>

<llo_original>
// kernel: up_forward.1
$region0: #{up_forward.1}
  #allocation0 [shape = 'u32[]', space=smem, size = 0x4, offset = 0x4, fixed_abs, tag = 'smem constant byte address 0x4 - core index']
  #allocation1 [shape = 'u32[144,128]{1,0:T(1,128)}', space=vmem, size = 0x12000, scoped, tag = 'internal scratch']
  %s0 = inlined_call_operand.vmem [shape: f32[2,1024,512], index: 0, kind: input, shape index: {}]
  %s1 = inlined_call_operand.vmem [shape: f32[512,128], index: 1, kind: input, shape index: {}]
  %s2 = inlined_call_operand.vmem [shape: f32[1,128], index: 2, kind: input, shape index: {}]
  %s3 = inlined_call_operand.vmem [shape: f32[2,1024,128], index: 3, kind: output, shape index: {}]
  %s4 = sld [smem:[#allocation0]]
  $region45: #{up_forward.1} parent=0
    _
  %s6 = ssub.s32 1, %s4
  %s7 = scalar_select 0, %s6, %s4
  loop: start=0, step=1, limit=4
  $region2: #{up_forward.1} parent=0 // loop_pre_header
    _
  $region3: #{up_forward.1} parent=0 // loop_header
    %s9 = sphi 0, %s13
    %p10 = scmp.ge.s32.totalorder %s9, 4
    %s19 = sphi 0, %s21
    %s22 = sphi 0, %s19
    %s23 = sphi 0, %s22
    %s39 = sphi 0, %s23
    %s43 = sphi 0, %s43
    %s45 = sphi 0, %s43
    %s46 = sphi 0, %s45
    %s60 = sphi 0, %s46
    %s64 = sphi 0, %s64
    %s66 = sphi 0, %s64
    %s67 = sphi 0, %s66
    %s81 = sphi 0, %s67
    %s87 = sphi 0, %s89
    %s90 = sphi 0, %s87
    %s91 = sphi 0, %s90
    %s107 = sphi 0, %s91
  $region4: #{up_forward.1} parent=0 // loop_header_branch
    %12 = sbr.rel (%p10) target = $region8
  $region5: #{up_forward.1} parent=0 // loop_body
    %s14 = ssub.s32 %s9, 1
    %s15 = ssub.s32 %s9, 2
    %s16 = sadd.s32 %s9, 1
    %s17 = ssub.s32 %s9, %s16
    %p18 = scmp.eq.s32.totalorder %s17, 0
    %s20 = sadd.s32 %s19, 1
    %s21 = scalar_select %p18, %s19, %s20
    %p24 = pneg %p18
    %p25 = scmp.eq.s32.totalorder %s9, 1
    %p26 = por %p24, %p25
    %p27 = scmp.ne.s32.totalorder %s19, %s22
    %p28 = scmp.eq.s32.totalorder %s9, 0
    %p29 = por %p27, %p28
    %p30 = scmp.ne.s32.totalorder %s19, %s22
    %p31 = scmp.eq.s32.totalorder %s14, 1
    %p32 = por %p30, %p31
    %p33 = scmp.ne.s32.totalorder %s22, %s23
    %p34 = scmp.eq.s32.totalorder %s14, 0
    %p35 = por %p33, %p34
    %p36 = scmp.ne.s32.totalorder %s22, %s23
    %p37 = scmp.eq.s32.totalorder %s15, 1
    %p38 = por %p36, %p37
    %p40 = scmp.ne.s32.totalorder %s23, %s39
    %p41 = scmp.eq.s32.totalorder %s15, 0
    %p42 = por %p40, %p41
    %s44 = sadd.s32 %s43, 1
    %p47 = scmp.eq.s32.totalorder %s9, 1
    %p48 = scmp.ne.s32.totalorder %s43, %s45
    %p49 = scmp.eq.s32.totalorder %s9, 0
    %p50 = por %p48, %p49
    %p51 = scmp.ne.s32.totalorder %s43, %s45
    %p52 = scmp.eq.s32.totalorder %s14, 1
    %p53 = por %p51, %p52
    %p54 = scmp.ne.s32.totalorder %s45, %s46
    %p55 = scmp.eq.s32.totalorder %s14, 0
    %p56 = por %p54, %p55
    %p57 = scmp.ne.s32.totalorder %s45, %s46
    %p58 = scmp.eq.s32.totalorder %s15, 1
    %p59 = por %p57, %p58
    %p61 = scmp.ne.s32.totalorder %s46, %s60
    %p62 = scmp.eq.s32.totalorder %s15, 0
    %p63 = por %p61, %p62
    %s65 = sadd.s32 %s64, 1
    %p68 = scmp.eq.s32.totalorder %s9, 1
    %p69 = scmp.ne.s32.totalorder %s64, %s66
    %p70 = scmp.eq.s32.totalorder %s9, 0
    %p71 = por %p69, %p70
    %p72 = scmp.ne.s32.totalorder %s64, %s66
    %p73 = scmp.eq.s32.totalorder %s14, 1
    %p74 = por %p72, %p73
    %p75 = scmp.ne.s32.totalorder %s66, %s67
    %p76 = scmp.eq.s32.totalorder %s14, 0
    %p77 = por %p75, %p76
    %p78 = scmp.ne.s32.totalorder %s66, %s67
    %p79 = scmp.eq.s32.totalorder %s15, 1
    %p80 = por %p78, %p79
    %p82 = scmp.ne.s32.totalorder %s67, %s81
    %p83 = scmp.eq.s32.totalorder %s15, 0
    %p84 = por %p82, %p83
    %s85 = ssub.s32 %s9, %s16
    %p86 = scmp.eq.s32.totalorder %s85, 0
    %s88 = sadd.s32 %s87, 1
    %s89 = scalar_select %p86, %s87, %s88
    %p92 = pneg %p86
    %p93 = scmp.eq.s32.totalorder %s9, 1
    %p94 = por %p92, %p93
    %p95 = scmp.ne.s32.totalorder %s87, %s90
    %p96 = scmp.eq.s32.totalorder %s9, 0
    %p97 = por %p95, %p96
    %p98 = scmp.ne.s32.totalorder %s87, %s90
    %p99 = scmp.eq.s32.totalorder %s14, 1
    %p100 = por %p98, %p99
    %p101 = scmp.ne.s32.totalorder %s90, %s91
    %p102 = scmp.eq.s32.totalorder %s14, 0
    %p103 = por %p101, %p102
    %p104 = scmp.ne.s32.totalorder %s90, %s91
    %p105 = scmp.eq.s32.totalorder %s15, 1
    %p106 = por %p104, %p105
    %p108 = scmp.ne.s32.totalorder %s91, %s107
    %p109 = scmp.eq.s32.totalorder %s15, 0
    %p110 = por %p108, %p109
    %p111 = scmp.le.s32.totalorder 1, %s9
    %p112 = scmp.lt.s32.totalorder %s9, 3
    %p113 = pnand %p111, %p112
    %p114 = pneg %p113
    // Predicated region
    $region9: #{up_forward.1} parent=5 // pred_check
      _
    $region10: #{up_forward.1} parent=5 // pred_check_branch
      %116 = sbr.rel (%p113) target = $region12
    $region11: #{up_forward.1} parent=5 // pred_region
      %s117 = ssub.s32 %s9, 1
      // Predicated region
      $region13: #{up_forward.1} parent=11 // pred_check
        %p118 = pneg %p56
      $region14: #{up_forward.1} parent=11 // pred_check_branch
        %120 = sbr.rel (%p118) target = $region16
      $region15: #{up_forward.1} parent=11 // pred_region
        _
      $region16: #{up_forward.1} parent=11 // pred_fallthru
        _
      // Predicated region
      $region17: #{up_forward.1} parent=11 // pred_check
        %p121 = pneg %p77
      $region18: #{up_forward.1} parent=11 // pred_check_branch
        %123 = sbr.rel (%p121) target = $region20
      $region19: #{up_forward.1} parent=11 // pred_region
        _
      $region20: #{up_forward.1} parent=11 // pred_fallthru
        _
    $region12: #{up_forward.1} parent=5 // pred_fallthru
      _
    %p124 = scmp.lt.s32.totalorder %s9, 2
    // Predicated region
    $region21: #{up_forward.1} parent=5 // pred_check
      %p125 = pneg %p124
    $region22: #{up_forward.1} parent=5 // pred_check_branch
      %127 = sbr.rel (%p125) target = $region24
    $region23: #{up_forward.1} parent=5 // pred_region
      // Predicated region
      $region25: #{up_forward.1} parent=23 // pred_check
        %p128 = pneg %p29
      $region26: #{up_forward.1} parent=23 // pred_check_branch
        %130 = sbr.rel (%p128) target = $region28
      $region27: #{up_forward.1} parent=23 // pred_region
        %p131 = scmp.lt.s32.totalorder %s9, 1
        %s132 = scalar_select %p131, %s9, 1
        %s133 = smul.addr %s132, 512
        %s134 = smul.addr %s133, 8
        %s135 = scalar_lea.vmem %s0, %s134
      $region28: #{up_forward.1} parent=23 // pred_fallthru
        _
    $region24: #{up_forward.1} parent=5 // pred_fallthru
      _
    %p136 = scmp.le.s32.totalorder 1, %s9
    %p137 = scmp.lt.s32.totalorder %s9, 3
    %p138 = pnand %p136, %p137
    %p139 = pneg %p138
    // Predicated region
    $region29: #{up_forward.1} parent=5 // pred_check
      _
    $region30: #{up_forward.1} parent=5 // pred_check_branch
      %141 = sbr.rel (%p138) target = $region32
    $region31: #{up_forward.1} parent=5 // pred_region
      %s142 = ssub.s32 %s9, 1
      %p143 = scmp.lt.s32.totalorder %s14, 1
      %s144 = scalar_select %p143, %s14, 1
      %s145 = smul.addr %s144, 512
      %s146 = smul.addr %s145, 8
      %s147 = scalar_lea.vmem %s0, %s146
      %p148 = pneg %p35
      %p149 = pneg %p32
      %p150 = pneg %p56
      %p151 = pneg %p53
      %p152 = pneg %p77
      %p153 = pneg %p74
      %p154 = pneg %p103
      %p155 = pneg %p100
      %p156 = scmp.lt.s32.totalorder %s14, 1
      %s157 = scalar_select %p156, %s14, 1
      %s158 = smul.addr %s157, 128
      %s159 = smul.addr %s158, 8
      %s160 = scalar_lea.vmem %s3, %s159
      %p161 = scmp.lt.s32.totalorder %s14, 1
      %s162 = scalar_select %p161, %s14, 1
      %s163 = smul.addr %s162, 512
      %s164 = smul.addr %s163, 8
      %s165 = scalar_lea.vmem %s0, %s164
      %p166 = scmp.lt.s32.totalorder %s14, 1
      %s167 = scalar_select %p166, %s14, 1
      %s168 = smul.addr %s167, 128
      %s169 = smul.addr %s168, 8
      %s170 = scalar_lea.vmem %s3, %s169
      %v171 = vld [vmem:[%s165] sm:$0xff]
      %v172 = vld [vmem:[%s165 + $0x8] sm:$0xff]
      %v173 = vld [vmem:[%s165 + $0x10] sm:$0xff]
      %v174 = vld [vmem:[%s165 + $0x18] sm:$0xff]
      %v175 = vld [vmem:[%s165 + $0x20] sm:$0xff]
      %v176 = vld [vmem:[%s165 + $0x28] sm:$0xff]
      %v177 = vld [vmem:[%s165 + $0x30] sm:$0xff]
      %v178 = vld [vmem:[%s165 + $0x38] sm:$0xff]
      %v179 = vld [vmem:[%s165 + $0x40] sm:$0xff]
      %v180 = vld [vmem:[%s165 + $0x48] sm:$0xff]
      %v181 = vld [vmem:[%s165 + $0x50] sm:$0xff]
      %v182 = vld [vmem:[%s165 + $0x58] sm:$0xff]
      %v183 = vld [vmem:[%s165 + $0x60] sm:$0xff]
      %v184 = vld [vmem:[%s165 + $0x68] sm:$0xff]
      %v185 = vld [vmem:[%s165 + $0x70] sm:$0xff]
      %v186 = vld [vmem:[%s165 + $0x78] sm:$0xff]
      %v187 = vld [vmem:[%s165 + $0x80] sm:$0xff]
      %v188 = vld [vmem:[%s165 + $0x88] sm:$0xff]
      %v189 = vld [vmem:[%s165 + $0x90] sm:$0xff]
      %v190 = vld [vmem:[%s165 + $0x98] sm:$0xff]
      %v191 = vld [vmem:[%s165 + $0xa0] sm:$0xff]
      %v192 = vld [vmem:[%s165 + $0xa8] sm:$0xff]
      %v193 = vld [vmem:[%s165 + $0xb0] sm:$0xff]
      %v194 = vld [vmem:[%s165 + $0xb8] sm:$0xff]
      %v195 = vld [vmem:[%s165 + $0xc0] sm:$0xff]
      %v196 = vld [vmem:[%s165 + $0xc8] sm:$0xff]
      %v197 = vld [vmem:[%s165 + $0xd0] sm:$0xff]
      %v198 = vld [vmem:[%s165 + $0xd8] sm:$0xff]
      %v199 = vld [vmem:[%s165 + $0xe0] sm:$0xff]
      %v200 = vld [vmem:[%s165 + $0xe8] sm:$0xff]
      %v201 = vld [vmem:[%s165 + $0xf0] sm:$0xff]
      %v202 = vld [vmem:[%s165 + $0xf8] sm:$0xff]
      %v203 = vld [vmem:[%s165 + $0x100] sm:$0xff]
      %v204 = vld [vmem:[%s165 + $0x108] sm:$0xff]
      %v205 = vld [vmem:[%s165 + $0x110] sm:$0xff]
      %v206 = vld [vmem:[%s165 + $0x118] sm:$0xff]
      %v207 = vld [vmem:[%s165 + $0x120] sm:$0xff]
      %v208 = vld [vmem:[%s165 + $0x128] sm:$0xff]
      %v209 = vld [vmem:[%s165 + $0x130] sm:$0xff]
      %v210 = vld [vmem:[%s165 + $0x138] sm:$0xff]
      %v211 = vld [vmem:[%s165 + $0x140] sm:$0xff]
      %v212 = vld [vmem:[%s165 + $0x148] sm:$0xff]
      %v213 = vld [vmem:[%s165 + $0x150] sm:$0xff]
      %v214 = vld [vmem:[%s165 + $0x158] sm:$0xff]
      %v215 = vld [vmem:[%s165 + $0x160] sm:$0xff]
      %v216 = vld [vmem:[%s165 + $0x168] sm:$0xff]
      %v217 = vld [vmem:[%s165 + $0x170] sm:$0xff]
      %v218 = vld [vmem:[%s165 + $0x178] sm:$0xff]
      %v219 = vld [vmem:[%s165 + $0x180] sm:$0xff]
      %v220 = vld [vmem:[%s165 + $0x188] sm:$0xff]
      %v221 = vld [vmem:[%s165 + $0x190] sm:$0xff]
      %v222 = vld [vmem:[%s165 + $0x198] sm:$0xff]
      %v223 = vld [vmem:[%s165 + $0x1a0] sm:$0xff]
      %v224 = vld [vmem:[%s165 + $0x1a8] sm:$0xff]
      %v225 = vld [vmem:[%s165 + $0x1b0] sm:$0xff]
      %v226 = vld [vmem:[%s165 + $0x1b8] sm:$0xff]
      %v227 = vld [vmem:[%s165 + $0x1c0] sm:$0xff]
      %v228 = vld [vmem:[%s165 + $0x1c8] sm:$0xff]
      %v229 = vld [vmem:[%s165 + $0x1d0] sm:$0xff]
      %v230 = vld [vmem:[%s165 + $0x1d8] sm:$0xff]
      %v231 = vld [vmem:[%s165 + $0x1e0] sm:$0xff]
      %v232 = vld [vmem:[%s165 + $0x1e8] sm:$0xff]
      %v233 = vld [vmem:[%s165 + $0x1f0] sm:$0xff]
      %v234 = vld [vmem:[%s165 + $0x1f8] sm:$0xff]
      %v235 = vld [vmem:[%s165 + $0x200] sm:$0xff]
      %v236 = vld [vmem:[%s165 + $0x208] sm:$0xff]
      %v237 = vld [vmem:[%s165 + $0x210] sm:$0xff]
      %v238 = vld [vmem:[%s165 + $0x218] sm:$0xff]
      %v239 = vld [vmem:[%s165 + $0x220] sm:$0xff]
      %v240 = vld [vmem:[%s165 + $0x228] sm:$0xff]
      %v241 = vld [vmem:[%s165 + $0x230] sm:$0xff]
      %v242 = vld [vmem:[%s165 + $0x238] sm:$0xff]
      %v243 = vld [vmem:[%s165 + $0x240] sm:$0xff]
      %v244 = vld [vmem:[%s165 + $0x248] sm:$0xff]
      %v245 = vld [vmem:[%s165 + $0x250] sm:$0xff]
      %v246 = vld [vmem:[%s165 + $0x258] sm:$0xff]
      %v247 = vld [vmem:[%s165 + $0x260] sm:$0xff]
      %v248 = vld [vmem:[%s165 + $0x268] sm:$0xff]
      %v249 = vld [vmem:[%s165 + $0x270] sm:$0xff]
      %v250 = vld [vmem:[%s165 + $0x278] sm:$0xff]
      %v251 = vld [vmem:[%s165 + $0x280] sm:$0xff]
      %v252 = vld [vmem:[%s165 + $0x288] sm:$0xff]
      %v253 = vld [vmem:[%s165 + $0x290] sm:$0xff]
      %v254 = vld [vmem:[%s165 + $0x298] sm:$0xff]
      %v255 = vld [vmem:[%s165 + $0x2a0] sm:$0xff]
      %v256 = vld [vmem:[%s165 + $0x2a8] sm:$0xff]
      %v257 = vld [vmem:[%s165 + $0x2b0] sm:$0xff]
      %v258 = vld [vmem:[%s165 + $0x2b8] sm:$0xff]
      %v259 = vld [vmem:[%s165 + $0x2c0] sm:$0xff]
      %v260 = vld [vmem:[%s165 + $0x2c8] sm:$0xff]
      %v261 = vld [vmem:[%s165 + $0x2d0] sm:$0xff]
      %v262 = vld [vmem:[%s165 + $0x2d8] sm:$0xff]
      %v263 = vld [vmem:[%s165 + $0x2e0] sm:$0xff]
      %v264 = vld [vmem:[%s165 + $0x2e8] sm:$0xff]
      %v265 = vld [vmem:[%s165 + $0x2f0] sm:$0xff]
      %v266 = vld [vmem:[%s165 + $0x2f8] sm:$0xff]
      %v267 = vld [vmem:[%s165 + $0x300] sm:$0xff]
      %v268 = vld [vmem:[%s165 + $0x308] sm:$0xff]
      %v269 = vld [vmem:[%s165 + $0x310] sm:$0xff]
      %v270 = vld [vmem:[%s165 + $0x318] sm:$0xff]
      %v271 = vld [vmem:[%s165 + $0x320] sm:$0xff]
      %v272 = vld [vmem:[%s165 + $0x328] sm:$0xff]
      %v273 = vld [vmem:[%s165 + $0x330] sm:$0xff]
      %v274 = vld [vmem:[%s165 + $0x338] sm:$0xff]
      %v275 = vld [vmem:[%s165 + $0x340] sm:$0xff]
      %v276 = vld [vmem:[%s165 + $0x348] sm:$0xff]
      %v277 = vld [vmem:[%s165 + $0x350] sm:$0xff]
      %v278 = vld [vmem:[%s165 + $0x358] sm:$0xff]
      %v279 = vld [vmem:[%s165 + $0x360] sm:$0xff]
      %v280 = vld [vmem:[%s165 + $0x368] sm:$0xff]
      %v281 = vld [vmem:[%s165 + $0x370] sm:$0xff]
      %v282 = vld [vmem:[%s165 + $0x378] sm:$0xff]
      %v283 = vld [vmem:[%s165 + $0x380] sm:$0xff]
      %v284 = vld [vmem:[%s165 + $0x388] sm:$0xff]
      %v285 = vld [vmem:[%s165 + $0x390] sm:$0xff]
      %v286 = vld [vmem:[%s165 + $0x398] sm:$0xff]
      %v287 = vld [vmem:[%s165 + $0x3a0] sm:$0xff]
      %v288 = vld [vmem:[%s165 + $0x3a8] sm:$0xff]
      %v289 = vld [vmem:[%s165 + $0x3b0] sm:$0xff]
      %v290 = vld [vmem:[%s165 + $0x3b8] sm:$0xff]
      %v291 = vld [vmem:[%s165 + $0x3c0] sm:$0xff]
      %v292 = vld [vmem:[%s165 + $0x3c8] sm:$0xff]
      %v293 = vld [vmem:[%s165 + $0x3d0] sm:$0xff]
      %v294 = vld [vmem:[%s165 + $0x3d8] sm:$0xff]
      %v295 = vld [vmem:[%s165 + $0x3e0] sm:$0xff]
      %v296 = vld [vmem:[%s165 + $0x3e8] sm:$0xff]
      %v297 = vld [vmem:[%s165 + $0x3f0] sm:$0xff]
      %v298 = vld [vmem:[%s165 + $0x3f8] sm:$0xff]
      %v299 = vld [vmem:[%s165 + $0x400] sm:$0xff]
      %v300 = vld [vmem:[%s165 + $0x408] sm:$0xff]
      %v301 = vld [vmem:[%s165 + $0x410] sm:$0xff]
      %v302 = vld [vmem:[%s165 + $0x418] sm:$0xff]
      %v303 = vld [vmem:[%s165 + $0x420] sm:$0xff]
      %v304 = vld [vmem:[%s165 + $0x428] sm:$0xff]
      %v305 = vld [vmem:[%s165 + $0x430] sm:$0xff]
      %v306 = vld [vmem:[%s165 + $0x438] sm:$0xff]
      %v307 = vld [vmem:[%s165 + $0x440] sm:$0xff]
      %v308 = vld [vmem:[%s165 + $0x448] sm:$0xff]
      %v309 = vld [vmem:[%s165 + $0x450] sm:$0xff]
      %v310 = vld [vmem:[%s165 + $0x458] sm:$0xff]
      %v311 = vld [vmem:[%s165 + $0x460] sm:$0xff]
      %v312 = vld [vmem:[%s165 + $0x468] sm:$0xff]
      %v313 = vld [vmem:[%s165 + $0x470] sm:$0xff]
      %v314 = vld [vmem:[%s165 + $0x478] sm:$0xff]
      %v315 = vld [vmem:[%s165 + $0x480] sm:$0xff]
      %v316 = vld [vmem:[%s165 + $0x488] sm:$0xff]
      %v317 = vld [vmem:[%s165 + $0x490] sm:$0xff]
      %v318 = vld [vmem:[%s165 + $0x498] sm:$0xff]
      %v319 = vld [vmem:[%s165 + $0x4a0] sm:$0xff]
      %v320 = vld [vmem:[%s165 + $0x4a8] sm:$0xff]
      %v321 = vld [vmem:[%s165 + $0x4b0] sm:$0xff]
      %v322 = vld [vmem:[%s165 + $0x4b8] sm:$0xff]
      %v323 = vld [vmem:[%s165 + $0x4c0] sm:$0xff]
      %v324 = vld [vmem:[%s165 + $0x4c8] sm:$0xff]
      %v325 = vld [vmem:[%s165 + $0x4d0] sm:$0xff]
      %v326 = vld [vmem:[%s165 + $0x4d8] sm:$0xff]
      %v327 = vld [vmem:[%s165 + $0x4e0] sm:$0xff]
      %v328 = vld [vmem:[%s165 + $0x4e8] sm:$0xff]
      %v329 = vld [vmem:[%s165 + $0x4f0] sm:$0xff]
      %v330 = vld [vmem:[%s165 + $0x4f8] sm:$0xff]
      %v331 = vld [vmem:[%s165 + $0x500] sm:$0xff]
      %v332 = vld [vmem:[%s165 + $0x508] sm:$0xff]
      %v333 = vld [vmem:[%s165 + $0x510] sm:$0xff]
      %v334 = vld [vmem:[%s165 + $0x518] sm:$0xff]
      %v335 = vld [vmem:[%s165 + $0x520] sm:$0xff]
      %v336 = vld [vmem:[%s165 + $0x528] sm:$0xff]
      %v337 = vld [vmem:[%s165 + $0x530] sm:$0xff]
      %v338 = vld [vmem:[%s165 + $0x538] sm:$0xff]
      %v339 = vld [vmem:[%s165 + $0x540] sm:$0xff]
      %v340 = vld [vmem:[%s165 + $0x548] sm:$0xff]
      %v341 = vld [vmem:[%s165 + $0x550] sm:$0xff]
      %v342 = vld [vmem:[%s165 + $0x558] sm:$0xff]
      %v343 = vld [vmem:[%s165 + $0x560] sm:$0xff]
      %v344 = vld [vmem:[%s165 + $0x568] sm:$0xff]
      %v345 = vld [vmem:[%s165 + $0x570] sm:$0xff]
      %v346 = vld [vmem:[%s165 + $0x578] sm:$0xff]
      %v347 = vld [vmem:[%s165 + $0x580] sm:$0xff]
      %v348 = vld [vmem:[%s165 + $0x588] sm:$0xff]
      %v349 = vld [vmem:[%s165 + $0x590] sm:$0xff]
      %v350 = vld [vmem:[%s165 + $0x598] sm:$0xff]
      %v351 = vld [vmem:[%s165 + $0x5a0] sm:$0xff]
      %v352 = vld [vmem:[%s165 + $0x5a8] sm:$0xff]
      %v353 = vld [vmem:[%s165 + $0x5b0] sm:$0xff]
      %v354 = vld [vmem:[%s165 + $0x5b8] sm:$0xff]
      %v355 = vld [vmem:[%s165 + $0x5c0] sm:$0xff]
      %v356 = vld [vmem:[%s165 + $0x5c8] sm:$0xff]
      %v357 = vld [vmem:[%s165 + $0x5d0] sm:$0xff]
      %v358 = vld [vmem:[%s165 + $0x5d8] sm:$0xff]
      %v359 = vld [vmem:[%s165 + $0x5e0] sm:$0xff]
      %v360 = vld [vmem:[%s165 + $0x5e8] sm:$0xff]
      %v361 = vld [vmem:[%s165 + $0x5f0] sm:$0xff]
      %v362 = vld [vmem:[%s165 + $0x5f8] sm:$0xff]
      %v363 = vld [vmem:[%s165 + $0x600] sm:$0xff]
      %v364 = vld [vmem:[%s165 + $0x608] sm:$0xff]
      %v365 = vld [vmem:[%s165 + $0x610] sm:$0xff]
      %v366 = vld [vmem:[%s165 + $0x618] sm:$0xff]
      %v367 = vld [vmem:[%s165 + $0x620] sm:$0xff]
      %v368 = vld [vmem:[%s165 + $0x628] sm:$0xff]
      %v369 = vld [vmem:[%s165 + $0x630] sm:$0xff]
      %v370 = vld [vmem:[%s165 + $0x638] sm:$0xff]
      %v371 = vld [vmem:[%s165 + $0x640] sm:$0xff]
      %v372 = vld [vmem:[%s165 + $0x648] sm:$0xff]
      %v373 = vld [vmem:[%s165 + $0x650] sm:$0xff]
      %v374 = vld [vmem:[%s165 + $0x658] sm:$0xff]
      %v375 = vld [vmem:[%s165 + $0x660] sm:$0xff]
      %v376 = vld [vmem:[%s165 + $0x668] sm:$0xff]
      %v377 = vld [vmem:[%s165 + $0x670] sm:$0xff]
      %v378 = vld [vmem:[%s165 + $0x678] sm:$0xff]
      %v379 = vld [vmem:[%s165 + $0x680] sm:$0xff]
      %v380 = vld [vmem:[%s165 + $0x688] sm:$0xff]
      %v381 = vld [vmem:[%s165 + $0x690] sm:$0xff]
      %v382 = vld [vmem:[%s165 + $0x698] sm:$0xff]
      %v383 = vld [vmem:[%s165 + $0x6a0] sm:$0xff]
      %v384 = vld [vmem:[%s165 + $0x6a8] sm:$0xff]
      %v385 = vld [vmem:[%s165 + $0x6b0] sm:$0xff]
      %v386 = vld [vmem:[%s165 + $0x6b8] sm:$0xff]
      %v387 = vld [vmem:[%s165 + $0x6c0] sm:$0xff]
      %v388 = vld [vmem:[%s165 + $0x6c8] sm:$0xff]
      %v389 = vld [vmem:[%s165 + $0x6d0] sm:$0xff]
      %v390 = vld [vmem:[%s165 + $0x6d8] sm:$0xff]
      %v391 = vld [vmem:[%s165 + $0x6e0] sm:$0xff]
      %v392 = vld [vmem:[%s165 + $0x6e8] sm:$0xff]
      %v393 = vld [vmem:[%s165 + $0x6f0] sm:$0xff]
      %v394 = vld [vmem:[%s165 + $0x6f8] sm:$0xff]
      %v395 = vld [vmem:[%s165 + $0x700] sm:$0xff]
      %v396 = vld [vmem:[%s165 + $0x708] sm:$0xff]
      %v397 = vld [vmem:[%s165 + $0x710] sm:$0xff]
      %v398 = vld [vmem:[%s165 + $0x718] sm:$0xff]
      %v399 = vld [vmem:[%s165 + $0x720] sm:$0xff]
      %v400 = vld [vmem:[%s165 + $0x728] sm:$0xff]
      %v401 = vld [vmem:[%s165 + $0x730] sm:$0xff]
      %v402 = vld [vmem:[%s165 + $0x738] sm:$0xff]
      %v403 = vld [vmem:[%s165 + $0x740] sm:$0xff]
      %v404 = vld [vmem:[%s165 + $0x748] sm:$0xff]
      %v405 = vld [vmem:[%s165 + $0x750] sm:$0xff]
      %v406 = vld [vmem:[%s165 + $0x758] sm:$0xff]
      %v407 = vld [vmem:[%s165 + $0x760] sm:$0xff]
      %v408 = vld [vmem:[%s165 + $0x768] sm:$0xff]
      %v409 = vld [vmem:[%s165 + $0x770] sm:$0xff]
      %v410 = vld [vmem:[%s165 + $0x778] sm:$0xff]
      %v411 = vld [vmem:[%s165 + $0x780] sm:$0xff]
      %v412 = vld [vmem:[%s165 + $0x788] sm:$0xff]
      %v413 = vld [vmem:[%s165 + $0x790] sm:$0xff]
      %v414 = vld [vmem:[%s165 + $0x798] sm:$0xff]
      %v415 = vld [vmem:[%s165 + $0x7a0] sm:$0xff]
      %v416 = vld [vmem:[%s165 + $0x7a8] sm:$0xff]
      %v417 = vld [vmem:[%s165 + $0x7b0] sm:$0xff]
      %v418 = vld [vmem:[%s165 + $0x7b8] sm:$0xff]
      %v419 = vld [vmem:[%s165 + $0x7c0] sm:$0xff]
      %v420 = vld [vmem:[%s165 + $0x7c8] sm:$0xff]
      %v421 = vld [vmem:[%s165 + $0x7d0] sm:$0xff]
      %v422 = vld [vmem:[%s165 + $0x7d8] sm:$0xff]
      %v423 = vld [vmem:[%s165 + $0x7e0] sm:$0xff]
      %v424 = vld [vmem:[%s165 + $0x7e8] sm:$0xff]
      %v425 = vld [vmem:[%s165 + $0x7f0] sm:$0xff]
      %v426 = vld [vmem:[%s165 + $0x7f8] sm:$0xff]
      %v427 = vld [vmem:[%s165 + $0x800] sm:$0xff]
      %v428 = vld [vmem:[%s165 + $0x808] sm:$0xff]
      %v429 = vld [vmem:[%s165 + $0x810] sm:$0xff]
      %v430 = vld [vmem:[%s165 + $0x818] sm:$0xff]
      %v431 = vld [vmem:[%s165 + $0x820] sm:$0xff]
      %v432 = vld [vmem:[%s165 + $0x828] sm:$0xff]
      %v433 = vld [vmem:[%s165 + $0x830] sm:$0xff]
      %v434 = vld [vmem:[%s165 + $0x838] sm:$0xff]
      %v435 = vld [vmem:[%s165 + $0x840] sm:$0xff]
      %v436 = vld [vmem:[%s165 + $0x848] sm:$0xff]
      %v437 = vld [vmem:[%s165 + $0x850] sm:$0xff]
      %v438 = vld [vmem:[%s165 + $0x858] sm:$0xff]
      %v439 = vld [vmem:[%s165 + $0x860] sm:$0xff]
      %v440 = vld [vmem:[%s165 + $0x868] sm:$0xff]
      %v441 = vld [vmem:[%s165 + $0x870] sm:$0xff]
      %v442 = vld [vmem:[%s165 + $0x878] sm:$0xff]
      %v443 = vld [vmem:[%s165 + $0x880] sm:$0xff]
      %v444 = vld [vmem:[%s165 + $0x888] sm:$0xff]
      %v445 = vld [vmem:[%s165 + $0x890] sm:$0xff]
      %v446 = vld [vmem:[%s165 + $0x898] sm:$0xff]
      %v447 = vld [vmem:[%s165 + $0x8a0] sm:$0xff]
      %v448 = vld [vmem:[%s165 + $0x8a8] sm:$0xff]
      %v449 = vld [vmem:[%s165 + $0x8b0] sm:$0xff]
      %v450 = vld [vmem:[%s165 + $0x8b8] sm:$0xff]
      %v451 = vld [vmem:[%s165 + $0x8c0] sm:$0xff]
      %v452 = vld [vmem:[%s165 + $0x8c8] sm:$0xff]
      %v453 = vld [vmem:[%s165 + $0x8d0] sm:$0xff]
      %v454 = vld [vmem:[%s165 + $0x8d8] sm:$0xff]
      %v455 = vld [vmem:[%s165 + $0x8e0] sm:$0xff]
      %v456 = vld [vmem:[%s165 + $0x8e8] sm:$0xff]
      %v457 = vld [vmem:[%s165 + $0x8f0] sm:$0xff]
      %v458 = vld [vmem:[%s165 + $0x8f8] sm:$0xff]
      %v459 = vld [vmem:[%s165 + $0x900] sm:$0xff]
      %v460 = vld [vmem:[%s165 + $0x908] sm:$0xff]
      %v461 = vld [vmem:[%s165 + $0x910] sm:$0xff]
      %v462 = vld [vmem:[%s165 + $0x918] sm:$0xff]
      %v463 = vld [vmem:[%s165 + $0x920] sm:$0xff]
      %v464 = vld [vmem:[%s165 + $0x928] sm:$0xff]
      %v465 = vld [vmem:[%s165 + $0x930] sm:$0xff]
      %v466 = vld [vmem:[%s165 + $0x938] sm:$0xff]
      %v467 = vld [vmem:[%s165 + $0x940] sm:$0xff]
      %v468 = vld [vmem:[%s165 + $0x948] sm:$0xff]
      %v469 = vld [vmem:[%s165 + $0x950] sm:$0xff]
      %v470 = vld [vmem:[%s165 + $0x958] sm:$0xff]
      %v471 = vld [vmem:[%s165 + $0x960] sm:$0xff]
      %v472 = vld [vmem:[%s165 + $0x968] sm:$0xff]
      %v473 = vld [vmem:[%s165 + $0x970] sm:$0xff]
      %v474 = vld [vmem:[%s165 + $0x978] sm:$0xff]
      %v475 = vld [vmem:[%s165 + $0x980] sm:$0xff]
      %v476 = vld [vmem:[%s165 + $0x988] sm:$0xff]
      %v477 = vld [vmem:[%s165 + $0x990] sm:$0xff]
      %v478 = vld [vmem:[%s165 + $0x998] sm:$0xff]
      %v479 = vld [vmem:[%s165 + $0x9a0] sm:$0xff]
      %v480 = vld [vmem:[%s165 + $0x9a8] sm:$0xff]
      %v481 = vld [vmem:[%s165 + $0x9b0] sm:$0xff]
      %v482 = vld [vmem:[%s165 + $0x9b8] sm:$0xff]
      %v483 = vld [vmem:[%s165 + $0x9c0] sm:$0xff]
      %v484 = vld [vmem:[%s165 + $0x9c8] sm:$0xff]
      %v485 = vld [vmem:[%s165 + $0x9d0] sm:$0xff]
      %v486 = vld [vmem:[%s165 + $0x9d8] sm:$0xff]
      %v487 = vld [vmem:[%s165 + $0x9e0] sm:$0xff]
      %v488 = vld [vmem:[%s165 + $0x9e8] sm:$0xff]
      %v489 = vld [vmem:[%s165 + $0x9f0] sm:$0xff]
      %v490 = vld [vmem:[%s165 + $0x9f8] sm:$0xff]
      %v491 = vld [vmem:[%s165 + $0xa00] sm:$0xff]
      %v492 = vld [vmem:[%s165 + $0xa08] sm:$0xff]
      %v493 = vld [vmem:[%s165 + $0xa10] sm:$0xff]
      %v494 = vld [vmem:[%s165 + $0xa18] sm:$0xff]
      %v495 = vld [vmem:[%s165 + $0xa20] sm:$0xff]
      %v496 = vld [vmem:[%s165 + $0xa28] sm:$0xff]
      %v497 = vld [vmem:[%s165 + $0xa30] sm:$0xff]
      %v498 = vld [vmem:[%s165 + $0xa38] sm:$0xff]
      %v499 = vld [vmem:[%s165 + $0xa40] sm:$0xff]
      %v500 = vld [vmem:[%s165 + $0xa48] sm:$0xff]
      %v501 = vld [vmem:[%s165 + $0xa50] sm:$0xff]
      %v502 = vld [vmem:[%s165 + $0xa58] sm:$0xff]
      %v503 = vld [vmem:[%s165 + $0xa60] sm:$0xff]
      %v504 = vld [vmem:[%s165 + $0xa68] sm:$0xff]
      %v505 = vld [vmem:[%s165 + $0xa70] sm:$0xff]
      %v506 = vld [vmem:[%s165 + $0xa78] sm:$0xff]
      %v507 = vld [vmem:[%s165 + $0xa80] sm:$0xff]
      %v508 = vld [vmem:[%s165 + $0xa88] sm:$0xff]
      %v509 = vld [vmem:[%s165 + $0xa90] sm:$0xff]
      %v510 = vld [vmem:[%s165 + $0xa98] sm:$0xff]
      %v511 = vld [vmem:[%s165 + $0xaa0] sm:$0xff]
      %v512 = vld [vmem:[%s165 + $0xaa8] sm:$0xff]
      %v513 = vld [vmem:[%s165 + $0xab0] sm:$0xff]
      %v514 = vld [vmem:[%s165 + $0xab8] sm:$0xff]
      %v515 = vld [vmem:[%s165 + $0xac0] sm:$0xff]
      %v516 = vld [vmem:[%s165 + $0xac8] sm:$0xff]
      %v517 = vld [vmem:[%s165 + $0xad0] sm:$0xff]
      %v518 = vld [vmem:[%s165 + $0xad8] sm:$0xff]
      %v519 = vld [vmem:[%s165 + $0xae0] sm:$0xff]
      %v520 = vld [vmem:[%s165 + $0xae8] sm:$0xff]
      %v521 = vld [vmem:[%s165 + $0xaf0] sm:$0xff]
      %v522 = vld [vmem:[%s165 + $0xaf8] sm:$0xff]
      %v523 = vld [vmem:[%s165 + $0xb00] sm:$0xff]
      %v524 = vld [vmem:[%s165 + $0xb08] sm:$0xff]
      %v525 = vld [vmem:[%s165 + $0xb10] sm:$0xff]
      %v526 = vld [vmem:[%s165 + $0xb18] sm:$0xff]
      %v527 = vld [vmem:[%s165 + $0xb20] sm:$0xff]
      %v528 = vld [vmem:[%s165 + $0xb28] sm:$0xff]
      %v529 = vld [vmem:[%s165 + $0xb30] sm:$0xff]
      %v530 = vld [vmem:[%s165 + $0xb38] sm:$0xff]
      %v531 = vld [vmem:[%s165 + $0xb40] sm:$0xff]
      %v532 = vld [vmem:[%s165 + $0xb48] sm:$0xff]
      %v533 = vld [vmem:[%s165 + $0xb50] sm:$0xff]
      %v534 = vld [vmem:[%s165 + $0xb58] sm:$0xff]
      %v535 = vld [vmem:[%s165 + $0xb60] sm:$0xff]
      %v536 = vld [vmem:[%s165 + $0xb68] sm:$0xff]
      %v537 = vld [vmem:[%s165 + $0xb70] sm:$0xff]
      %v538 = vld [vmem:[%s165 + $0xb78] sm:$0xff]
      %v539 = vld [vmem:[%s165 + $0xb80] sm:$0xff]
      %v540 = vld [vmem:[%s165 + $0xb88] sm:$0xff]
      %v541 = vld [vmem:[%s165 + $0xb90] sm:$0xff]
      %v542 = vld [vmem:[%s165 + $0xb98] sm:$0xff]
      %v543 = vld [vmem:[%s165 + $0xba0] sm:$0xff]
      %v544 = vld [vmem:[%s165 + $0xba8] sm:$0xff]
      %v545 = vld [vmem:[%s165 + $0xbb0] sm:$0xff]
      %v546 = vld [vmem:[%s165 + $0xbb8] sm:$0xff]
      %v547 = vld [vmem:[%s165 + $0xbc0] sm:$0xff]
      %v548 = vld [vmem:[%s165 + $0xbc8] sm:$0xff]
      %v549 = vld [vmem:[%s165 + $0xbd0] sm:$0xff]
      %v550 = vld [vmem:[%s165 + $0xbd8] sm:$0xff]
      %v551 = vld [vmem:[%s165 + $0xbe0] sm:$0xff]
      %v552 = vld [vmem:[%s165 + $0xbe8] sm:$0xff]
      %v553 = vld [vmem:[%s165 + $0xbf0] sm:$0xff]
      %v554 = vld [vmem:[%s165 + $0xbf8] sm:$0xff]
      %v555 = vld [vmem:[%s165 + $0xc00] sm:$0xff]
      %v556 = vld [vmem:[%s165 + $0xc08] sm:$0xff]
      %v557 = vld [vmem:[%s165 + $0xc10] sm:$0xff]
      %v558 = vld [vmem:[%s165 + $0xc18] sm:$0xff]
      %v559 = vld [vmem:[%s165 + $0xc20] sm:$0xff]
      %v560 = vld [vmem:[%s165 + $0xc28] sm:$0xff]
      %v561 = vld [vmem:[%s165 + $0xc30] sm:$0xff]
      %v562 = vld [vmem:[%s165 + $0xc38] sm:$0xff]
      %v563 = vld [vmem:[%s165 + $0xc40] sm:$0xff]
      %v564 = vld [vmem:[%s165 + $0xc48] sm:$0xff]
      %v565 = vld [vmem:[%s165 + $0xc50] sm:$0xff]
      %v566 = vld [vmem:[%s165 + $0xc58] sm:$0xff]
      %v567 = vld [vmem:[%s165 + $0xc60] sm:$0xff]
      %v568 = vld [vmem:[%s165 + $0xc68] sm:$0xff]
      %v569 = vld [vmem:[%s165 + $0xc70] sm:$0xff]
      %v570 = vld [vmem:[%s165 + $0xc78] sm:$0xff]
      %v571 = vld [vmem:[%s165 + $0xc80] sm:$0xff]
      %v572 = vld [vmem:[%s165 + $0xc88] sm:$0xff]
      %v573 = vld [vmem:[%s165 + $0xc90] sm:$0xff]
      %v574 = vld [vmem:[%s165 + $0xc98] sm:$0xff]
      %v575 = vld [vmem:[%s165 + $0xca0] sm:$0xff]
      %v576 = vld [vmem:[%s165 + $0xca8] sm:$0xff]
      %v577 = vld [vmem:[%s165 + $0xcb0] sm:$0xff]
      %v578 = vld [vmem:[%s165 + $0xcb8] sm:$0xff]
      %v579 = vld [vmem:[%s165 + $0xcc0] sm:$0xff]
      %v580 = vld [vmem:[%s165 + $0xcc8] sm:$0xff]
      %v581 = vld [vmem:[%s165 + $0xcd0] sm:$0xff]
      %v582 = vld [vmem:[%s165 + $0xcd8] sm:$0xff]
      %v583 = vld [vmem:[%s165 + $0xce0] sm:$0xff]
      %v584 = vld [vmem:[%s165 + $0xce8] sm:$0xff]
      %v585 = vld [vmem:[%s165 + $0xcf0] sm:$0xff]
      %v586 = vld [vmem:[%s165 + $0xcf8] sm:$0xff]
      %v587 = vld [vmem:[%s165 + $0xd00] sm:$0xff]
      %v588 = vld [vmem:[%s165 + $0xd08] sm:$0xff]
      %v589 = vld [vmem:[%s165 + $0xd10] sm:$0xff]
      %v590 = vld [vmem:[%s165 + $0xd18] sm:$0xff]
      %v591 = vld [vmem:[%s165 + $0xd20] sm:$0xff]
      %v592 = vld [vmem:[%s165 + $0xd28] sm:$0xff]
      %v593 = vld [vmem:[%s165 + $0xd30] sm:$0xff]
      %v594 = vld [vmem:[%s165 + $0xd38] sm:$0xff]
      %v595 = vld [vmem:[%s165 + $0xd40] sm:$0xff]
      %v596 = vld [vmem:[%s165 + $0xd48] sm:$0xff]
      %v597 = vld [vmem:[%s165 + $0xd50] sm:$0xff]
      %v598 = vld [vmem:[%s165 + $0xd58] sm:$0xff]
      %v599 = vld [vmem:[%s165 + $0xd60] sm:$0xff]
      %v600 = vld [vmem:[%s165 + $0xd68] sm:$0xff]
      %v601 = vld [vmem:[%s165 + $0xd70] sm:$0xff]
      %v602 = vld [vmem:[%s165 + $0xd78] sm:$0xff]
      %v603 = vld [vmem:[%s165 + $0xd80] sm:$0xff]
      %v604 = vld [vmem:[%s165 + $0xd88] sm:$0xff]
      %v605 = vld [vmem:[%s165 + $0xd90] sm:$0xff]
      %v606 = vld [vmem:[%s165 + $0xd98] sm:$0xff]
      %v607 = vld [vmem:[%s165 + $0xda0] sm:$0xff]
      %v608 = vld [vmem:[%s165 + $0xda8] sm:$0xff]
      %v609 = vld [vmem:[%s165 + $0xdb0] sm:$0xff]
      %v610 = vld [vmem:[%s165 + $0xdb8] sm:$0xff]
      %v611 = vld [vmem:[%s165 + $0xdc0] sm:$0xff]
      %v612 = vld [vmem:[%s165 + $0xdc8] sm:$0xff]
      %v613 = vld [vmem:[%s165 + $0xdd0] sm:$0xff]
      %v614 = vld [vmem:[%s165 + $0xdd8] sm:$0xff]
      %v615 = vld [vmem:[%s165 + $0xde0] sm:$0xff]
      %v616 = vld [vmem:[%s165 + $0xde8] sm:$0xff]
      %v617 = vld [vmem:[%s165 + $0xdf0] sm:$0xff]
      %v618 = vld [vmem:[%s165 + $0xdf8] sm:$0xff]
      %v619 = vld [vmem:[%s165 + $0xe00] sm:$0xff]
      %v620 = vld [vmem:[%s165 + $0xe08] sm:$0xff]
      %v621 = vld [vmem:[%s165 + $0xe10] sm:$0xff]
      %v622 = vld [vmem:[%s165 + $0xe18] sm:$0xff]
      %v623 = vld [vmem:[%s165 + $0xe20] sm:$0xff]
      %v624 = vld [vmem:[%s165 + $0xe28] sm:$0xff]
      %v625 = vld [vmem:[%s165 + $0xe30] sm:$0xff]
      %v626 = vld [vmem:[%s165 + $0xe38] sm:$0xff]
      %v627 = vld [vmem:[%s165 + $0xe40] sm:$0xff]
      %v628 = vld [vmem:[%s165 + $0xe48] sm:$0xff]
      %v629 = vld [vmem:[%s165 + $0xe50] sm:$0xff]
      %v630 = vld [vmem:[%s165 + $0xe58] sm:$0xff]
      %v631 = vld [vmem:[%s165 + $0xe60] sm:$0xff]
      %v632 = vld [vmem:[%s165 + $0xe68] sm:$0xff]
      %v633 = vld [vmem:[%s165 + $0xe70] sm:$0xff]
      %v634 = vld [vmem:[%s165 + $0xe78] sm:$0xff]
      %v635 = vld [vmem:[%s165 + $0xe80] sm:$0xff]
      %v636 = vld [vmem:[%s165 + $0xe88] sm:$0xff]
      %v637 = vld [vmem:[%s165 + $0xe90] sm:$0xff]
      %v638 = vld [vmem:[%s165 + $0xe98] sm:$0xff]
      %v639 = vld [vmem:[%s165 + $0xea0] sm:$0xff]
      %v640 = vld [vmem:[%s165 + $0xea8] sm:$0xff]
      %v641 = vld [vmem:[%s165 + $0xeb0] sm:$0xff]
      %v642 = vld [vmem:[%s165 + $0xeb8] sm:$0xff]
      %v643 = vld [vmem:[%s165 + $0xec0] sm:$0xff]
      %v644 = vld [vmem:[%s165 + $0xec8] sm:$0xff]
      %v645 = vld [vmem:[%s165 + $0xed0] sm:$0xff]
      %v646 = vld [vmem:[%s165 + $0xed8] sm:$0xff]
      %v647 = vld [vmem:[%s165 + $0xee0] sm:$0xff]
      %v648 = vld [vmem:[%s165 + $0xee8] sm:$0xff]
      %v649 = vld [vmem:[%s165 + $0xef0] sm:$0xff]
      %v650 = vld [vmem:[%s165 + $0xef8] sm:$0xff]
      %v651 = vld [vmem:[%s165 + $0xf00] sm:$0xff]
      %v652 = vld [vmem:[%s165 + $0xf08] sm:$0xff]
      %v653 = vld [vmem:[%s165 + $0xf10] sm:$0xff]
      %v654 = vld [vmem:[%s165 + $0xf18] sm:$0xff]
      %v655 = vld [vmem:[%s165 + $0xf20] sm:$0xff]
      %v656 = vld [vmem:[%s165 + $0xf28] sm:$0xff]
      %v657 = vld [vmem:[%s165 + $0xf30] sm:$0xff]
      %v658 = vld [vmem:[%s165 + $0xf38] sm:$0xff]
      %v659 = vld [vmem:[%s165 + $0xf40] sm:$0xff]
      %v660 = vld [vmem:[%s165 + $0xf48] sm:$0xff]
      %v661 = vld [vmem:[%s165 + $0xf50] sm:$0xff]
      %v662 = vld [vmem:[%s165 + $0xf58] sm:$0xff]
      %v663 = vld [vmem:[%s165 + $0xf60] sm:$0xff]
      %v664 = vld [vmem:[%s165 + $0xf68] sm:$0xff]
      %v665 = vld [vmem:[%s165 + $0xf70] sm:$0xff]
      %v666 = vld [vmem:[%s165 + $0xf78] sm:$0xff]
      %v667 = vld [vmem:[%s165 + $0xf80] sm:$0xff]
      %v668 = vld [vmem:[%s165 + $0xf88] sm:$0xff]
      %v669 = vld [vmem:[%s165 + $0xf90] sm:$0xff]
      %v670 = vld [vmem:[%s165 + $0xf98] sm:$0xff]
      %v671 = vld [vmem:[%s165 + $0xfa0] sm:$0xff]
      %v672 = vld [vmem:[%s165 + $0xfa8] sm:$0xff]
      %v673 = vld [vmem:[%s165 + $0xfb0] sm:$0xff]
      %v674 = vld [vmem:[%s165 + $0xfb8] sm:$0xff]
      %v675 = vld [vmem:[%s165 + $0xfc0] sm:$0xff]
      %v676 = vld [vmem:[%s165 + $0xfc8] sm:$0xff]
      %v677 = vld [vmem:[%s165 + $0xfd0] sm:$0xff]
      %v678 = vld [vmem:[%s165 + $0xfd8] sm:$0xff]
      %v679 = vld [vmem:[%s165 + $0xfe0] sm:$0xff]
      %v680 = vld [vmem:[%s165 + $0xfe8] sm:$0xff]
      %v681 = vld [vmem:[%s165 + $0xff0] sm:$0xff]
      %v682 = vld [vmem:[%s165 + $0xff8] sm:$0xff]
      %v683 = vld [vmem:[%s1] sm:$0xff]
      %v684 = vld [vmem:[%s1 + $0x8] sm:$0xff]
      %v685 = vld [vmem:[%s1 + $0x10] sm:$0xff]
      %v686 = vld [vmem:[%s1 + $0x18] sm:$0xff]
      %v687 = vld [vmem:[%s1 + $0x20] sm:$0xff]
      %v688 = vld [vmem:[%s1 + $0x28] sm:$0xff]
      %v689 = vld [vmem:[%s1 + $0x30] sm:$0xff]
      %v690 = vld [vmem:[%s1 + $0x38] sm:$0xff]
      %v691 = vld [vmem:[%s1 + $0x40] sm:$0xff]
      %v692 = vld [vmem:[%s1 + $0x48] sm:$0xff]
      %v693 = vld [vmem:[%s1 + $0x50] sm:$0xff]
      %v694 = vld [vmem:[%s1 + $0x58] sm:$0xff]
      %v695 = vld [vmem:[%s1 + $0x60] sm:$0xff]
      %v696 = vld [vmem:[%s1 + $0x68] sm:$0xff]
      %v697 = vld [vmem:[%s1 + $0x70] sm:$0xff]
      %v698 = vld [vmem:[%s1 + $0x78] sm:$0xff]
      %v699 = vld [vmem:[%s1 + $0x80] sm:$0xff]
      %v700 = vld [vmem:[%s1 + $0x88] sm:$0xff]
      %v701 = vld [vmem:[%s1 + $0x90] sm:$0xff]
      %v702 = vld [vmem:[%s1 + $0x98] sm:$0xff]
      %v703 = vld [vmem:[%s1 + $0xa0] sm:$0xff]
      %v704 = vld [vmem:[%s1 + $0xa8] sm:$0xff]
      %v705 = vld [vmem:[%s1 + $0xb0] sm:$0xff]
      %v706 = vld [vmem:[%s1 + $0xb8] sm:$0xff]
      %v707 = vld [vmem:[%s1 + $0xc0] sm:$0xff]
      %v708 = vld [vmem:[%s1 + $0xc8] sm:$0xff]
      %v709 = vld [vmem:[%s1 + $0xd0] sm:$0xff]
      %v710 = vld [vmem:[%s1 + $0xd8] sm:$0xff]
      %v711 = vld [vmem:[%s1 + $0xe0] sm:$0xff]
      %v712 = vld [vmem:[%s1 + $0xe8] sm:$0xff]
      %v713 = vld [vmem:[%s1 + $0xf0] sm:$0xff]
      %v714 = vld [vmem:[%s1 + $0xf8] sm:$0xff]
      %v715 = vld [vmem:[%s1 + $0x100] sm:$0xff]
      %v716 = vld [vmem:[%s1 + $0x108] sm:$0xff]
      %v717 = vld [vmem:[%s1 + $0x110] sm:$0xff]
      %v718 = vld [vmem:[%s1 + $0x118] sm:$0xff]
      %v719 = vld [vmem:[%s1 + $0x120] sm:$0xff]
      %v720 = vld [vmem:[%s1 + $0x128] sm:$0xff]
      %v721 = vld [vmem:[%s1 + $0x130] sm:$0xff]
      %v722 = vld [vmem:[%s1 + $0x138] sm:$0xff]
      %v723 = vld [vmem:[%s1 + $0x140] sm:$0xff]
      %v724 = vld [vmem:[%s1 + $0x148] sm:$0xff]
      %v725 = vld [vmem:[%s1 + $0x150] sm:$0xff]
      %v726 = vld [vmem:[%s1 + $0x158] sm:$0xff]
      %v727 = vld [vmem:[%s1 + $0x160] sm:$0xff]
      %v728 = vld [vmem:[%s1 + $0x168] sm:$0xff]
      %v729 = vld [vmem:[%s1 + $0x170] sm:$0xff]
      %v730 = vld [vmem:[%s1 + $0x178] sm:$0xff]
      %v731 = vld [vmem:[%s1 + $0x180] sm:$0xff]
      %v732 = vld [vmem:[%s1 + $0x188] sm:$0xff]
      %v733 = vld [vmem:[%s1 + $0x190] sm:$0xff]
      %v734 = vld [vmem:[%s1 + $0x198] sm:$0xff]
      %v735 = vld [vmem:[%s1 + $0x1a0] sm:$0xff]
      %v736 = vld [vmem:[%s1 + $0x1a8] sm:$0xff]
      %v737 = vld [vmem:[%s1 + $0x1b0] sm:$0xff]
      %v738 = vld [vmem:[%s1 + $0x1b8] sm:$0xff]
      %v739 = vld [vmem:[%s1 + $0x1c0] sm:$0xff]
      %v740 = vld [vmem:[%s1 + $0x1c8] sm:$0xff]
      %v741 = vld [vmem:[%s1 + $0x1d0] sm:$0xff]
      %v742 = vld [vmem:[%s1 + $0x1d8] sm:$0xff]
      %v743 = vld [vmem:[%s1 + $0x1e0] sm:$0xff]
      %v744 = vld [vmem:[%s1 + $0x1e8] sm:$0xff]
      %v745 = vld [vmem:[%s1 + $0x1f0] sm:$0xff]
      %v746 = vld [vmem:[%s1 + $0x1f8] sm:$0xff]
      %v747 = vld [vmem:[%s2] sm:$0x1]
      %v749 = vlaneseq
      %v750 = vshrl.u32 %v749, 7
      %v751 = vsub.s32 0, %v750
      %v752 = vrot.slane %v747, %v751
      %754 = vmatprep.subr.mxu0 0.0
      %755 = vmatpush1.msra.mxu0 %v698
      %756 = vmatprep.subr.mxu0 0.0
      %757 = vmatpush1.msra.mxu0 %v697
      %758 = vmatprep.subr.mxu0 0.0
      %759 = vmatpush1.msra.mxu0 %v696
      %760 = vmatprep.subr.mxu0 0.0
      %761 = vmatpush1.msra.mxu0 %v695
      %762 = vmatprep.subr.mxu0 0.0
      %763 = vmatpush1.msra.mxu0 %v694
      %764 = vmatprep.subr.mxu0 0.0
      %765 = vmatpush1.msra.mxu0 %v693
      %766 = vmatprep.subr.mxu0 0.0
      %767 = vmatpush1.msra.mxu0 %v692
      %768 = vmatprep.subr.mxu0 0.0
      %769 = vmatpush1.msra.mxu0 %v691
      %770 = vmatprep.subr.mxu0 0.0
      %771 = vmatpush1.msra.mxu0 %v690
      %772 = vmatprep.subr.mxu0 0.0
      %773 = vmatpush1.msra.mxu0 %v689
      %774 = vmatprep.subr.mxu0 0.0
      %775 = vmatpush1.msra.mxu0 %v688
      %776 = vmatprep.subr.mxu0 0.0
      %777 = vmatpush1.msra.mxu0 %v687
      %778 = vmatprep.subr.mxu0 0.0
      %779 = vmatpush1.msra.mxu0 %v686
      %780 = vmatprep.subr.mxu0 0.0
      %781 = vmatpush1.msra.mxu0 %v685
      %782 = vmatprep.subr.mxu0 0.0
      %783 = vmatpush1.msra.mxu0 %v684
      %784 = vmatprep.subr.mxu0 0.0
      %785 = vmatpush1.msra.mxu0 %v683
      %786 = vmatprep.subr.mxu0 0.0
      %787 = vmatpush2.msra.mxu0 %v714
      %788 = vmatprep.subr.mxu0 0.0
      %789 = vmatpush2.msra.mxu0 %v713
      %790 = vmatprep.subr.mxu0 0.0
      %791 = vmatpush2.msra.mxu0 %v712
      %792 = vmatprep.subr.mxu0 0.0
      %793 = vmatpush2.msra.mxu0 %v711
      %794 = vmatprep.subr.mxu0 0.0
      %795 = vmatpush2.msra.mxu0 %v710
      %796 = vmatprep.subr.mxu0 0.0
      %797 = vmatpush2.msra.mxu0 %v709
      %798 = vmatprep.subr.mxu0 0.0
      %799 = vmatpush2.msra.mxu0 %v708
      %800 = vmatprep.subr.mxu0 0.0
      %801 = vmatpush2.msra.mxu0 %v707
      %802 = vmatprep.subr.mxu0 0.0
      %803 = vmatpush2.msra.mxu0 %v706
      %804 = vmatprep.subr.mxu0 0.0
      %805 = vmatpush2.msra.mxu0 %v705
      %806 = vmatprep.subr.mxu0 0.0
      %807 = vmatpush2.msra.mxu0 %v704
      %808 = vmatprep.subr.mxu0 0.0
      %809 = vmatpush2.msra.mxu0 %v703
      %810 = vmatprep.subr.mxu0 0.0
      %811 = vmatpush2.msra.mxu0 %v702
      %812 = vmatprep.subr.mxu0 0.0
      %813 = vmatpush2.msra.mxu0 %v701
      %814 = vmatprep.subr.mxu0 0.0
      %815 = vmatpush2.msra.mxu0 %v700
      %816 = vmatprep.subr.mxu0 0.0
      %817 = vmatpush2.msra.mxu0 %v699
      %818 = vmatprep.mubr.f32.mxu0 %v172
      %819 = vmatmul.mubr.f32.gmra.mxu0 %v171
      %v820 = vpop.f32.mrf.mxu0
      %v821 = vadd.f32 %v752, %v820
      %v822 = vpop.f32.mrf.mxu0
      %823 = vmatprep.mubr.f32.mxu0 %v176
      %824 = vmatmul.mubr.f32.gmra.mxu0 %v175
      %v825 = vpop.f32.mrf.mxu0
      %v826 = vadd.f32 %v752, %v825
      %v827 = vpop.f32.mrf.mxu0
      %828 = vmatprep.mubr.f32.mxu0 %v180
      %829 = vmatmul.mubr.f32.gmra.mxu0 %v179
      %v830 = vpop.f32.mrf.mxu0
      %v831 = vadd.f32 %v752, %v830
      %v832 = vpop.f32.mrf.mxu0
      %833 = vmatprep.mubr.f32.mxu0 %v184
      %834 = vmatmul.mubr.f32.gmra.mxu0 %v183
      %v835 = vpop.f32.mrf.mxu0
      %v836 = vadd.f32 %v752, %v835
      %v837 = vpop.f32.mrf.mxu0
      %838 = vmatprep.mubr.f32.mxu0 %v188
      %839 = vmatmul.mubr.f32.gmra.mxu0 %v187
      %v840 = vpop.f32.mrf.mxu0
      %v841 = vadd.f32 %v752, %v840
      %v842 = vpop.f32.mrf.mxu0
      %843 = vmatprep.mubr.f32.mxu0 %v192
      %844 = vmatmul.mubr.f32.gmra.mxu0 %v191
      %v845 = vpop.f32.mrf.mxu0
      %v846 = vadd.f32 %v752, %v845
      %v847 = vpop.f32.mrf.mxu0
      %848 = vmatprep.mubr.f32.mxu0 %v196
      %849 = vmatmul.mubr.f32.gmra.mxu0 %v195
      %v850 = vpop.f32.mrf.mxu0
      %v851 = vadd.f32 %v752, %v850
      %v852 = vpop.f32.mrf.mxu0
      %853 = vmatprep.mubr.f32.mxu0 %v200
      %854 = vmatmul.mubr.f32.gmra.mxu0 %v199
      %v855 = vpop.f32.mrf.mxu0
      %v856 = vadd.f32 %v752, %v855
      %v857 = vpop.f32.mrf.mxu0
      %858 = vmatprep.mubr.f32.mxu0 %v204
      %859 = vmatmul.mubr.f32.gmra.mxu0 %v203
      %v860 = vpop.f32.mrf.mxu0
      %v861 = vadd.f32 %v752, %v860
      %v862 = vpop.f32.mrf.mxu0
      %863 = vmatprep.mubr.f32.mxu0 %v208
      %864 = vmatmul.mubr.f32.gmra.mxu0 %v207
      %v865 = vpop.f32.mrf.mxu0
      %v866 = vadd.f32 %v752, %v865
      %v867 = vpop.f32.mrf.mxu0
      %868 = vmatprep.mubr.f32.mxu0 %v212
      %869 = vmatmul.mubr.f32.gmra.mxu0 %v211
      %v870 = vpop.f32.mrf.mxu0
      %v871 = vadd.f32 %v752, %v870
      %v872 = vpop.f32.mrf.mxu0
      %873 = vmatprep.mubr.f32.mxu0 %v216
      %874 = vmatmul.mubr.f32.gmra.mxu0 %v215
      %v875 = vpop.f32.mrf.mxu0
      %v876 = vadd.f32 %v752, %v875
      %v877 = vpop.f32.mrf.mxu0
      %878 = vmatprep.mubr.f32.mxu0 %v220
      %879 = vmatmul.mubr.f32.gmra.mxu0 %v219
      %v880 = vpop.f32.mrf.mxu0
      %v881 = vadd.f32 %v752, %v880
      %v882 = vpop.f32.mrf.mxu0
      %883 = vmatprep.mubr.f32.mxu0 %v224
      %884 = vmatmul.mubr.f32.gmra.mxu0 %v223
      %v885 = vpop.f32.mrf.mxu0
      %v886 = vadd.f32 %v752, %v885
      %v887 = vpop.f32.mrf.mxu0
      %888 = vmatprep.mubr.f32.mxu0 %v228
      %889 = vmatmul.mubr.f32.gmra.mxu0 %v227
      %v890 = vpop.f32.mrf.mxu0
      %v891 = vadd.f32 %v752, %v890
      %v892 = vpop.f32.mrf.mxu0
      %893 = vmatprep.mubr.f32.mxu0 %v232
      %894 = vmatmul.mubr.f32.gmra.mxu0 %v231
      %v895 = vpop.f32.mrf.mxu0
      %v896 = vadd.f32 %v752, %v895
      %v897 = vpop.f32.mrf.mxu0
      %898 = vmatprep.mubr.f32.mxu0 %v236
      %899 = vmatmul.mubr.f32.gmra.mxu0 %v235
      %v900 = vpop.f32.mrf.mxu0
      %v901 = vadd.f32 %v752, %v900
      %v902 = vpop.f32.mrf.mxu0
      %903 = vmatprep.mubr.f32.mxu0 %v240
      %904 = vmatmul.mubr.f32.gmra.mxu0 %v239
      %v905 = vpop.f32.mrf.mxu0
      %v906 = vadd.f32 %v752, %v905
      %v907 = vpop.f32.mrf.mxu0
      %908 = vmatprep.mubr.f32.mxu0 %v244
      %909 = vmatmul.mubr.f32.gmra.mxu0 %v243
      %v910 = vpop.f32.mrf.mxu0
      %v911 = vadd.f32 %v752, %v910
      %v912 = vpop.f32.mrf.mxu0
      %913 = vmatprep.mubr.f32.mxu0 %v248
      %914 = vmatmul.mubr.f32.gmra.mxu0 %v247
      %v915 = vpop.f32.mrf.mxu0
      %v916 = vadd.f32 %v752, %v915
      %v917 = vpop.f32.mrf.mxu0
      %918 = vmatprep.mubr.f32.mxu0 %v252
      %919 = vmatmul.mubr.f32.gmra.mxu0 %v251
      %v920 = vpop.f32.mrf.mxu0
      %v921 = vadd.f32 %v752, %v920
      %v922 = vpop.f32.mrf.mxu0
      %923 = vmatprep.mubr.f32.mxu0 %v256
      %924 = vmatmul.mubr.f32.gmra.mxu0 %v255
      %v925 = vpop.f32.mrf.mxu0
      %v926 = vadd.f32 %v752, %v925
      %v927 = vpop.f32.mrf.mxu0
      %928 = vmatprep.mubr.f32.mxu0 %v260
      %929 = vmatmul.mubr.f32.gmra.mxu0 %v259
      %v930 = vpop.f32.mrf.mxu0
      %v931 = vadd.f32 %v752, %v930
      %v932 = vpop.f32.mrf.mxu0
      %933 = vmatprep.mubr.f32.mxu0 %v264
      %934 = vmatmul.mubr.f32.gmra.mxu0 %v263
      %v935 = vpop.f32.mrf.mxu0
      %v936 = vadd.f32 %v752, %v935
      %v937 = vpop.f32.mrf.mxu0
      %938 = vmatprep.mubr.f32.mxu0 %v268
      %939 = vmatmul.mubr.f32.gmra.mxu0 %v267
      %v940 = vpop.f32.mrf.mxu0
      %v941 = vadd.f32 %v752, %v940
      %v942 = vpop.f32.mrf.mxu0
      %943 = vmatprep.mubr.f32.mxu0 %v272
      %944 = vmatmul.mubr.f32.gmra.mxu0 %v271
      %v945 = vpop.f32.mrf.mxu0
      %v946 = vadd.f32 %v752, %v945
      %v947 = vpop.f32.mrf.mxu0
      %948 = vmatprep.mubr.f32.mxu0 %v276
      %949 = vmatmul.mubr.f32.gmra.mxu0 %v275
      %v950 = vpop.f32.mrf.mxu0
      %v951 = vadd.f32 %v752, %v950
      %v952 = vpop.f32.mrf.mxu0
      %953 = vmatprep.mubr.f32.mxu0 %v280
      %954 = vmatmul.mubr.f32.gmra.mxu0 %v279
      %v955 = vpop.f32.mrf.mxu0
      %v956 = vadd.f32 %v752, %v955
      %v957 = vpop.f32.mrf.mxu0
      %958 = vmatprep.mubr.f32.mxu0 %v284
      %959 = vmatmul.mubr.f32.gmra.mxu0 %v283
      %v960 = vpop.f32.mrf.mxu0
      %v961 = vadd.f32 %v752, %v960
      %v962 = vpop.f32.mrf.mxu0
      %963 = vmatprep.mubr.f32.mxu0 %v288
      %964 = vmatmul.mubr.f32.gmra.mxu0 %v287
      %v965 = vpop.f32.mrf.mxu0
      %v966 = vadd.f32 %v752, %v965
      %v967 = vpop.f32.mrf.mxu0
      %968 = vmatprep.mubr.f32.mxu0 %v292
      %969 = vmatmul.mubr.f32.gmra.mxu0 %v291
      %v970 = vpop.f32.mrf.mxu0
      %v971 = vadd.f32 %v752, %v970
      %v972 = vpop.f32.mrf.mxu0
      %973 = vmatprep.mubr.f32.mxu0 %v296
      %974 = vmatmul.mubr.f32.gmra.mxu0 %v295
      %v975 = vpop.f32.mrf.mxu0
      %v976 = vadd.f32 %v752, %v975
      %v977 = vpop.f32.mrf.mxu0
      %978 = vmatprep.mubr.f32.mxu0 %v300
      %979 = vmatmul.mubr.f32.gmra.mxu0 %v299
      %v980 = vpop.f32.mrf.mxu0
      %v981 = vadd.f32 %v752, %v980
      %v982 = vpop.f32.mrf.mxu0
      %983 = vmatprep.mubr.f32.mxu0 %v304
      %984 = vmatmul.mubr.f32.gmra.mxu0 %v303
      %v985 = vpop.f32.mrf.mxu0
      %v986 = vadd.f32 %v752, %v985
      %v987 = vpop.f32.mrf.mxu0
      %988 = vmatprep.mubr.f32.mxu0 %v308
      %989 = vmatmul.mubr.f32.gmra.mxu0 %v307
      %v990 = vpop.f32.mrf.mxu0
      %v991 = vadd.f32 %v752, %v990
      %v992 = vpop.f32.mrf.mxu0
      %993 = vmatprep.mubr.f32.mxu0 %v312
      %994 = vmatmul.mubr.f32.gmra.mxu0 %v311
      %v995 = vpop.f32.mrf.mxu0
      %v996 = vadd.f32 %v752, %v995
      %v997 = vpop.f32.mrf.mxu0
      %998 = vmatprep.mubr.f32.mxu0 %v316
      %999 = vmatmul.mubr.f32.gmra.mxu0 %v315
      %v1000 = vpop.f32.mrf.mxu0
      %v1001 = vadd.f32 %v752, %v1000
      %v1002 = vpop.f32.mrf.mxu0
      %1003 = vmatprep.mubr.f32.mxu0 %v320
      %1004 = vmatmul.mubr.f32.gmra.mxu0 %v319
      %v1005 = vpop.f32.mrf.mxu0
      %v1006 = vadd.f32 %v752, %v1005
      %v1007 = vpop.f32.mrf.mxu0
      %1008 = vmatprep.mubr.f32.mxu0 %v324
      %1009 = vmatmul.mubr.f32.gmra.mxu0 %v323
      %v1010 = vpop.f32.mrf.mxu0
      %v1011 = vadd.f32 %v752, %v1010
      %v1012 = vpop.f32.mrf.mxu0
      %1013 = vmatprep.mubr.f32.mxu0 %v328
      %1014 = vmatmul.mubr.f32.gmra.mxu0 %v327
      %v1015 = vpop.f32.mrf.mxu0
      %v1016 = vadd.f32 %v752, %v1015
      %v1017 = vpop.f32.mrf.mxu0
      %1018 = vmatprep.mubr.f32.mxu0 %v332
      %1019 = vmatmul.mubr.f32.gmra.mxu0 %v331
      %v1020 = vpop.f32.mrf.mxu0
      %v1021 = vadd.f32 %v752, %v1020
      %v1022 = vpop.f32.mrf.mxu0
      %1023 = vmatprep.mubr.f32.mxu0 %v336
      %1024 = vmatmul.mubr.f32.gmra.mxu0 %v335
      %v1025 = vpop.f32.mrf.mxu0
      %v1026 = vadd.f32 %v752, %v1025
      %v1027 = vpop.f32.mrf.mxu0
      %1028 = vmatprep.mubr.f32.mxu0 %v340
      %1029 = vmatmul.mubr.f32.gmra.mxu0 %v339
      %v1030 = vpop.f32.mrf.mxu0
      %v1031 = vadd.f32 %v752, %v1030
      %v1032 = vpop.f32.mrf.mxu0
      %1033 = vmatprep.mubr.f32.mxu0 %v344
      %1034 = vmatmul.mubr.f32.gmra.mxu0 %v343
      %v1035 = vpop.f32.mrf.mxu0
      %v1036 = vadd.f32 %v752, %v1035
      %v1037 = vpop.f32.mrf.mxu0
      %1038 = vmatprep.mubr.f32.mxu0 %v348
      %1039 = vmatmul.mubr.f32.gmra.mxu0 %v347
      %v1040 = vpop.f32.mrf.mxu0
      %v1041 = vadd.f32 %v752, %v1040
      %v1042 = vpop.f32.mrf.mxu0
      %1043 = vmatprep.mubr.f32.mxu0 %v352
      %1044 = vmatmul.mubr.f32.gmra.mxu0 %v351
      %v1045 = vpop.f32.mrf.mxu0
      %v1046 = vadd.f32 %v752, %v1045
      %v1047 = vpop.f32.mrf.mxu0
      %1048 = vmatprep.mubr.f32.mxu0 %v356
      %1049 = vmatmul.mubr.f32.gmra.mxu0 %v355
      %v1050 = vpop.f32.mrf.mxu0
      %v1051 = vadd.f32 %v752, %v1050
      %v1052 = vpop.f32.mrf.mxu0
      %1053 = vmatprep.mubr.f32.mxu0 %v360
      %1054 = vmatmul.mubr.f32.gmra.mxu0 %v359
      %v1055 = vpop.f32.mrf.mxu0
      %v1056 = vadd.f32 %v752, %v1055
      %v1057 = vpop.f32.mrf.mxu0
      %1058 = vmatprep.mubr.f32.mxu0 %v364
      %1059 = vmatmul.mubr.f32.gmra.mxu0 %v363
      %v1060 = vpop.f32.mrf.mxu0
      %v1061 = vadd.f32 %v752, %v1060
      %v1062 = vpop.f32.mrf.mxu0
      %1063 = vmatprep.mubr.f32.mxu0 %v368
      %1064 = vmatmul.mubr.f32.gmra.mxu0 %v367
      %v1065 = vpop.f32.mrf.mxu0
      %v1066 = vadd.f32 %v752, %v1065
      %v1067 = vpop.f32.mrf.mxu0
      %1068 = vmatprep.mubr.f32.mxu0 %v372
      %1069 = vmatmul.mubr.f32.gmra.mxu0 %v371
      %v1070 = vpop.f32.mrf.mxu0
      %v1071 = vadd.f32 %v752, %v1070
      %v1072 = vpop.f32.mrf.mxu0
      %1073 = vmatprep.mubr.f32.mxu0 %v376
      %1074 = vmatmul.mubr.f32.gmra.mxu0 %v375
      %v1075 = vpop.f32.mrf.mxu0
      %v1076 = vadd.f32 %v752, %v1075
      %v1077 = vpop.f32.mrf.mxu0
      %1078 = vmatprep.mubr.f32.mxu0 %v380
      %1079 = vmatmul.mubr.f32.gmra.mxu0 %v379
      %v1080 = vpop.f32.mrf.mxu0
      %v1081 = vadd.f32 %v752, %v1080
      %v1082 = vpop.f32.mrf.mxu0
      %1083 = vmatprep.mubr.f32.mxu0 %v384
      %1084 = vmatmul.mubr.f32.gmra.mxu0 %v383
      %v1085 = vpop.f32.mrf.mxu0
      %v1086 = vadd.f32 %v752, %v1085
      %v1087 = vpop.f32.mrf.mxu0
      %1088 = vmatprep.mubr.f32.mxu0 %v388
      %1089 = vmatmul.mubr.f32.gmra.mxu0 %v387
      %v1090 = vpop.f32.mrf.mxu0
      %v1091 = vadd.f32 %v752, %v1090
      %v1092 = vpop.f32.mrf.mxu0
      %1093 = vmatprep.mubr.f32.mxu0 %v392
      %1094 = vmatmul.mubr.f32.gmra.mxu0 %v391
      %v1095 = vpop.f32.mrf.mxu0
      %v1096 = vadd.f32 %v752, %v1095
      %v1097 = vpop.f32.mrf.mxu0
      %1098 = vmatprep.mubr.f32.mxu0 %v396
      %1099 = vmatmul.mubr.f32.gmra.mxu0 %v395
      %v1100 = vpop.f32.mrf.mxu0
      %v1101 = vadd.f32 %v752, %v1100
      %v1102 = vpop.f32.mrf.mxu0
      %1103 = vmatprep.mubr.f32.mxu0 %v400
      %1104 = vmatmul.mubr.f32.gmra.mxu0 %v399
      %v1105 = vpop.f32.mrf.mxu0
      %v1106 = vadd.f32 %v752, %v1105
      %v1107 = vpop.f32.mrf.mxu0
      %1108 = vmatprep.mubr.f32.mxu0 %v404
      %1109 = vmatmul.mubr.f32.gmra.mxu0 %v403
      %v1110 = vpop.f32.mrf.mxu0
      %v1111 = vadd.f32 %v752, %v1110
      %v1112 = vpop.f32.mrf.mxu0
      %1113 = vmatprep.mubr.f32.mxu0 %v408
      %1114 = vmatmul.mubr.f32.gmra.mxu0 %v407
      %v1115 = vpop.f32.mrf.mxu0
      %v1116 = vadd.f32 %v752, %v1115
      %v1117 = vpop.f32.mrf.mxu0
      %1118 = vmatprep.mubr.f32.mxu0 %v412
      %1119 = vmatmul.mubr.f32.gmra.mxu0 %v411
      %v1120 = vpop.f32.mrf.mxu0
      %v1121 = vadd.f32 %v752, %v1120
      %v1122 = vpop.f32.mrf.mxu0
      %1123 = vmatprep.mubr.f32.mxu0 %v416
      %1124 = vmatmul.mubr.f32.gmra.mxu0 %v415
      %v1125 = vpop.f32.mrf.mxu0
      %v1126 = vadd.f32 %v752, %v1125
      %v1127 = vpop.f32.mrf.mxu0
      %1128 = vmatprep.mubr.f32.mxu0 %v420
      %1129 = vmatmul.mubr.f32.gmra.mxu0 %v419
      %v1130 = vpop.f32.mrf.mxu0
      %v1131 = vadd.f32 %v752, %v1130
      %v1132 = vpop.f32.mrf.mxu0
      %1133 = vmatprep.mubr.f32.mxu0 %v424
      %1134 = vmatmul.mubr.f32.gmra.mxu0 %v423
      %v1135 = vpop.f32.mrf.mxu0
      %v1136 = vadd.f32 %v752, %v1135
      %v1137 = vpop.f32.mrf.mxu0
      %1138 = vmatprep.mubr.f32.mxu0 %v428
      %1139 = vmatmul.mubr.f32.gmra.mxu0 %v427
      %v1140 = vpop.f32.mrf.mxu0
      %v1141 = vadd.f32 %v752, %v1140
      %v1142 = vpop.f32.mrf.mxu0
      %1143 = vmatprep.mubr.f32.mxu0 %v432
      %1144 = vmatmul.mubr.f32.gmra.mxu0 %v431
      %v1145 = vpop.f32.mrf.mxu0
      %v1146 = vadd.f32 %v752, %v1145
      %v1147 = vpop.f32.mrf.mxu0
      %1148 = vmatprep.mubr.f32.mxu0 %v436
      %1149 = vmatmul.mubr.f32.gmra.mxu0 %v435
      %v1150 = vpop.f32.mrf.mxu0
      %v1151 = vadd.f32 %v752, %v1150
      %v1152 = vpop.f32.mrf.mxu0
      %1153 = vmatprep.mubr.f32.mxu0 %v440
      %1154 = vmatmul.mubr.f32.gmra.mxu0 %v439
      %v1155 = vpop.f32.mrf.mxu0
      %v1156 = vadd.f32 %v752, %v1155
      %v1157 = vpop.f32.mrf.mxu0
      %1158 = vmatprep.mubr.f32.mxu0 %v444
      %1159 = vmatmul.mubr.f32.gmra.mxu0 %v443
      %v1160 = vpop.f32.mrf.mxu0
      %v1161 = vadd.f32 %v752, %v1160
      %v1162 = vpop.f32.mrf.mxu0
      %1163 = vmatprep.mubr.f32.mxu0 %v448
      %1164 = vmatmul.mubr.f32.gmra.mxu0 %v447
      %v1165 = vpop.f32.mrf.mxu0
      %v1166 = vadd.f32 %v752, %v1165
      %v1167 = vpop.f32.mrf.mxu0
      %1168 = vmatprep.mubr.f32.mxu0 %v452
      %1169 = vmatmul.mubr.f32.gmra.mxu0 %v451
      %v1170 = vpop.f32.mrf.mxu0
      %v1171 = vadd.f32 %v752, %v1170
      %v1172 = vpop.f32.mrf.mxu0
      %1173 = vmatprep.mubr.f32.mxu0 %v456
      %1174 = vmatmul.mubr.f32.gmra.mxu0 %v455
      %v1175 = vpop.f32.mrf.mxu0
      %v1176 = vadd.f32 %v752, %v1175
      %v1177 = vpop.f32.mrf.mxu0
      %1178 = vmatprep.mubr.f32.mxu0 %v460
      %1179 = vmatmul.mubr.f32.gmra.mxu0 %v459
      %v1180 = vpop.f32.mrf.mxu0
      %v1181 = vadd.f32 %v752, %v1180
      %v1182 = vpop.f32.mrf.mxu0
      %1183 = vmatprep.mubr.f32.mxu0 %v464
      %1184 = vmatmul.mubr.f32.gmra.mxu0 %v463
      %v1185 = vpop.f32.mrf.mxu0
      %v1186 = vadd.f32 %v752, %v1185
      %v1187 = vpop.f32.mrf.mxu0
      %1188 = vmatprep.mubr.f32.mxu0 %v468
      %1189 = vmatmul.mubr.f32.gmra.mxu0 %v467
      %v1190 = vpop.f32.mrf.mxu0
      %v1191 = vadd.f32 %v752, %v1190
      %v1192 = vpop.f32.mrf.mxu0
      %1193 = vmatprep.mubr.f32.mxu0 %v472
      %1194 = vmatmul.mubr.f32.gmra.mxu0 %v471
      %v1195 = vpop.f32.mrf.mxu0
      %v1196 = vadd.f32 %v752, %v1195
      %v1197 = vpop.f32.mrf.mxu0
      %1198 = vmatprep.mubr.f32.mxu0 %v476
      %1199 = vmatmul.mubr.f32.gmra.mxu0 %v475
      %v1200 = vpop.f32.mrf.mxu0
      %v1201 = vadd.f32 %v752, %v1200
      %v1202 = vpop.f32.mrf.mxu0
      %1203 = vmatprep.mubr.f32.mxu0 %v480
      %1204 = vmatmul.mubr.f32.gmra.mxu0 %v479
      %v1205 = vpop.f32.mrf.mxu0
      %v1206 = vadd.f32 %v752, %v1205
      %v1207 = vpop.f32.mrf.mxu0
      %1208 = vmatprep.mubr.f32.mxu0 %v484
      %1209 = vmatmul.mubr.f32.gmra.mxu0 %v483
      %v1210 = vpop.f32.mrf.mxu0
      %v1211 = vadd.f32 %v752, %v1210
      %v1212 = vpop.f32.mrf.mxu0
      %1213 = vmatprep.mubr.f32.mxu0 %v488
      %1214 = vmatmul.mubr.f32.gmra.mxu0 %v487
      %v1215 = vpop.f32.mrf.mxu0
      %v1216 = vadd.f32 %v752, %v1215
      %v1217 = vpop.f32.mrf.mxu0
      %1218 = vmatprep.mubr.f32.mxu0 %v492
      %1219 = vmatmul.mubr.f32.gmra.mxu0 %v491
      %v1220 = vpop.f32.mrf.mxu0
      %v1221 = vadd.f32 %v752, %v1220
      %v1222 = vpop.f32.mrf.mxu0
      %1223 = vmatprep.mubr.f32.mxu0 %v496
      %1224 = vmatmul.mubr.f32.gmra.mxu0 %v495
      %v1225 = vpop.f32.mrf.mxu0
      %v1226 = vadd.f32 %v752, %v1225
      %v1227 = vpop.f32.mrf.mxu0
      %1228 = vmatprep.mubr.f32.mxu0 %v500
      %1229 = vmatmul.mubr.f32.gmra.mxu0 %v499
      %v1230 = vpop.f32.mrf.mxu0
      %v1231 = vadd.f32 %v752, %v1230
      %v1232 = vpop.f32.mrf.mxu0
      %1233 = vmatprep.mubr.f32.mxu0 %v504
      %1234 = vmatmul.mubr.f32.gmra.mxu0 %v503
      %v1235 = vpop.f32.mrf.mxu0
      %v1236 = vadd.f32 %v752, %v1235
      %v1237 = vpop.f32.mrf.mxu0
      %1238 = vmatprep.mubr.f32.mxu0 %v508
      %1239 = vmatmul.mubr.f32.gmra.mxu0 %v507
      %v1240 = vpop.f32.mrf.mxu0
      %v1241 = vadd.f32 %v752, %v1240
      %v1242 = vpop.f32.mrf.mxu0
      %1243 = vmatprep.mubr.f32.mxu0 %v512
      %1244 = vmatmul.mubr.f32.gmra.mxu0 %v511
      %v1245 = vpop.f32.mrf.mxu0
      %v1246 = vadd.f32 %v752, %v1245
      %v1247 = vpop.f32.mrf.mxu0
      %1248 = vmatprep.mubr.f32.mxu0 %v516
      %1249 = vmatmul.mubr.f32.gmra.mxu0 %v515
      %v1250 = vpop.f32.mrf.mxu0
      %v1251 = vadd.f32 %v752, %v1250
      %v1252 = vpop.f32.mrf.mxu0
      %1253 = vmatprep.mubr.f32.mxu0 %v520
      %1254 = vmatmul.mubr.f32.gmra.mxu0 %v519
      %v1255 = vpop.f32.mrf.mxu0
      %v1256 = vadd.f32 %v752, %v1255
      %v1257 = vpop.f32.mrf.mxu0
      %1258 = vmatprep.mubr.f32.mxu0 %v524
      %1259 = vmatmul.mubr.f32.gmra.mxu0 %v523
      %v1260 = vpop.f32.mrf.mxu0
      %v1261 = vadd.f32 %v752, %v1260
      %v1262 = vpop.f32.mrf.mxu0
      %1263 = vmatprep.mubr.f32.mxu0 %v528
      %1264 = vmatmul.mubr.f32.gmra.mxu0 %v527
      %v1265 = vpop.f32.mrf.mxu0
      %v1266 = vadd.f32 %v752, %v1265
      %v1267 = vpop.f32.mrf.mxu0
      %1268 = vmatprep.mubr.f32.mxu0 %v532
      %1269 = vmatmul.mubr.f32.gmra.mxu0 %v531
      %v1270 = vpop.f32.mrf.mxu0
      %v1271 = vadd.f32 %v752, %v1270
      %v1272 = vpop.f32.mrf.mxu0
      %1273 = vmatprep.mubr.f32.mxu0 %v536
      %1274 = vmatmul.mubr.f32.gmra.mxu0 %v535
      %v1275 = vpop.f32.mrf.mxu0
      %v1276 = vadd.f32 %v752, %v1275
      %v1277 = vpop.f32.mrf.mxu0
      %1278 = vmatprep.mubr.f32.mxu0 %v540
      %1279 = vmatmul.mubr.f32.gmra.mxu0 %v539
      %v1280 = vpop.f32.mrf.mxu0
      %v1281 = vadd.f32 %v752, %v1280
      %v1282 = vpop.f32.mrf.mxu0
      %1283 = vmatprep.mubr.f32.mxu0 %v544
      %1284 = vmatmul.mubr.f32.gmra.mxu0 %v543
      %v1285 = vpop.f32.mrf.mxu0
      %v1286 = vadd.f32 %v752, %v1285
      %v1287 = vpop.f32.mrf.mxu0
      %1288 = vmatprep.mubr.f32.mxu0 %v548
      %1289 = vmatmul.mubr.f32.gmra.mxu0 %v547
      %v1290 = vpop.f32.mrf.mxu0
      %v1291 = vadd.f32 %v752, %v1290
      %v1292 = vpop.f32.mrf.mxu0
      %1293 = vmatprep.mubr.f32.mxu0 %v552
      %1294 = vmatmul.mubr.f32.gmra.mxu0 %v551
      %v1295 = vpop.f32.mrf.mxu0
      %v1296 = vadd.f32 %v752, %v1295
      %v1297 = vpop.f32.mrf.mxu0
      %1298 = vmatprep.mubr.f32.mxu0 %v556
      %1299 = vmatmul.mubr.f32.gmra.mxu0 %v555
      %v1300 = vpop.f32.mrf.mxu0
      %v1301 = vadd.f32 %v752, %v1300
      %v1302 = vpop.f32.mrf.mxu0
      %1303 = vmatprep.mubr.f32.mxu0 %v560
      %1304 = vmatmul.mubr.f32.gmra.mxu0 %v559
      %v1305 = vpop.f32.mrf.mxu0
      %v1306 = vadd.f32 %v752, %v1305
      %v1307 = vpop.f32.mrf.mxu0
      %1308 = vmatprep.mubr.f32.mxu0 %v564
      %1309 = vmatmul.mubr.f32.gmra.mxu0 %v563
      %v1310 = vpop.f32.mrf.mxu0
      %v1311 = vadd.f32 %v752, %v1310
      %v1312 = vpop.f32.mrf.mxu0
      %1313 = vmatprep.mubr.f32.mxu0 %v568
      %1314 = vmatmul.mubr.f32.gmra.mxu0 %v567
      %v1315 = vpop.f32.mrf.mxu0
      %v1316 = vadd.f32 %v752, %v1315
      %v1317 = vpop.f32.mrf.mxu0
      %1318 = vmatprep.mubr.f32.mxu0 %v572
      %1319 = vmatmul.mubr.f32.gmra.mxu0 %v571
      %v1320 = vpop.f32.mrf.mxu0
      %v1321 = vadd.f32 %v752, %v1320
      %v1322 = vpop.f32.mrf.mxu0
      %1323 = vmatprep.mubr.f32.mxu0 %v576
      %1324 = vmatmul.mubr.f32.gmra.mxu0 %v575
      %v1325 = vpop.f32.mrf.mxu0
      %v1326 = vadd.f32 %v752, %v1325
      %v1327 = vpop.f32.mrf.mxu0
      %1328 = vmatprep.mubr.f32.mxu0 %v580
      %1329 = vmatmul.mubr.f32.gmra.mxu0 %v579
      %v1330 = vpop.f32.mrf.mxu0
      %v1331 = vadd.f32 %v752, %v1330
      %v1332 = vpop.f32.mrf.mxu0
      %1333 = vmatprep.mubr.f32.mxu0 %v584
      %1334 = vmatmul.mubr.f32.gmra.mxu0 %v583
      %v1335 = vpop.f32.mrf.mxu0
      %v1336 = vadd.f32 %v752, %v1335
      %v1337 = vpop.f32.mrf.mxu0
      %1338 = vmatprep.mubr.f32.mxu0 %v588
      %1339 = vmatmul.mubr.f32.gmra.mxu0 %v587
      %v1340 = vpop.f32.mrf.mxu0
      %v1341 = vadd.f32 %v752, %v1340
      %v1342 = vpop.f32.mrf.mxu0
      %1343 = vmatprep.mubr.f32.mxu0 %v592
      %1344 = vmatmul.mubr.f32.gmra.mxu0 %v591
      %v1345 = vpop.f32.mrf.mxu0
      %v1346 = vadd.f32 %v752, %v1345
      %v1347 = vpop.f32.mrf.mxu0
      %1348 = vmatprep.mubr.f32.mxu0 %v596
      %1349 = vmatmul.mubr.f32.gmra.mxu0 %v595
      %v1350 = vpop.f32.mrf.mxu0
      %v1351 = vadd.f32 %v752, %v1350
      %v1352 = vpop.f32.mrf.mxu0
      %1353 = vmatprep.mubr.f32.mxu0 %v600
      %1354 = vmatmul.mubr.f32.gmra.mxu0 %v599
      %v1355 = vpop.f32.mrf.mxu0
      %v1356 = vadd.f32 %v752, %v1355
      %v1357 = vpop.f32.mrf.mxu0
      %1358 = vmatprep.mubr.f32.mxu0 %v604
      %1359 = vmatmul.mubr.f32.gmra.mxu0 %v603
      %v1360 = vpop.f32.mrf.mxu0
      %v1361 = vadd.f32 %v752, %v1360
      %v1362 = vpop.f32.mrf.mxu0
      %1363 = vmatprep.mubr.f32.mxu0 %v608
      %1364 = vmatmul.mubr.f32.gmra.mxu0 %v607
      %v1365 = vpop.f32.mrf.mxu0
      %v1366 = vadd.f32 %v752, %v1365
      %v1367 = vpop.f32.mrf.mxu0
      %1368 = vmatprep.mubr.f32.mxu0 %v612
      %1369 = vmatmul.mubr.f32.gmra.mxu0 %v611
      %v1370 = vpop.f32.mrf.mxu0
      %v1371 = vadd.f32 %v752, %v1370
      %v1372 = vpop.f32.mrf.mxu0
      %1373 = vmatprep.mubr.f32.mxu0 %v616
      %1374 = vmatmul.mubr.f32.gmra.mxu0 %v615
      %v1375 = vpop.f32.mrf.mxu0
      %v1376 = vadd.f32 %v752, %v1375
      %v1377 = vpop.f32.mrf.mxu0
      %1378 = vmatprep.mubr.f32.mxu0 %v620
      %1379 = vmatmul.mubr.f32.gmra.mxu0 %v619
      %v1380 = vpop.f32.mrf.mxu0
      %v1381 = vadd.f32 %v752, %v1380
      %v1382 = vpop.f32.mrf.mxu0
      %1383 = vmatprep.mubr.f32.mxu0 %v624
      %1384 = vmatmul.mubr.f32.gmra.mxu0 %v623
      %v1385 = vpop.f32.mrf.mxu0
      %v1386 = vadd.f32 %v752, %v1385
      %v1387 = vpop.f32.mrf.mxu0
      %1388 = vmatprep.mubr.f32.mxu0 %v628
      %1389 = vmatmul.mubr.f32.gmra.mxu0 %v627
      %v1390 = vpop.f32.mrf.mxu0
      %v1391 = vadd.f32 %v752, %v1390
      %v1392 = vpop.f32.mrf.mxu0
      %1393 = vmatprep.mubr.f32.mxu0 %v632
      %1394 = vmatmul.mubr.f32.gmra.mxu0 %v631
      %v1395 = vpop.f32.mrf.mxu0
      %v1396 = vadd.f32 %v752, %v1395
      %v1397 = vpop.f32.mrf.mxu0
      %1398 = vmatprep.mubr.f32.mxu0 %v636
      %1399 = vmatmul.mubr.f32.gmra.mxu0 %v635
      %v1400 = vpop.f32.mrf.mxu0
      %v1401 = vadd.f32 %v752, %v1400
      %v1402 = vpop.f32.mrf.mxu0
      %1403 = vmatprep.mubr.f32.mxu0 %v640
      %1404 = vmatmul.mubr.f32.gmra.mxu0 %v639
      %v1405 = vpop.f32.mrf.mxu0
      %v1406 = vadd.f32 %v752, %v1405
      %v1407 = vpop.f32.mrf.mxu0
      %1408 = vmatprep.mubr.f32.mxu0 %v644
      %1409 = vmatmul.mubr.f32.gmra.mxu0 %v643
      %v1410 = vpop.f32.mrf.mxu0
      %v1411 = vadd.f32 %v752, %v1410
      %v1412 = vpop.f32.mrf.mxu0
      %1413 = vmatprep.mubr.f32.mxu0 %v648
      %1414 = vmatmul.mubr.f32.gmra.mxu0 %v647
      %v1415 = vpop.f32.mrf.mxu0
      %v1416 = vadd.f32 %v752, %v1415
      %v1417 = vpop.f32.mrf.mxu0
      %1418 = vmatprep.mubr.f32.mxu0 %v652
      %1419 = vmatmul.mubr.f32.gmra.mxu0 %v651
      %v1420 = vpop.f32.mrf.mxu0
      %v1421 = vadd.f32 %v752, %v1420
      %v1422 = vpop.f32.mrf.mxu0
      %1423 = vmatprep.mubr.f32.mxu0 %v656
      %1424 = vmatmul.mubr.f32.gmra.mxu0 %v655
      %v1425 = vpop.f32.mrf.mxu0
      %v1426 = vadd.f32 %v752, %v1425
      %v1427 = vpop.f32.mrf.mxu0
      %1428 = vmatprep.mubr.f32.mxu0 %v660
      %1429 = vmatmul.mubr.f32.gmra.mxu0 %v659
      %v1430 = vpop.f32.mrf.mxu0
      %v1431 = vadd.f32 %v752, %v1430
      %v1432 = vpop.f32.mrf.mxu0
      %1433 = vmatprep.mubr.f32.mxu0 %v664
      %1434 = vmatmul.mubr.f32.gmra.mxu0 %v663
      %v1435 = vpop.f32.mrf.mxu0
      %v1436 = vadd.f32 %v752, %v1435
      %v1437 = vpop.f32.mrf.mxu0
      %1438 = vmatprep.mubr.f32.mxu0 %v668
      %1439 = vmatmul.mubr.f32.gmra.mxu0 %v667
      %v1440 = vpop.f32.mrf.mxu0
      %v1441 = vadd.f32 %v752, %v1440
      %v1442 = vpop.f32.mrf.mxu0
      %1443 = vmatprep.mubr.f32.mxu0 %v672
      %1444 = vmatmul.mubr.f32.gmra.mxu0 %v671
      %v1445 = vpop.f32.mrf.mxu0
      %v1446 = vadd.f32 %v752, %v1445
      %v1447 = vpop.f32.mrf.mxu0
      %1448 = vmatprep.mubr.f32.mxu0 %v676
      %1449 = vmatmul.mubr.f32.gmra.mxu0 %v675
      %v1450 = vpop.f32.mrf.mxu0
      %v1451 = vadd.f32 %v752, %v1450
      %v1452 = vpop.f32.mrf.mxu0
      %1453 = vmatprep.mubr.f32.mxu0 %v680
      %1454 = vmatmul.mubr.f32.gmra.mxu0 %v679
      %v1455 = vpop.f32.mrf.mxu0
      %v1456 = vadd.f32 %v752, %v1455
      %v1457 = vpop.f32.mrf.mxu0
      %1458 = vdwg.mxu0
      %1459 = vmatprep.subr.mxu0 0.0
      %1460 = vmatpush1.msra.mxu0 %v730
      %1461 = vmatprep.subr.mxu0 0.0
      %1462 = vmatpush1.msra.mxu0 %v729
      %1463 = vmatprep.subr.mxu0 0.0
      %1464 = vmatpush1.msra.mxu0 %v728
      %1465 = vmatprep.subr.mxu0 0.0
      %1466 = vmatpush1.msra.mxu0 %v727
      %1467 = vmatprep.subr.mxu0 0.0
      %1468 = vmatpush1.msra.mxu0 %v726
      %1469 = vmatprep.subr.mxu0 0.0
      %1470 = vmatpush1.msra.mxu0 %v725
      %1471 = vmatprep.subr.mxu0 0.0
      %1472 = vmatpush1.msra.mxu0 %v724
      %1473 = vmatprep.subr.mxu0 0.0
      %1474 = vmatpush1.msra.mxu0 %v723
      %1475 = vmatprep.subr.mxu0 0.0
      %1476 = vmatpush1.msra.mxu0 %v722
      %1477 = vmatprep.subr.mxu0 0.0
      %1478 = vmatpush1.msra.mxu0 %v721
      %1479 = vmatprep.subr.mxu0 0.0
      %1480 = vmatpush1.msra.mxu0 %v720
      %1481 = vmatprep.subr.mxu0 0.0
      %1482 = vmatpush1.msra.mxu0 %v719
      %1483 = vmatprep.subr.mxu0 0.0
      %1484 = vmatpush1.msra.mxu0 %v718
      %1485 = vmatprep.subr.mxu0 0.0
      %1486 = vmatpush1.msra.mxu0 %v717
      %1487 = vmatprep.subr.mxu0 0.0
      %1488 = vmatpush1.msra.mxu0 %v716
      %1489 = vmatprep.subr.mxu0 0.0
      %1490 = vmatpush1.msra.mxu0 %v715
      %1491 = vmatprep.subr.mxu0 0.0
      %1492 = vmatpush2.msra.mxu0 %v746
      %1493 = vmatprep.subr.mxu0 0.0
      %1494 = vmatpush2.msra.mxu0 %v745
      %1495 = vmatprep.subr.mxu0 0.0
      %1496 = vmatpush2.msra.mxu0 %v744
      %1497 = vmatprep.subr.mxu0 0.0
      %1498 = vmatpush2.msra.mxu0 %v743
      %1499 = vmatprep.subr.mxu0 0.0
      %1500 = vmatpush2.msra.mxu0 %v742
      %1501 = vmatprep.subr.mxu0 0.0
      %1502 = vmatpush2.msra.mxu0 %v741
      %1503 = vmatprep.subr.mxu0 0.0
      %1504 = vmatpush2.msra.mxu0 %v740
      %1505 = vmatprep.subr.mxu0 0.0
      %1506 = vmatpush2.msra.mxu0 %v739
      %1507 = vmatprep.subr.mxu0 0.0
      %1508 = vmatpush2.msra.mxu0 %v738
      %1509 = vmatprep.subr.mxu0 0.0
      %1510 = vmatpush2.msra.mxu0 %v737
      %1511 = vmatprep.subr.mxu0 0.0
      %1512 = vmatpush2.msra.mxu0 %v736
      %1513 = vmatprep.subr.mxu0 0.0
      %1514 = vmatpush2.msra.mxu0 %v735
      %1515 = vmatprep.subr.mxu0 0.0
      %1516 = vmatpush2.msra.mxu0 %v734
      %1517 = vmatprep.subr.mxu0 0.0
      %1518 = vmatpush2.msra.mxu0 %v733
      %1519 = vmatprep.subr.mxu0 0.0
      %1520 = vmatpush2.msra.mxu0 %v732
      %1521 = vmatprep.subr.mxu0 0.0
      %1522 = vmatpush2.msra.mxu0 %v731
      %1523 = vmatprep.mubr.f32.mxu0 %v174
      %1524 = vmatmul.mubr.f32.gmra.mxu0 %v173
      %v1525 = vpop.f32.mrf.mxu0
      %v1526 = vadd.f32 %v821, %v1525
      %v1527 = vpop.f32.mrf.mxu0
      %1528 = vmatprep.mubr.f32.mxu0 %v178
      %1529 = vmatmul.mubr.f32.gmra.mxu0 %v177
      %v1530 = vpop.f32.mrf.mxu0
      %v1531 = vadd.f32 %v826, %v1530
      %v1532 = vpop.f32.mrf.mxu0
      %1533 = vmatprep.mubr.f32.mxu0 %v182
      %1534 = vmatmul.mubr.f32.gmra.mxu0 %v181
      %v1535 = vpop.f32.mrf.mxu0
      %v1536 = vadd.f32 %v831, %v1535
      %v1537 = vpop.f32.mrf.mxu0
      %1538 = vmatprep.mubr.f32.mxu0 %v186
      %1539 = vmatmul.mubr.f32.gmra.mxu0 %v185
      %v1540 = vpop.f32.mrf.mxu0
      %v1541 = vadd.f32 %v836, %v1540
      %v1542 = vpop.f32.mrf.mxu0
      %1543 = vmatprep.mubr.f32.mxu0 %v190
      %1544 = vmatmul.mubr.f32.gmra.mxu0 %v189
      %v1545 = vpop.f32.mrf.mxu0
      %v1546 = vadd.f32 %v841, %v1545
      %v1547 = vpop.f32.mrf.mxu0
      %1548 = vmatprep.mubr.f32.mxu0 %v194
      %1549 = vmatmul.mubr.f32.gmra.mxu0 %v193
      %v1550 = vpop.f32.mrf.mxu0
      %v1551 = vadd.f32 %v846, %v1550
      %v1552 = vpop.f32.mrf.mxu0
      %1553 = vmatprep.mubr.f32.mxu0 %v198
      %1554 = vmatmul.mubr.f32.gmra.mxu0 %v197
      %v1555 = vpop.f32.mrf.mxu0
      %v1556 = vadd.f32 %v851, %v1555
      %v1557 = vpop.f32.mrf.mxu0
      %1558 = vmatprep.mubr.f32.mxu0 %v202
      %1559 = vmatmul.mubr.f32.gmra.mxu0 %v201
      %v1560 = vpop.f32.mrf.mxu0
      %v1561 = vadd.f32 %v856, %v1560
      %v1562 = vpop.f32.mrf.mxu0
      %1563 = vmatprep.mubr.f32.mxu0 %v206
      %1564 = vmatmul.mubr.f32.gmra.mxu0 %v205
      %v1565 = vpop.f32.mrf.mxu0
      %v1566 = vadd.f32 %v861, %v1565
      %v1567 = vpop.f32.mrf.mxu0
      %1568 = vmatprep.mubr.f32.mxu0 %v210
      %1569 = vmatmul.mubr.f32.gmra.mxu0 %v209
      %v1570 = vpop.f32.mrf.mxu0
      %v1571 = vadd.f32 %v866, %v1570
      %v1572 = vpop.f32.mrf.mxu0
      %1573 = vmatprep.mubr.f32.mxu0 %v214
      %1574 = vmatmul.mubr.f32.gmra.mxu0 %v213
      %v1575 = vpop.f32.mrf.mxu0
      %v1576 = vadd.f32 %v871, %v1575
      %v1577 = vpop.f32.mrf.mxu0
      %1578 = vmatprep.mubr.f32.mxu0 %v218
      %1579 = vmatmul.mubr.f32.gmra.mxu0 %v217
      %v1580 = vpop.f32.mrf.mxu0
      %v1581 = vadd.f32 %v876, %v1580
      %v1582 = vpop.f32.mrf.mxu0
      %1583 = vmatprep.mubr.f32.mxu0 %v222
      %1584 = vmatmul.mubr.f32.gmra.mxu0 %v221
      %v1585 = vpop.f32.mrf.mxu0
      %v1586 = vadd.f32 %v881, %v1585
      %v1587 = vpop.f32.mrf.mxu0
      %1588 = vmatprep.mubr.f32.mxu0 %v226
      %1589 = vmatmul.mubr.f32.gmra.mxu0 %v225
      %v1590 = vpop.f32.mrf.mxu0
      %v1591 = vadd.f32 %v886, %v1590
      %v1592 = vpop.f32.mrf.mxu0
      %1593 = vmatprep.mubr.f32.mxu0 %v230
      %1594 = vmatmul.mubr.f32.gmra.mxu0 %v229
      %v1595 = vpop.f32.mrf.mxu0
      %v1596 = vadd.f32 %v891, %v1595
      %v1597 = vpop.f32.mrf.mxu0
      %1598 = vmatprep.mubr.f32.mxu0 %v234
      %1599 = vmatmul.mubr.f32.gmra.mxu0 %v233
      %v1600 = vpop.f32.mrf.mxu0
      %v1601 = vadd.f32 %v896, %v1600
      %v1602 = vpop.f32.mrf.mxu0
      %1603 = vmatprep.mubr.f32.mxu0 %v238
      %1604 = vmatmul.mubr.f32.gmra.mxu0 %v237
      %v1605 = vpop.f32.mrf.mxu0
      %v1606 = vadd.f32 %v901, %v1605
      %v1607 = vpop.f32.mrf.mxu0
      %1608 = vmatprep.mubr.f32.mxu0 %v242
      %1609 = vmatmul.mubr.f32.gmra.mxu0 %v241
      %v1610 = vpop.f32.mrf.mxu0
      %v1611 = vadd.f32 %v906, %v1610
      %v1612 = vpop.f32.mrf.mxu0
      %1613 = vmatprep.mubr.f32.mxu0 %v246
      %1614 = vmatmul.mubr.f32.gmra.mxu0 %v245
      %v1615 = vpop.f32.mrf.mxu0
      %v1616 = vadd.f32 %v911, %v1615
      %v1617 = vpop.f32.mrf.mxu0
      %1618 = vmatprep.mubr.f32.mxu0 %v250
      %1619 = vmatmul.mubr.f32.gmra.mxu0 %v249
      %v1620 = vpop.f32.mrf.mxu0
      %v1621 = vadd.f32 %v916, %v1620
      %v1622 = vpop.f32.mrf.mxu0
      %1623 = vmatprep.mubr.f32.mxu0 %v254
      %1624 = vmatmul.mubr.f32.gmra.mxu0 %v253
      %v1625 = vpop.f32.mrf.mxu0
      %v1626 = vadd.f32 %v921, %v1625
      %v1627 = vpop.f32.mrf.mxu0
      %1628 = vmatprep.mubr.f32.mxu0 %v258
      %1629 = vmatmul.mubr.f32.gmra.mxu0 %v257
      %v1630 = vpop.f32.mrf.mxu0
      %v1631 = vadd.f32 %v926, %v1630
      %v1632 = vpop.f32.mrf.mxu0
      %1633 = vmatprep.mubr.f32.mxu0 %v262
      %1634 = vmatmul.mubr.f32.gmra.mxu0 %v261
      %v1635 = vpop.f32.mrf.mxu0
      %v1636 = vadd.f32 %v931, %v1635
      %v1637 = vpop.f32.mrf.mxu0
      %1638 = vmatprep.mubr.f32.mxu0 %v266
      %1639 = vmatmul.mubr.f32.gmra.mxu0 %v265
      %v1640 = vpop.f32.mrf.mxu0
      %v1641 = vadd.f32 %v936, %v1640
      %v1642 = vpop.f32.mrf.mxu0
      %1643 = vmatprep.mubr.f32.mxu0 %v270
      %1644 = vmatmul.mubr.f32.gmra.mxu0 %v269
      %v1645 = vpop.f32.mrf.mxu0
      %v1646 = vadd.f32 %v941, %v1645
      %v1647 = vpop.f32.mrf.mxu0
      %1648 = vmatprep.mubr.f32.mxu0 %v274
      %1649 = vmatmul.mubr.f32.gmra.mxu0 %v273
      %v1650 = vpop.f32.mrf.mxu0
      %v1651 = vadd.f32 %v946, %v1650
      %v1652 = vpop.f32.mrf.mxu0
      %1653 = vmatprep.mubr.f32.mxu0 %v278
      %1654 = vmatmul.mubr.f32.gmra.mxu0 %v277
      %v1655 = vpop.f32.mrf.mxu0
      %v1656 = vadd.f32 %v951, %v1655
      %v1657 = vpop.f32.mrf.mxu0
      %1658 = vmatprep.mubr.f32.mxu0 %v282
      %1659 = vmatmul.mubr.f32.gmra.mxu0 %v281
      %v1660 = vpop.f32.mrf.mxu0
      %v1661 = vadd.f32 %v956, %v1660
      %v1662 = vpop.f32.mrf.mxu0
      %1663 = vmatprep.mubr.f32.mxu0 %v286
      %1664 = vmatmul.mubr.f32.gmra.mxu0 %v285
      %v1665 = vpop.f32.mrf.mxu0
      %v1666 = vadd.f32 %v961, %v1665
      %v1667 = vpop.f32.mrf.mxu0
      %1668 = vmatprep.mubr.f32.mxu0 %v290
      %1669 = vmatmul.mubr.f32.gmra.mxu0 %v289
      %v1670 = vpop.f32.mrf.mxu0
      %v1671 = vadd.f32 %v966, %v1670
      %v1672 = vpop.f32.mrf.mxu0
      %1673 = vmatprep.mubr.f32.mxu0 %v294
      %1674 = vmatmul.mubr.f32.gmra.mxu0 %v293
      %v1675 = vpop.f32.mrf.mxu0
      %v1676 = vadd.f32 %v971, %v1675
      %v1677 = vpop.f32.mrf.mxu0
      %1678 = vmatprep.mubr.f32.mxu0 %v298
      %1679 = vmatmul.mubr.f32.gmra.mxu0 %v297
      %v1680 = vpop.f32.mrf.mxu0
      %v1681 = vadd.f32 %v976, %v1680
      %v1682 = vpop.f32.mrf.mxu0
      %1683 = vmatprep.mubr.f32.mxu0 %v302
      %1684 = vmatmul.mubr.f32.gmra.mxu0 %v301
      %v1685 = vpop.f32.mrf.mxu0
      %v1686 = vadd.f32 %v981, %v1685
      %v1687 = vpop.f32.mrf.mxu0
      %1688 = vmatprep.mubr.f32.mxu0 %v306
      %1689 = vmatmul.mubr.f32.gmra.mxu0 %v305
      %v1690 = vpop.f32.mrf.mxu0
      %v1691 = vadd.f32 %v986, %v1690
      %v1692 = vpop.f32.mrf.mxu0
      %1693 = vmatprep.mubr.f32.mxu0 %v310
      %1694 = vmatmul.mubr.f32.gmra.mxu0 %v309
      %v1695 = vpop.f32.mrf.mxu0
      %v1696 = vadd.f32 %v991, %v1695
      %v1697 = vpop.f32.mrf.mxu0
      %1698 = vmatprep.mubr.f32.mxu0 %v314
      %1699 = vmatmul.mubr.f32.gmra.mxu0 %v313
      %v1700 = vpop.f32.mrf.mxu0
      %v1701 = vadd.f32 %v996, %v1700
      %v1702 = vpop.f32.mrf.mxu0
      %1703 = vmatprep.mubr.f32.mxu0 %v318
      %1704 = vmatmul.mubr.f32.gmra.mxu0 %v317
      %v1705 = vpop.f32.mrf.mxu0
      %v1706 = vadd.f32 %v1001, %v1705
      %v1707 = vpop.f32.mrf.mxu0
      %1708 = vmatprep.mubr.f32.mxu0 %v322
      %1709 = vmatmul.mubr.f32.gmra.mxu0 %v321
      %v1710 = vpop.f32.mrf.mxu0
      %v1711 = vadd.f32 %v1006, %v1710
      %v1712 = vpop.f32.mrf.mxu0
      %1713 = vmatprep.mubr.f32.mxu0 %v326
      %1714 = vmatmul.mubr.f32.gmra.mxu0 %v325
      %v1715 = vpop.f32.mrf.mxu0
      %v1716 = vadd.f32 %v1011, %v1715
      %v1717 = vpop.f32.mrf.mxu0
      %1718 = vmatprep.mubr.f32.mxu0 %v330
      %1719 = vmatmul.mubr.f32.gmra.mxu0 %v329
      %v1720 = vpop.f32.mrf.mxu0
      %v1721 = vadd.f32 %v1016, %v1720
      %v1722 = vpop.f32.mrf.mxu0
      %1723 = vmatprep.mubr.f32.mxu0 %v334
      %1724 = vmatmul.mubr.f32.gmra.mxu0 %v333
      %v1725 = vpop.f32.mrf.mxu0
      %v1726 = vadd.f32 %v1021, %v1725
      %v1727 = vpop.f32.mrf.mxu0
      %1728 = vmatprep.mubr.f32.mxu0 %v338
      %1729 = vmatmul.mubr.f32.gmra.mxu0 %v337
      %v1730 = vpop.f32.mrf.mxu0
      %v1731 = vadd.f32 %v1026, %v1730
      %v1732 = vpop.f32.mrf.mxu0
      %1733 = vmatprep.mubr.f32.mxu0 %v342
      %1734 = vmatmul.mubr.f32.gmra.mxu0 %v341
      %v1735 = vpop.f32.mrf.mxu0
      %v1736 = vadd.f32 %v1031, %v1735
      %v1737 = vpop.f32.mrf.mxu0
      %1738 = vmatprep.mubr.f32.mxu0 %v346
      %1739 = vmatmul.mubr.f32.gmra.mxu0 %v345
      %v1740 = vpop.f32.mrf.mxu0
      %v1741 = vadd.f32 %v1036, %v1740
      %v1742 = vpop.f32.mrf.mxu0
      %1743 = vmatprep.mubr.f32.mxu0 %v350
      %1744 = vmatmul.mubr.f32.gmra.mxu0 %v349
      %v1745 = vpop.f32.mrf.mxu0
      %v1746 = vadd.f32 %v1041, %v1745
      %v1747 = vpop.f32.mrf.mxu0
      %1748 = vmatprep.mubr.f32.mxu0 %v354
      %1749 = vmatmul.mubr.f32.gmra.mxu0 %v353
      %v1750 = vpop.f32.mrf.mxu0
      %v1751 = vadd.f32 %v1046, %v1750
      %v1752 = vpop.f32.mrf.mxu0
      %1753 = vmatprep.mubr.f32.mxu0 %v358
      %1754 = vmatmul.mubr.f32.gmra.mxu0 %v357
      %v1755 = vpop.f32.mrf.mxu0
      %v1756 = vadd.f32 %v1051, %v1755
      %v1757 = vpop.f32.mrf.mxu0
      %1758 = vmatprep.mubr.f32.mxu0 %v362
      %1759 = vmatmul.mubr.f32.gmra.mxu0 %v361
      %v1760 = vpop.f32.mrf.mxu0
      %v1761 = vadd.f32 %v1056, %v1760
      %v1762 = vpop.f32.mrf.mxu0
      %1763 = vmatprep.mubr.f32.mxu0 %v366
      %1764 = vmatmul.mubr.f32.gmra.mxu0 %v365
      %v1765 = vpop.f32.mrf.mxu0
      %v1766 = vadd.f32 %v1061, %v1765
      %v1767 = vpop.f32.mrf.mxu0
      %1768 = vmatprep.mubr.f32.mxu0 %v370
      %1769 = vmatmul.mubr.f32.gmra.mxu0 %v369
      %v1770 = vpop.f32.mrf.mxu0
      %v1771 = vadd.f32 %v1066, %v1770
      %v1772 = vpop.f32.mrf.mxu0
      %1773 = vmatprep.mubr.f32.mxu0 %v374
      %1774 = vmatmul.mubr.f32.gmra.mxu0 %v373
      %v1775 = vpop.f32.mrf.mxu0
      %v1776 = vadd.f32 %v1071, %v1775
      %v1777 = vpop.f32.mrf.mxu0
      %1778 = vmatprep.mubr.f32.mxu0 %v378
      %1779 = vmatmul.mubr.f32.gmra.mxu0 %v377
      %v1780 = vpop.f32.mrf.mxu0
      %v1781 = vadd.f32 %v1076, %v1780
      %v1782 = vpop.f32.mrf.mxu0
      %1783 = vmatprep.mubr.f32.mxu0 %v382
      %1784 = vmatmul.mubr.f32.gmra.mxu0 %v381
      %v1785 = vpop.f32.mrf.mxu0
      %v1786 = vadd.f32 %v1081, %v1785
      %v1787 = vpop.f32.mrf.mxu0
      %1788 = vmatprep.mubr.f32.mxu0 %v386
      %1789 = vmatmul.mubr.f32.gmra.mxu0 %v385
      %v1790 = vpop.f32.mrf.mxu0
      %v1791 = vadd.f32 %v1086, %v1790
      %v1792 = vpop.f32.mrf.mxu0
      %1793 = vmatprep.mubr.f32.mxu0 %v390
      %1794 = vmatmul.mubr.f32.gmra.mxu0 %v389
      %v1795 = vpop.f32.mrf.mxu0
      %v1796 = vadd.f32 %v1091, %v1795
      %v1797 = vpop.f32.mrf.mxu0
      %1798 = vmatprep.mubr.f32.mxu0 %v394
      %1799 = vmatmul.mubr.f32.gmra.mxu0 %v393
      %v1800 = vpop.f32.mrf.mxu0
      %v1801 = vadd.f32 %v1096, %v1800
      %v1802 = vpop.f32.mrf.mxu0
      %1803 = vmatprep.mubr.f32.mxu0 %v398
      %1804 = vmatmul.mubr.f32.gmra.mxu0 %v397
      %v1805 = vpop.f32.mrf.mxu0
      %v1806 = vadd.f32 %v1101, %v1805
      %v1807 = vpop.f32.mrf.mxu0
      %1808 = vmatprep.mubr.f32.mxu0 %v402
      %1809 = vmatmul.mubr.f32.gmra.mxu0 %v401
      %v1810 = vpop.f32.mrf.mxu0
      %v1811 = vadd.f32 %v1106, %v1810
      %v1812 = vpop.f32.mrf.mxu0
      %1813 = vmatprep.mubr.f32.mxu0 %v406
      %1814 = vmatmul.mubr.f32.gmra.mxu0 %v405
      %v1815 = vpop.f32.mrf.mxu0
      %v1816 = vadd.f32 %v1111, %v1815
      %v1817 = vpop.f32.mrf.mxu0
      %1818 = vmatprep.mubr.f32.mxu0 %v410
      %1819 = vmatmul.mubr.f32.gmra.mxu0 %v409
      %v1820 = vpop.f32.mrf.mxu0
      %v1821 = vadd.f32 %v1116, %v1820
      %v1822 = vpop.f32.mrf.mxu0
      %1823 = vmatprep.mubr.f32.mxu0 %v414
      %1824 = vmatmul.mubr.f32.gmra.mxu0 %v413
      %v1825 = vpop.f32.mrf.mxu0
      %v1826 = vadd.f32 %v1121, %v1825
      %v1827 = vpop.f32.mrf.mxu0
      %1828 = vmatprep.mubr.f32.mxu0 %v418
      %1829 = vmatmul.mubr.f32.gmra.mxu0 %v417
      %v1830 = vpop.f32.mrf.mxu0
      %v1831 = vadd.f32 %v1126, %v1830
      %v1832 = vpop.f32.mrf.mxu0
      %1833 = vmatprep.mubr.f32.mxu0 %v422
      %1834 = vmatmul.mubr.f32.gmra.mxu0 %v421
      %v1835 = vpop.f32.mrf.mxu0
      %v1836 = vadd.f32 %v1131, %v1835
      %v1837 = vpop.f32.mrf.mxu0
      %1838 = vmatprep.mubr.f32.mxu0 %v426
      %1839 = vmatmul.mubr.f32.gmra.mxu0 %v425
      %v1840 = vpop.f32.mrf.mxu0
      %v1841 = vadd.f32 %v1136, %v1840
      %v1842 = vpop.f32.mrf.mxu0
      %1843 = vmatprep.mubr.f32.mxu0 %v430
      %1844 = vmatmul.mubr.f32.gmra.mxu0 %v429
      %v1845 = vpop.f32.mrf.mxu0
      %v1846 = vadd.f32 %v1141, %v1845
      %v1847 = vpop.f32.mrf.mxu0
      %1848 = vmatprep.mubr.f32.mxu0 %v434
      %1849 = vmatmul.mubr.f32.gmra.mxu0 %v433
      %v1850 = vpop.f32.mrf.mxu0
      %v1851 = vadd.f32 %v1146, %v1850
      %v1852 = vpop.f32.mrf.mxu0
      %1853 = vmatprep.mubr.f32.mxu0 %v438
      %1854 = vmatmul.mubr.f32.gmra.mxu0 %v437
      %v1855 = vpop.f32.mrf.mxu0
      %v1856 = vadd.f32 %v1151, %v1855
      %v1857 = vpop.f32.mrf.mxu0
      %1858 = vmatprep.mubr.f32.mxu0 %v442
      %1859 = vmatmul.mubr.f32.gmra.mxu0 %v441
      %v1860 = vpop.f32.mrf.mxu0
      %v1861 = vadd.f32 %v1156, %v1860
      %v1862 = vpop.f32.mrf.mxu0
      %1863 = vmatprep.mubr.f32.mxu0 %v446
      %1864 = vmatmul.mubr.f32.gmra.mxu0 %v445
      %v1865 = vpop.f32.mrf.mxu0
      %v1866 = vadd.f32 %v1161, %v1865
      %v1867 = vpop.f32.mrf.mxu0
      %1868 = vmatprep.mubr.f32.mxu0 %v450
      %1869 = vmatmul.mubr.f32.gmra.mxu0 %v449
      %v1870 = vpop.f32.mrf.mxu0
      %v1871 = vadd.f32 %v1166, %v1870
      %v1872 = vpop.f32.mrf.mxu0
      %1873 = vmatprep.mubr.f32.mxu0 %v454
      %1874 = vmatmul.mubr.f32.gmra.mxu0 %v453
      %v1875 = vpop.f32.mrf.mxu0
      %v1876 = vadd.f32 %v1171, %v1875
      %v1877 = vpop.f32.mrf.mxu0
      %1878 = vmatprep.mubr.f32.mxu0 %v458
      %1879 = vmatmul.mubr.f32.gmra.mxu0 %v457
      %v1880 = vpop.f32.mrf.mxu0
      %v1881 = vadd.f32 %v1176, %v1880
      %v1882 = vpop.f32.mrf.mxu0
      %1883 = vmatprep.mubr.f32.mxu0 %v462
      %1884 = vmatmul.mubr.f32.gmra.mxu0 %v461
      %v1885 = vpop.f32.mrf.mxu0
      %v1886 = vadd.f32 %v1181, %v1885
      %v1887 = vpop.f32.mrf.mxu0
      %1888 = vmatprep.mubr.f32.mxu0 %v466
      %1889 = vmatmul.mubr.f32.gmra.mxu0 %v465
      %v1890 = vpop.f32.mrf.mxu0
      %v1891 = vadd.f32 %v1186, %v1890
      %v1892 = vpop.f32.mrf.mxu0
      %1893 = vmatprep.mubr.f32.mxu0 %v470
      %1894 = vmatmul.mubr.f32.gmra.mxu0 %v469
      %v1895 = vpop.f32.mrf.mxu0
      %v1896 = vadd.f32 %v1191, %v1895
      %v1897 = vpop.f32.mrf.mxu0
      %1898 = vmatprep.mubr.f32.mxu0 %v474
      %1899 = vmatmul.mubr.f32.gmra.mxu0 %v473
      %v1900 = vpop.f32.mrf.mxu0
      %v1901 = vadd.f32 %v1196, %v1900
      %v1902 = vpop.f32.mrf.mxu0
      %1903 = vmatprep.mubr.f32.mxu0 %v478
      %1904 = vmatmul.mubr.f32.gmra.mxu0 %v477
      %v1905 = vpop.f32.mrf.mxu0
      %v1906 = vadd.f32 %v1201, %v1905
      %v1907 = vpop.f32.mrf.mxu0
      %1908 = vmatprep.mubr.f32.mxu0 %v482
      %1909 = vmatmul.mubr.f32.gmra.mxu0 %v481
      %v1910 = vpop.f32.mrf.mxu0
      %v1911 = vadd.f32 %v1206, %v1910
      %v1912 = vpop.f32.mrf.mxu0
      %1913 = vmatprep.mubr.f32.mxu0 %v486
      %1914 = vmatmul.mubr.f32.gmra.mxu0 %v485
      %v1915 = vpop.f32.mrf.mxu0
      %v1916 = vadd.f32 %v1211, %v1915
      %v1917 = vpop.f32.mrf.mxu0
      %1918 = vmatprep.mubr.f32.mxu0 %v490
      %1919 = vmatmul.mubr.f32.gmra.mxu0 %v489
      %v1920 = vpop.f32.mrf.mxu0
      %v1921 = vadd.f32 %v1216, %v1920
      %v1922 = vpop.f32.mrf.mxu0
      %1923 = vmatprep.mubr.f32.mxu0 %v494
      %1924 = vmatmul.mubr.f32.gmra.mxu0 %v493
      %v1925 = vpop.f32.mrf.mxu0
      %v1926 = vadd.f32 %v1221, %v1925
      %v1927 = vpop.f32.mrf.mxu0
      %1928 = vmatprep.mubr.f32.mxu0 %v498
      %1929 = vmatmul.mubr.f32.gmra.mxu0 %v497
      %v1930 = vpop.f32.mrf.mxu0
      %v1931 = vadd.f32 %v1226, %v1930
      %v1932 = vpop.f32.mrf.mxu0
      %1933 = vmatprep.mubr.f32.mxu0 %v502
      %1934 = vmatmul.mubr.f32.gmra.mxu0 %v501
      %v1935 = vpop.f32.mrf.mxu0
      %v1936 = vadd.f32 %v1231, %v1935
      %v1937 = vpop.f32.mrf.mxu0
      %1938 = vmatprep.mubr.f32.mxu0 %v506
      %1939 = vmatmul.mubr.f32.gmra.mxu0 %v505
      %v1940 = vpop.f32.mrf.mxu0
      %v1941 = vadd.f32 %v1236, %v1940
      %v1942 = vpop.f32.mrf.mxu0
      %1943 = vmatprep.mubr.f32.mxu0 %v510
      %1944 = vmatmul.mubr.f32.gmra.mxu0 %v509
      %v1945 = vpop.f32.mrf.mxu0
      %v1946 = vadd.f32 %v1241, %v1945
      %v1947 = vpop.f32.mrf.mxu0
      %1948 = vmatprep.mubr.f32.mxu0 %v514
      %1949 = vmatmul.mubr.f32.gmra.mxu0 %v513
      %v1950 = vpop.f32.mrf.mxu0
      %v1951 = vadd.f32 %v1246, %v1950
      %v1952 = vpop.f32.mrf.mxu0
      %1953 = vmatprep.mubr.f32.mxu0 %v518
      %1954 = vmatmul.mubr.f32.gmra.mxu0 %v517
      %v1955 = vpop.f32.mrf.mxu0
      %v1956 = vadd.f32 %v1251, %v1955
      %v1957 = vpop.f32.mrf.mxu0
      %1958 = vmatprep.mubr.f32.mxu0 %v522
      %1959 = vmatmul.mubr.f32.gmra.mxu0 %v521
      %v1960 = vpop.f32.mrf.mxu0
      %v1961 = vadd.f32 %v1256, %v1960
      %v1962 = vpop.f32.mrf.mxu0
      %1963 = vmatprep.mubr.f32.mxu0 %v526
      %1964 = vmatmul.mubr.f32.gmra.mxu0 %v525
      %v1965 = vpop.f32.mrf.mxu0
      %v1966 = vadd.f32 %v1261, %v1965
      %v1967 = vpop.f32.mrf.mxu0
      %1968 = vmatprep.mubr.f32.mxu0 %v530
      %1969 = vmatmul.mubr.f32.gmra.mxu0 %v529
      %v1970 = vpop.f32.mrf.mxu0
      %v1971 = vadd.f32 %v1266, %v1970
      %v1972 = vpop.f32.mrf.mxu0
      %1973 = vmatprep.mubr.f32.mxu0 %v534
      %1974 = vmatmul.mubr.f32.gmra.mxu0 %v533
      %v1975 = vpop.f32.mrf.mxu0
      %v1976 = vadd.f32 %v1271, %v1975
      %v1977 = vpop.f32.mrf.mxu0
      %1978 = vmatprep.mubr.f32.mxu0 %v538
      %1979 = vmatmul.mubr.f32.gmra.mxu0 %v537
      %v1980 = vpop.f32.mrf.mxu0
      %v1981 = vadd.f32 %v1276, %v1980
      %v1982 = vpop.f32.mrf.mxu0
      %1983 = vmatprep.mubr.f32.mxu0 %v542
      %1984 = vmatmul.mubr.f32.gmra.mxu0 %v541
      %v1985 = vpop.f32.mrf.mxu0
      %v1986 = vadd.f32 %v1281, %v1985
      %v1987 = vpop.f32.mrf.mxu0
      %1988 = vmatprep.mubr.f32.mxu0 %v546
      %1989 = vmatmul.mubr.f32.gmra.mxu0 %v545
      %v1990 = vpop.f32.mrf.mxu0
      %v1991 = vadd.f32 %v1286, %v1990
      %v1992 = vpop.f32.mrf.mxu0
      %1993 = vmatprep.mubr.f32.mxu0 %v550
      %1994 = vmatmul.mubr.f32.gmra.mxu0 %v549
      %v1995 = vpop.f32.mrf.mxu0
      %v1996 = vadd.f32 %v1291, %v1995
      %v1997 = vpop.f32.mrf.mxu0
      %1998 = vmatprep.mubr.f32.mxu0 %v554
      %1999 = vmatmul.mubr.f32.gmra.mxu0 %v553
      %v2000 = vpop.f32.mrf.mxu0
      %v2001 = vadd.f32 %v1296, %v2000
      %v2002 = vpop.f32.mrf.mxu0
      %2003 = vmatprep.mubr.f32.mxu0 %v558
      %2004 = vmatmul.mubr.f32.gmra.mxu0 %v557
      %v2005 = vpop.f32.mrf.mxu0
      %v2006 = vadd.f32 %v1301, %v2005
      %v2007 = vpop.f32.mrf.mxu0
      %2008 = vmatprep.mubr.f32.mxu0 %v562
      %2009 = vmatmul.mubr.f32.gmra.mxu0 %v561
      %v2010 = vpop.f32.mrf.mxu0
      %v2011 = vadd.f32 %v1306, %v2010
      %v2012 = vpop.f32.mrf.mxu0
      %2013 = vmatprep.mubr.f32.mxu0 %v566
      %2014 = vmatmul.mubr.f32.gmra.mxu0 %v565
      %v2015 = vpop.f32.mrf.mxu0
      %v2016 = vadd.f32 %v1311, %v2015
      %v2017 = vpop.f32.mrf.mxu0
      %2018 = vmatprep.mubr.f32.mxu0 %v570
      %2019 = vmatmul.mubr.f32.gmra.mxu0 %v569
      %v2020 = vpop.f32.mrf.mxu0
      %v2021 = vadd.f32 %v1316, %v2020
      %v2022 = vpop.f32.mrf.mxu0
      %2023 = vmatprep.mubr.f32.mxu0 %v574
      %2024 = vmatmul.mubr.f32.gmra.mxu0 %v573
      %v2025 = vpop.f32.mrf.mxu0
      %v2026 = vadd.f32 %v1321, %v2025
      %v2027 = vpop.f32.mrf.mxu0
      %2028 = vmatprep.mubr.f32.mxu0 %v578
      %2029 = vmatmul.mubr.f32.gmra.mxu0 %v577
      %v2030 = vpop.f32.mrf.mxu0
      %v2031 = vadd.f32 %v1326, %v2030
      %v2032 = vpop.f32.mrf.mxu0
      %2033 = vmatprep.mubr.f32.mxu0 %v582
      %2034 = vmatmul.mubr.f32.gmra.mxu0 %v581
      %v2035 = vpop.f32.mrf.mxu0
      %v2036 = vadd.f32 %v1331, %v2035
      %v2037 = vpop.f32.mrf.mxu0
      %2038 = vmatprep.mubr.f32.mxu0 %v586
      %2039 = vmatmul.mubr.f32.gmra.mxu0 %v585
      %v2040 = vpop.f32.mrf.mxu0
      %v2041 = vadd.f32 %v1336, %v2040
      %v2042 = vpop.f32.mrf.mxu0
      %2043 = vmatprep.mubr.f32.mxu0 %v590
      %2044 = vmatmul.mubr.f32.gmra.mxu0 %v589
      %v2045 = vpop.f32.mrf.mxu0
      %v2046 = vadd.f32 %v1341, %v2045
      %v2047 = vpop.f32.mrf.mxu0
      %2048 = vmatprep.mubr.f32.mxu0 %v594
      %2049 = vmatmul.mubr.f32.gmra.mxu0 %v593
      %v2050 = vpop.f32.mrf.mxu0
      %v2051 = vadd.f32 %v1346, %v2050
      %v2052 = vpop.f32.mrf.mxu0
      %2053 = vmatprep.mubr.f32.mxu0 %v598
      %2054 = vmatmul.mubr.f32.gmra.mxu0 %v597
      %v2055 = vpop.f32.mrf.mxu0
      %v2056 = vadd.f32 %v1351, %v2055
      %v2057 = vpop.f32.mrf.mxu0
      %2058 = vmatprep.mubr.f32.mxu0 %v602
      %2059 = vmatmul.mubr.f32.gmra.mxu0 %v601
      %v2060 = vpop.f32.mrf.mxu0
      %v2061 = vadd.f32 %v1356, %v2060
      %v2062 = vpop.f32.mrf.mxu0
      %2063 = vmatprep.mubr.f32.mxu0 %v606
      %2064 = vmatmul.mubr.f32.gmra.mxu0 %v605
      %v2065 = vpop.f32.mrf.mxu0
      %v2066 = vadd.f32 %v1361, %v2065
      %v2067 = vpop.f32.mrf.mxu0
      %2068 = vmatprep.mubr.f32.mxu0 %v610
      %2069 = vmatmul.mubr.f32.gmra.mxu0 %v609
      %v2070 = vpop.f32.mrf.mxu0
      %v2071 = vadd.f32 %v1366, %v2070
      %v2072 = vpop.f32.mrf.mxu0
      %2073 = vmatprep.mubr.f32.mxu0 %v614
      %2074 = vmatmul.mubr.f32.gmra.mxu0 %v613
      %v2075 = vpop.f32.mrf.mxu0
      %v2076 = vadd.f32 %v1371, %v2075
      %v2077 = vpop.f32.mrf.mxu0
      %2078 = vmatprep.mubr.f32.mxu0 %v618
      %2079 = vmatmul.mubr.f32.gmra.mxu0 %v617
      %v2080 = vpop.f32.mrf.mxu0
      %v2081 = vadd.f32 %v1376, %v2080
      %v2082 = vpop.f32.mrf.mxu0
      %2083 = vmatprep.mubr.f32.mxu0 %v622
      %2084 = vmatmul.mubr.f32.gmra.mxu0 %v621
      %v2085 = vpop.f32.mrf.mxu0
      %v2086 = vadd.f32 %v1381, %v2085
      %v2087 = vpop.f32.mrf.mxu0
      %2088 = vmatprep.mubr.f32.mxu0 %v626
      %2089 = vmatmul.mubr.f32.gmra.mxu0 %v625
      %v2090 = vpop.f32.mrf.mxu0
      %v2091 = vadd.f32 %v1386, %v2090
      %v2092 = vpop.f32.mrf.mxu0
      %2093 = vmatprep.mubr.f32.mxu0 %v630
      %2094 = vmatmul.mubr.f32.gmra.mxu0 %v629
      %v2095 = vpop.f32.mrf.mxu0
      %v2096 = vadd.f32 %v1391, %v2095
      %v2097 = vpop.f32.mrf.mxu0
      %2098 = vmatprep.mubr.f32.mxu0 %v634
      %2099 = vmatmul.mubr.f32.gmra.mxu0 %v633
      %v2100 = vpop.f32.mrf.mxu0
      %v2101 = vadd.f32 %v1396, %v2100
      %v2102 = vpop.f32.mrf.mxu0
      %2103 = vmatprep.mubr.f32.mxu0 %v638
      %2104 = vmatmul.mubr.f32.gmra.mxu0 %v637
      %v2105 = vpop.f32.mrf.mxu0
      %v2106 = vadd.f32 %v1401, %v2105
      %v2107 = vpop.f32.mrf.mxu0
      %2108 = vmatprep.mubr.f32.mxu0 %v642
      %2109 = vmatmul.mubr.f32.gmra.mxu0 %v641
      %v2110 = vpop.f32.mrf.mxu0
      %v2111 = vadd.f32 %v1406, %v2110
      %v2112 = vpop.f32.mrf.mxu0
      %2113 = vmatprep.mubr.f32.mxu0 %v646
      %2114 = vmatmul.mubr.f32.gmra.mxu0 %v645
      %v2115 = vpop.f32.mrf.mxu0
      %v2116 = vadd.f32 %v1411, %v2115
      %v2117 = vpop.f32.mrf.mxu0
      %2118 = vmatprep.mubr.f32.mxu0 %v650
      %2119 = vmatmul.mubr.f32.gmra.mxu0 %v649
      %v2120 = vpop.f32.mrf.mxu0
      %v2121 = vadd.f32 %v1416, %v2120
      %v2122 = vpop.f32.mrf.mxu0
      %2123 = vmatprep.mubr.f32.mxu0 %v654
      %2124 = vmatmul.mubr.f32.gmra.mxu0 %v653
      %v2125 = vpop.f32.mrf.mxu0
      %v2126 = vadd.f32 %v1421, %v2125
      %v2127 = vpop.f32.mrf.mxu0
      %2128 = vmatprep.mubr.f32.mxu0 %v658
      %2129 = vmatmul.mubr.f32.gmra.mxu0 %v657
      %v2130 = vpop.f32.mrf.mxu0
      %v2131 = vadd.f32 %v1426, %v2130
      %v2132 = vpop.f32.mrf.mxu0
      %2133 = vmatprep.mubr.f32.mxu0 %v662
      %2134 = vmatmul.mubr.f32.gmra.mxu0 %v661
      %v2135 = vpop.f32.mrf.mxu0
      %v2136 = vadd.f32 %v1431, %v2135
      %v2137 = vpop.f32.mrf.mxu0
      %2138 = vmatprep.mubr.f32.mxu0 %v666
      %2139 = vmatmul.mubr.f32.gmra.mxu0 %v665
      %v2140 = vpop.f32.mrf.mxu0
      %v2141 = vadd.f32 %v1436, %v2140
      %v2142 = vpop.f32.mrf.mxu0
      %2143 = vmatprep.mubr.f32.mxu0 %v670
      %2144 = vmatmul.mubr.f32.gmra.mxu0 %v669
      %v2145 = vpop.f32.mrf.mxu0
      %v2146 = vadd.f32 %v1441, %v2145
      %v2147 = vpop.f32.mrf.mxu0
      %2148 = vmatprep.mubr.f32.mxu0 %v674
      %2149 = vmatmul.mubr.f32.gmra.mxu0 %v673
      %v2150 = vpop.f32.mrf.mxu0
      %v2151 = vadd.f32 %v1446, %v2150
      %v2152 = vpop.f32.mrf.mxu0
      %2153 = vmatprep.mubr.f32.mxu0 %v678
      %2154 = vmatmul.mubr.f32.gmra.mxu0 %v677
      %v2155 = vpop.f32.mrf.mxu0
      %v2156 = vadd.f32 %v1451, %v2155
      %v2157 = vpop.f32.mrf.mxu0
      %2158 = vmatprep.mubr.f32.mxu0 %v682
      %2159 = vmatmul.mubr.f32.gmra.mxu0 %v681
      %v2160 = vpop.f32.mrf.mxu0
      %v2161 = vadd.f32 %v1456, %v2160
      %v2162 = vpop.f32.mrf.mxu0
      %2163 = vdwg.mxu0
      %v2164 = vadd.f32 %v1526, %v1531
      %v2165 = vadd.f32 %v2164, %v1536
      %v2166 = vadd.f32 %v2165, %v1541
      %v2167 = vadd.f32 %v2166, %v1546
      %v2168 = vadd.f32 %v2167, %v1551
      %v2169 = vadd.f32 %v2168, %v1556
      %v2170 = vadd.f32 %v2169, %v1561
      %v2171 = vadd.f32 %v2170, %v1566
      %v2172 = vadd.f32 %v2171, %v1571
      %v2173 = vadd.f32 %v2172, %v1576
      %v2174 = vadd.f32 %v2173, %v1581
      %v2175 = vadd.f32 %v2174, %v1586
      %v2176 = vadd.f32 %v2175, %v1591
      %v2177 = vadd.f32 %v2176, %v1596
      %v2178 = vadd.f32 %v2177, %v1601
      %v2179 = vadd.f32 %v2178, %v1606
      %v2180 = vadd.f32 %v2179, %v1611
      %v2181 = vadd.f32 %v2180, %v1616
      %v2182 = vadd.f32 %v2181, %v1621
      %v2183 = vadd.f32 %v2182, %v1626
      %v2184 = vadd.f32 %v2183, %v1631
      %v2185 = vadd.f32 %v2184, %v1636
      %v2186 = vadd.f32 %v2185, %v1641
      %v2187 = vadd.f32 %v2186, %v1646
      %v2188 = vadd.f32 %v2187, %v1651
      %v2189 = vadd.f32 %v2188, %v1656
      %v2190 = vadd.f32 %v2189, %v1661
      %v2191 = vadd.f32 %v2190, %v1666
      %v2192 = vadd.f32 %v2191, %v1671
      %v2193 = vadd.f32 %v2192, %v1676
      %v2194 = vadd.f32 %v2193, %v1681
      %v2195 = vadd.f32 %v2194, %v1686
      %v2196 = vadd.f32 %v2195, %v1691
      %v2197 = vadd.f32 %v2196, %v1696
      %v2198 = vadd.f32 %v2197, %v1701
      %v2199 = vadd.f32 %v2198, %v1706
      %v2200 = vadd.f32 %v2199, %v1711
      %v2201 = vadd.f32 %v2200, %v1716
      %v2202 = vadd.f32 %v2201, %v1721
      %v2203 = vadd.f32 %v2202, %v1726
      %v2204 = vadd.f32 %v2203, %v1731
      %v2205 = vadd.f32 %v2204, %v1736
      %v2206 = vadd.f32 %v2205, %v1741
      %v2207 = vadd.f32 %v2206, %v1746
      %v2208 = vadd.f32 %v2207, %v1751
      %v2209 = vadd.f32 %v2208, %v1756
      %v2210 = vadd.f32 %v2209, %v1761
      %v2211 = vadd.f32 %v2210, %v1766
      %v2212 = vadd.f32 %v2211, %v1771
      %v2213 = vadd.f32 %v2212, %v1776
      %v2214 = vadd.f32 %v2213, %v1781
      %v2215 = vadd.f32 %v2214, %v1786
      %v2216 = vadd.f32 %v2215, %v1791
      %v2217 = vadd.f32 %v2216, %v1796
      %v2218 = vadd.f32 %v2217, %v1801
      %v2219 = vadd.f32 %v2218, %v1806
      %v2220 = vadd.f32 %v2219, %v1811
      %v2221 = vadd.f32 %v2220, %v1816
      %v2222 = vadd.f32 %v2221, %v1821
      %v2223 = vadd.f32 %v2222, %v1826
      %v2224 = vadd.f32 %v2223, %v1831
      %v2225 = vadd.f32 %v2224, %v1836
      %v2226 = vadd.f32 %v2225, %v1841
      %v2227 = vadd.f32 %v2226, %v1846
      %v2228 = vadd.f32 %v2227, %v1851
      %v2229 = vadd.f32 %v2228, %v1856
      %v2230 = vadd.f32 %v2229, %v1861
      %v2231 = vadd.f32 %v2230, %v1866
      %v2232 = vadd.f32 %v2231, %v1871
      %v2233 = vadd.f32 %v2232, %v1876
      %v2234 = vadd.f32 %v2233, %v1881
      %v2235 = vadd.f32 %v2234, %v1886
      %v2236 = vadd.f32 %v2235, %v1891
      %v2237 = vadd.f32 %v2236, %v1896
      %v2238 = vadd.f32 %v2237, %v1901
      %v2239 = vadd.f32 %v2238, %v1906
      %v2240 = vadd.f32 %v2239, %v1911
      %v2241 = vadd.f32 %v2240, %v1916
      %v2242 = vadd.f32 %v2241, %v1921
      %v2243 = vadd.f32 %v2242, %v1926
      %v2244 = vadd.f32 %v2243, %v1931
      %v2245 = vadd.f32 %v2244, %v1936
      %v2246 = vadd.f32 %v2245, %v1941
      %v2247 = vadd.f32 %v2246, %v1946
      %v2248 = vadd.f32 %v2247, %v1951
      %v2249 = vadd.f32 %v2248, %v1956
      %v2250 = vadd.f32 %v2249, %v1961
      %v2251 = vadd.f32 %v2250, %v1966
      %v2252 = vadd.f32 %v2251, %v1971
      %v2253 = vadd.f32 %v2252, %v1976
      %v2254 = vadd.f32 %v2253, %v1981
      %v2255 = vadd.f32 %v2254, %v1986
      %v2256 = vadd.f32 %v2255, %v1991
      %v2257 = vadd.f32 %v2256, %v1996
      %v2258 = vadd.f32 %v2257, %v2001
      %v2259 = vadd.f32 %v2258, %v2006
      %v2260 = vadd.f32 %v2259, %v2011
      %v2261 = vadd.f32 %v2260, %v2016
      %v2262 = vadd.f32 %v2261, %v2021
      %v2263 = vadd.f32 %v2262, %v2026
      %v2264 = vadd.f32 %v2263, %v2031
      %v2265 = vadd.f32 %v2264, %v2036
      %v2266 = vadd.f32 %v2265, %v2041
      %v2267 = vadd.f32 %v2266, %v2046
      %v2268 = vadd.f32 %v2267, %v2051
      %v2269 = vadd.f32 %v2268, %v2056
      %v2270 = vadd.f32 %v2269, %v2061
      %v2271 = vadd.f32 %v2270, %v2066
      %v2272 = vadd.f32 %v2271, %v2071
      %v2273 = vadd.f32 %v2272, %v2076
      %v2274 = vadd.f32 %v2273, %v2081
      %v2275 = vadd.f32 %v2274, %v2086
      %v2276 = vadd.f32 %v2275, %v2091
      %v2277 = vadd.f32 %v2276, %v2096
      %v2278 = vadd.f32 %v2277, %v2101
      %v2279 = vadd.f32 %v2278, %v2106
      %v2280 = vadd.f32 %v2279, %v2111
      %v2281 = vadd.f32 %v2280, %v2116
      %v2282 = vadd.f32 %v2281, %v2121
      %v2283 = vadd.f32 %v2282, %v2126
      %v2284 = vadd.f32 %v2283, %v2131
      %v2285 = vadd.f32 %v2284, %v2136
      %v2286 = vadd.f32 %v2285, %v2141
      %v2287 = vadd.f32 %v2286, %v2146
      %v2288 = vadd.f32 %v2287, %v2151
      %v2289 = vadd.f32 %v2288, %v2156
      %v2290 = vadd.f32 %v2289, %v2161
      %v2291 = vrot.slane %v2290, 4
      %v2292 = vadd.f32 %v2290, %v2291
      %v2293 = vrot.slane %v2292, 2
      %v2294 = vadd.f32 %v2292, %v2293
      %v2295 = vrot.slane %v2294, 1
      %v2296 = vadd.f32 %v2294, %v2295
      %v2297 = vrcp.pop 1024.0
      %v2298 = vmul.f32 %v2296, %v2297
      %v2299 = vsub.f32 %v1526, %v2298
      %v2300 = vsub.f32 %v1531, %v2298
      %v2301 = vsub.f32 %v1536, %v2298
      %v2302 = vsub.f32 %v1541, %v2298
      %v2303 = vsub.f32 %v1546, %v2298
      %v2304 = vsub.f32 %v1551, %v2298
      %v2305 = vsub.f32 %v1556, %v2298
      %v2306 = vsub.f32 %v1561, %v2298
      %v2307 = vsub.f32 %v1566, %v2298
      %v2308 = vsub.f32 %v1571, %v2298
      %v2309 = vsub.f32 %v1576, %v2298
      %v2310 = vsub.f32 %v1581, %v2298
      %v2311 = vsub.f32 %v1586, %v2298
      %v2312 = vsub.f32 %v1591, %v2298
      %v2313 = vsub.f32 %v1596, %v2298
      %v2314 = vsub.f32 %v1601, %v2298
      %v2315 = vsub.f32 %v1606, %v2298
      %v2316 = vsub.f32 %v1611, %v2298
      %v2317 = vsub.f32 %v1616, %v2298
      %v2318 = vsub.f32 %v1621, %v2298
      %v2319 = vsub.f32 %v1626, %v2298
      %v2320 = vsub.f32 %v1631, %v2298
      %v2321 = vsub.f32 %v1636, %v2298
      %v2322 = vsub.f32 %v1641, %v2298
      %v2323 = vsub.f32 %v1646, %v2298
      %v2324 = vsub.f32 %v1651, %v2298
      %v2325 = vsub.f32 %v1656, %v2298
      %v2326 = vsub.f32 %v1661, %v2298
      %v2327 = vsub.f32 %v1666, %v2298
      %v2328 = vsub.f32 %v1671, %v2298
      %v2329 = vsub.f32 %v1676, %v2298
      %v2330 = vsub.f32 %v1681, %v2298
      %v2331 = vsub.f32 %v1686, %v2298
      %v2332 = vsub.f32 %v1691, %v2298
      %v2333 = vsub.f32 %v1696, %v2298
      %v2334 = vsub.f32 %v1701, %v2298
      %v2335 = vsub.f32 %v1706, %v2298
      %v2336 = vsub.f32 %v1711, %v2298
      %v2337 = vsub.f32 %v1716, %v2298
      %v2338 = vsub.f32 %v1721, %v2298
      %v2339 = vsub.f32 %v1726, %v2298
      %v2340 = vsub.f32 %v1731, %v2298
      %v2341 = vsub.f32 %v1736, %v2298
      %v2342 = vsub.f32 %v1741, %v2298
      %v2343 = vsub.f32 %v1746, %v2298
      %v2344 = vsub.f32 %v1751, %v2298
      %v2345 = vsub.f32 %v1756, %v2298
      %v2346 = vsub.f32 %v1761, %v2298
      %v2347 = vsub.f32 %v1766, %v2298
      %v2348 = vsub.f32 %v1771, %v2298
      %v2349 = vsub.f32 %v1776, %v2298
      %v2350 = vsub.f32 %v1781, %v2298
      %v2351 = vsub.f32 %v1786, %v2298
      %v2352 = vsub.f32 %v1791, %v2298
      %v2353 = vsub.f32 %v1796, %v2298
      %v2354 = vsub.f32 %v1801, %v2298
      %v2355 = vsub.f32 %v1806, %v2298
      %v2356 = vsub.f32 %v1811, %v2298
      %v2357 = vsub.f32 %v1816, %v2298
      %v2358 = vsub.f32 %v1821, %v2298
      %v2359 = vsub.f32 %v1826, %v2298
      %v2360 = vsub.f32 %v1831, %v2298
      %v2361 = vsub.f32 %v1836, %v2298
      %v2362 = vsub.f32 %v1841, %v2298
      %v2363 = vsub.f32 %v1846, %v2298
      %v2364 = vsub.f32 %v1851, %v2298
      %v2365 = vsub.f32 %v1856, %v2298
      %v2366 = vsub.f32 %v1861, %v2298
      %v2367 = vsub.f32 %v1866, %v2298
      %v2368 = vsub.f32 %v1871, %v2298
      %v2369 = vsub.f32 %v1876, %v2298
      %v2370 = vsub.f32 %v1881, %v2298
      %v2371 = vsub.f32 %v1886, %v2298
      %v2372 = vsub.f32 %v1891, %v2298
      %v2373 = vsub.f32 %v1896, %v2298
      %v2374 = vsub.f32 %v1901, %v2298
      %v2375 = vsub.f32 %v1906, %v2298
      %v2376 = vsub.f32 %v1911, %v2298
      %v2377 = vsub.f32 %v1916, %v2298
      %v2378 = vsub.f32 %v1921, %v2298
      %v2379 = vsub.f32 %v1926, %v2298
      %v2380 = vsub.f32 %v1931, %v2298
      %v2381 = vsub.f32 %v1936, %v2298
      %v2382 = vsub.f32 %v1941, %v2298
      %v2383 = vsub.f32 %v1946, %v2298
      %v2384 = vsub.f32 %v1951, %v2298
      %v2385 = vsub.f32 %v1956, %v2298
      %v2386 = vsub.f32 %v1961, %v2298
      %v2387 = vsub.f32 %v1966, %v2298
      %v2388 = vsub.f32 %v1971, %v2298
      %v2389 = vsub.f32 %v1976, %v2298
      %v2390 = vsub.f32 %v1981, %v2298
      %v2391 = vsub.f32 %v1986, %v2298
      %v2392 = vsub.f32 %v1991, %v2298
      %v2393 = vsub.f32 %v1996, %v2298
      %v2394 = vsub.f32 %v2001, %v2298
      %v2395 = vsub.f32 %v2006, %v2298
      %v2396 = vsub.f32 %v2011, %v2298
      %v2397 = vsub.f32 %v2016, %v2298
      %v2398 = vsub.f32 %v2021, %v2298
      %v2399 = vsub.f32 %v2026, %v2298
      %v2400 = vsub.f32 %v2031, %v2298
      %v2401 = vsub.f32 %v2036, %v2298
      %v2402 = vsub.f32 %v2041, %v2298
      %v2403 = vsub.f32 %v2046, %v2298
      %v2404 = vsub.f32 %v2051, %v2298
      %v2405 = vsub.f32 %v2056, %v2298
      %v2406 = vsub.f32 %v2061, %v2298
      %v2407 = vsub.f32 %v2066, %v2298
      %v2408 = vsub.f32 %v2071, %v2298
      %v2409 = vsub.f32 %v2076, %v2298
      %v2410 = vsub.f32 %v2081, %v2298
      %v2411 = vsub.f32 %v2086, %v2298
      %v2412 = vsub.f32 %v2091, %v2298
      %v2413 = vsub.f32 %v2096, %v2298
      %v2414 = vsub.f32 %v2101, %v2298
      %v2415 = vsub.f32 %v2106, %v2298
      %v2416 = vsub.f32 %v2111, %v2298
      %v2417 = vsub.f32 %v2116, %v2298
      %v2418 = vsub.f32 %v2121, %v2298
      %v2419 = vsub.f32 %v2126, %v2298
      %v2420 = vsub.f32 %v2131, %v2298
      %v2421 = vsub.f32 %v2136, %v2298
      %v2422 = vsub.f32 %v2141, %v2298
      %v2423 = vsub.f32 %v2146, %v2298
      %v2424 = vsub.f32 %v2151, %v2298
      %v2425 = vsub.f32 %v2156, %v2298
      %v2426 = vsub.f32 %v2161, %v2298
      %v2427 = vmul.f32 %v2299, %v2299
      %v2428 = vmul.f32 %v2300, %v2300
      %v2429 = vmul.f32 %v2301, %v2301
      %v2430 = vmul.f32 %v2302, %v2302
      %v2431 = vmul.f32 %v2303, %v2303
      %v2432 = vmul.f32 %v2304, %v2304
      %v2433 = vmul.f32 %v2305, %v2305
      %v2434 = vmul.f32 %v2306, %v2306
      %v2435 = vmul.f32 %v2307, %v2307
      %v2436 = vmul.f32 %v2308, %v2308
      %v2437 = vmul.f32 %v2309, %v2309
      %v2438 = vmul.f32 %v2310, %v2310
      %v2439 = vmul.f32 %v2311, %v2311
      %v2440 = vmul.f32 %v2312, %v2312
      %v2441 = vmul.f32 %v2313, %v2313
      %v2442 = vmul.f32 %v2314, %v2314
      %v2443 = vmul.f32 %v2315, %v2315
      %v2444 = vmul.f32 %v2316, %v2316
      %v2445 = vmul.f32 %v2317, %v2317
      %v2446 = vmul.f32 %v2318, %v2318
      %v2447 = vmul.f32 %v2319, %v2319
      %v2448 = vmul.f32 %v2320, %v2320
      %v2449 = vmul.f32 %v2321, %v2321
      %v2450 = vmul.f32 %v2322, %v2322
      %v2451 = vmul.f32 %v2323, %v2323
      %v2452 = vmul.f32 %v2324, %v2324
      %v2453 = vmul.f32 %v2325, %v2325
      %v2454 = vmul.f32 %v2326, %v2326
      %v2455 = vmul.f32 %v2327, %v2327
      %v2456 = vmul.f32 %v2328, %v2328
      %v2457 = vmul.f32 %v2329, %v2329
      %v2458 = vmul.f32 %v2330, %v2330
      %v2459 = vmul.f32 %v2331, %v2331
      %v2460 = vmul.f32 %v2332, %v2332
      %v2461 = vmul.f32 %v2333, %v2333
      %v2462 = vmul.f32 %v2334, %v2334
      %v2463 = vmul.f32 %v2335, %v2335
      %v2464 = vmul.f32 %v2336, %v2336
      %v2465 = vmul.f32 %v2337, %v2337
      %v2466 = vmul.f32 %v2338, %v2338
      %v2467 = vmul.f32 %v2339, %v2339
      %v2468 = vmul.f32 %v2340, %v2340
      %v2469 = vmul.f32 %v2341, %v2341
      %v2470 = vmul.f32 %v2342, %v2342
      %v2471 = vmul.f32 %v2343, %v2343
      %v2472 = vmul.f32 %v2344, %v2344
      %v2473 = vmul.f32 %v2345, %v2345
      %v2474 = vmul.f32 %v2346, %v2346
      %v2475 = vmul.f32 %v2347, %v2347
      %v2476 = vmul.f32 %v2348, %v2348
      %v2477 = vmul.f32 %v2349, %v2349
      %v2478 = vmul.f32 %v2350, %v2350
      %v2479 = vmul.f32 %v2351, %v2351
      %v2480 = vmul.f32 %v2352, %v2352
      %v2481 = vmul.f32 %v2353, %v2353
      %v2482 = vmul.f32 %v2354, %v2354
      %v2483 = vmul.f32 %v2355, %v2355
      %v2484 = vmul.f32 %v2356, %v2356
      %v2485 = vmul.f32 %v2357, %v2357
      %v2486 = vmul.f32 %v2358, %v2358
      %v2487 = vmul.f32 %v2359, %v2359
      %v2488 = vmul.f32 %v2360, %v2360
      %v2489 = vmul.f32 %v2361, %v2361
      %v2490 = vmul.f32 %v2362, %v2362
      %v2491 = vmul.f32 %v2363, %v2363
      %v2492 = vmul.f32 %v2364, %v2364
      %v2493 = vmul.f32 %v2365, %v2365
      %v2494 = vmul.f32 %v2366, %v2366
      %v2495 = vmul.f32 %v2367, %v2367
      %v2496 = vmul.f32 %v2368, %v2368
      %v2497 = vmul.f32 %v2369, %v2369
      %v2498 = vmul.f32 %v2370, %v2370
      %v2499 = vmul.f32 %v2371, %v2371
      %v2500 = vmul.f32 %v2372, %v2372
      %v2501 = vmul.f32 %v2373, %v2373
      %v2502 = vmul.f32 %v2374, %v2374
      %v2503 = vmul.f32 %v2375, %v2375
      %v2504 = vmul.f32 %v2376, %v2376
      %v2505 = vmul.f32 %v2377, %v2377
      %v2506 = vmul.f32 %v2378, %v2378
      %v2507 = vmul.f32 %v2379, %v2379
      %v2508 = vmul.f32 %v2380, %v2380
      %v2509 = vmul.f32 %v2381, %v2381
      %v2510 = vmul.f32 %v2382, %v2382
      %v2511 = vmul.f32 %v2383, %v2383
      %v2512 = vmul.f32 %v2384, %v2384
      %v2513 = vmul.f32 %v2385, %v2385
      %v2514 = vmul.f32 %v2386, %v2386
      %v2515 = vmul.f32 %v2387, %v2387
      %v2516 = vmul.f32 %v2388, %v2388
      %v2517 = vmul.f32 %v2389, %v2389
      %v2518 = vmul.f32 %v2390, %v2390
      %v2519 = vmul.f32 %v2391, %v2391
      %v2520 = vmul.f32 %v2392, %v2392
      %v2521 = vmul.f32 %v2393, %v2393
      %v2522 = vmul.f32 %v2394, %v2394
      %v2523 = vmul.f32 %v2395, %v2395
      %v2524 = vmul.f32 %v2396, %v2396
      %v2525 = vmul.f32 %v2397, %v2397
      %v2526 = vmul.f32 %v2398, %v2398
      %v2527 = vmul.f32 %v2399, %v2399
      %v2528 = vmul.f32 %v2400, %v2400
      %v2529 = vmul.f32 %v2401, %v2401
      %v2530 = vmul.f32 %v2402, %v2402
      %v2531 = vmul.f32 %v2403, %v2403
      %v2532 = vmul.f32 %v2404, %v2404
      %v2533 = vmul.f32 %v2405, %v2405
      %v2534 = vmul.f32 %v2406, %v2406
      %v2535 = vmul.f32 %v2407, %v2407
      %v2536 = vmul.f32 %v2408, %v2408
      %v2537 = vmul.f32 %v2409, %v2409
      %v2538 = vmul.f32 %v2410, %v2410
      %v2539 = vmul.f32 %v2411, %v2411
      %v2540 = vmul.f32 %v2412, %v2412
      %v2541 = vmul.f32 %v2413, %v2413
      %v2542 = vmul.f32 %v2414, %v2414
      %v2543 = vmul.f32 %v2415, %v2415
      %v2544 = vmul.f32 %v2416, %v2416
      %v2545 = vmul.f32 %v2417, %v2417
      %v2546 = vmul.f32 %v2418, %v2418
      %v2547 = vmul.f32 %v2419, %v2419
      %v2548 = vmul.f32 %v2420, %v2420
      %v2549 = vmul.f32 %v2421, %v2421
      %v2550 = vmul.f32 %v2422, %v2422
      %v2551 = vmul.f32 %v2423, %v2423
      %v2552 = vmul.f32 %v2424, %v2424
      %v2553 = vmul.f32 %v2425, %v2425
      %v2554 = vmul.f32 %v2426, %v2426
      %v2555 = vadd.f32 %v2427, %v2428
      %v2556 = vadd.f32 %v2555, %v2429
      %v2557 = vadd.f32 %v2556, %v2430
      %v2558 = vadd.f32 %v2557, %v2431
      %v2559 = vadd.f32 %v2558, %v2432
      %v2560 = vadd.f32 %v2559, %v2433
      %v2561 = vadd.f32 %v2560, %v2434
      %v2562 = vadd.f32 %v2561, %v2435
      %v2563 = vadd.f32 %v2562, %v2436
      %v2564 = vadd.f32 %v2563, %v2437
      %v2565 = vadd.f32 %v2564, %v2438
      %v2566 = vadd.f32 %v2565, %v2439
      %v2567 = vadd.f32 %v2566, %v2440
      %v2568 = vadd.f32 %v2567, %v2441
      %v2569 = vadd.f32 %v2568, %v2442
      %v2570 = vadd.f32 %v2569, %v2443
      %v2571 = vadd.f32 %v2570, %v2444
      %v2572 = vadd.f32 %v2571, %v2445
      %v2573 = vadd.f32 %v2572, %v2446
      %v2574 = vadd.f32 %v2573, %v2447
      %v2575 = vadd.f32 %v2574, %v2448
      %v2576 = vadd.f32 %v2575, %v2449
      %v2577 = vadd.f32 %v2576, %v2450
      %v2578 = vadd.f32 %v2577, %v2451
      %v2579 = vadd.f32 %v2578, %v2452
      %v2580 = vadd.f32 %v2579, %v2453
      %v2581 = vadd.f32 %v2580, %v2454
      %v2582 = vadd.f32 %v2581, %v2455
      %v2583 = vadd.f32 %v2582, %v2456
      %v2584 = vadd.f32 %v2583, %v2457
      %v2585 = vadd.f32 %v2584, %v2458
      %v2586 = vadd.f32 %v2585, %v2459
      %v2587 = vadd.f32 %v2586, %v2460
      %v2588 = vadd.f32 %v2587, %v2461
      %v2589 = vadd.f32 %v2588, %v2462
      %v2590 = vadd.f32 %v2589, %v2463
      %v2591 = vadd.f32 %v2590, %v2464
      %v2592 = vadd.f32 %v2591, %v2465
      %v2593 = vadd.f32 %v2592, %v2466
      %v2594 = vadd.f32 %v2593, %v2467
      %v2595 = vadd.f32 %v2594, %v2468
      %v2596 = vadd.f32 %v2595, %v2469
      %v2597 = vadd.f32 %v2596, %v2470
      %v2598 = vadd.f32 %v2597, %v2471
      %v2599 = vadd.f32 %v2598, %v2472
      %v2600 = vadd.f32 %v2599, %v2473
      %v2601 = vadd.f32 %v2600, %v2474
      %v2602 = vadd.f32 %v2601, %v2475
      %v2603 = vadd.f32 %v2602, %v2476
      %v2604 = vadd.f32 %v2603, %v2477
      %v2605 = vadd.f32 %v2604, %v2478
      %v2606 = vadd.f32 %v2605, %v2479
      %v2607 = vadd.f32 %v2606, %v2480
      %v2608 = vadd.f32 %v2607, %v2481
      %v2609 = vadd.f32 %v2608, %v2482
      %v2610 = vadd.f32 %v2609, %v2483
      %v2611 = vadd.f32 %v2610, %v2484
      %v2612 = vadd.f32 %v2611, %v2485
      %v2613 = vadd.f32 %v2612, %v2486
      %v2614 = vadd.f32 %v2613, %v2487
      %v2615 = vadd.f32 %v2614, %v2488
      %v2616 = vadd.f32 %v2615, %v2489
      %v2617 = vadd.f32 %v2616, %v2490
      %v2618 = vadd.f32 %v2617, %v2491
      %v2619 = vadd.f32 %v2618, %v2492
      %v2620 = vadd.f32 %v2619, %v2493
      %v2621 = vadd.f32 %v2620, %v2494
      %v2622 = vadd.f32 %v2621, %v2495
      %v2623 = vadd.f32 %v2622, %v2496
      %v2624 = vadd.f32 %v2623, %v2497
      %v2625 = vadd.f32 %v2624, %v2498
      %v2626 = vadd.f32 %v2625, %v2499
      %v2627 = vadd.f32 %v2626, %v2500
      %v2628 = vadd.f32 %v2627, %v2501
      %v2629 = vadd.f32 %v2628, %v2502
      %v2630 = vadd.f32 %v2629, %v2503
      %v2631 = vadd.f32 %v2630, %v2504
      %v2632 = vadd.f32 %v2631, %v2505
      %v2633 = vadd.f32 %v2632, %v2506
      %v2634 = vadd.f32 %v2633, %v2507
      %v2635 = vadd.f32 %v2634, %v2508
      %v2636 = vadd.f32 %v2635, %v2509
      %v2637 = vadd.f32 %v2636, %v2510
      %v2638 = vadd.f32 %v2637, %v2511
      %v2639 = vadd.f32 %v2638, %v2512
      %v2640 = vadd.f32 %v2639, %v2513
      %v2641 = vadd.f32 %v2640, %v2514
      %v2642 = vadd.f32 %v2641, %v2515
      %v2643 = vadd.f32 %v2642, %v2516
      %v2644 = vadd.f32 %v2643, %v2517
      %v2645 = vadd.f32 %v2644, %v2518
      %v2646 = vadd.f32 %v2645, %v2519
      %v2647 = vadd.f32 %v2646, %v2520
      %v2648 = vadd.f32 %v2647, %v2521
      %v2649 = vadd.f32 %v2648, %v2522
      %v2650 = vadd.f32 %v2649, %v2523
      %v2651 = vadd.f32 %v2650, %v2524
      %v2652 = vadd.f32 %v2651, %v2525
      %v2653 = vadd.f32 %v2652, %v2526
      %v2654 = vadd.f32 %v2653, %v2527
      %v2655 = vadd.f32 %v2654, %v2528
      %v2656 = vadd.f32 %v2655, %v2529
      %v2657 = vadd.f32 %v2656, %v2530
      %v2658 = vadd.f32 %v2657, %v2531
      %v2659 = vadd.f32 %v2658, %v2532
      %v2660 = vadd.f32 %v2659, %v2533
      %v2661 = vadd.f32 %v2660, %v2534
      %v2662 = vadd.f32 %v2661, %v2535
      %v2663 = vadd.f32 %v2662, %v2536
      %v2664 = vadd.f32 %v2663, %v2537
      %v2665 = vadd.f32 %v2664, %v2538
      %v2666 = vadd.f32 %v2665, %v2539
      %v2667 = vadd.f32 %v2666, %v2540
      %v2668 = vadd.f32 %v2667, %v2541
      %v2669 = vadd.f32 %v2668, %v2542
      %v2670 = vadd.f32 %v2669, %v2543
      %v2671 = vadd.f32 %v2670, %v2544
      %v2672 = vadd.f32 %v2671, %v2545
      %v2673 = vadd.f32 %v2672, %v2546
      %v2674 = vadd.f32 %v2673, %v2547
      %v2675 = vadd.f32 %v2674, %v2548
      %v2676 = vadd.f32 %v2675, %v2549
      %v2677 = vadd.f32 %v2676, %v2550
      %v2678 = vadd.f32 %v2677, %v2551
      %v2679 = vadd.f32 %v2678, %v2552
      %v2680 = vadd.f32 %v2679, %v2553
      %v2681 = vadd.f32 %v2680, %v2554
      %v2682 = vrot.slane %v2681, 4
      %v2683 = vadd.f32 %v2681, %v2682
      %v2684 = vrot.slane %v2683, 2
      %v2685 = vadd.f32 %v2683, %v2684
      %v2686 = vrot.slane %v2685, 1
      %v2687 = vadd.f32 %v2685, %v2686
      %v2688 = vmul.f32 %v2687, %v2297
      %v2689 = vadd.f32 %v2688, 1e-05
      %v2690 = vrsqrt.pop %v2689
      %v2691 = vmul.f32 %v2299, %v2690
      %v2692 = vmul.f32 %v2300, %v2690
      %v2693 = vmul.f32 %v2301, %v2690
      %v2694 = vmul.f32 %v2302, %v2690
      %v2695 = vmul.f32 %v2303, %v2690
      %v2696 = vmul.f32 %v2304, %v2690
      %v2697 = vmul.f32 %v2305, %v2690
      %v2698 = vmul.f32 %v2306, %v2690
      %v2699 = vmul.f32 %v2307, %v2690
      %v2700 = vmul.f32 %v2308, %v2690
      %v2701 = vmul.f32 %v2309, %v2690
      %v2702 = vmul.f32 %v2310, %v2690
      %v2703 = vmul.f32 %v2311, %v2690
      %v2704 = vmul.f32 %v2312, %v2690
      %v2705 = vmul.f32 %v2313, %v2690
      %v2706 = vmul.f32 %v2314, %v2690
      %v2707 = vmul.f32 %v2315, %v2690
      %v2708 = vmul.f32 %v2316, %v2690
      %v2709 = vmul.f32 %v2317, %v2690
      %v2710 = vmul.f32 %v2318, %v2690
      %v2711 = vmul.f32 %v2319, %v2690
      %v2712 = vmul.f32 %v2320, %v2690
      %v2713 = vmul.f32 %v2321, %v2690
      %v2714 = vmul.f32 %v2322, %v2690
      %v2715 = vmul.f32 %v2323, %v2690
      %v2716 = vmul.f32 %v2324, %v2690
      %v2717 = vmul.f32 %v2325, %v2690
      %v2718 = vmul.f32 %v2326, %v2690
      %v2719 = vmul.f32 %v2327, %v2690
      %v2720 = vmul.f32 %v2328, %v2690
      %v2721 = vmul.f32 %v2329, %v2690
      %v2722 = vmul.f32 %v2330, %v2690
      %v2723 = vmul.f32 %v2331, %v2690
      %v2724 = vmul.f32 %v2332, %v2690
      %v2725 = vmul.f32 %v2333, %v2690
      %v2726 = vmul.f32 %v2334, %v2690
      %v2727 = vmul.f32 %v2335, %v2690
      %v2728 = vmul.f32 %v2336, %v2690
      %v2729 = vmul.f32 %v2337, %v2690
      %v2730 = vmul.f32 %v2338, %v2690
      %v2731 = vmul.f32 %v2339, %v2690
      %v2732 = vmul.f32 %v2340, %v2690
      %v2733 = vmul.f32 %v2341, %v2690
      %v2734 = vmul.f32 %v2342, %v2690
      %v2735 = vmul.f32 %v2343, %v2690
      %v2736 = vmul.f32 %v2344, %v2690
      %v2737 = vmul.f32 %v2345, %v2690
      %v2738 = vmul.f32 %v2346, %v2690
      %v2739 = vmul.f32 %v2347, %v2690
      %v2740 = vmul.f32 %v2348, %v2690
      %v2741 = vmul.f32 %v2349, %v2690
      %v2742 = vmul.f32 %v2350, %v2690
      %v2743 = vmul.f32 %v2351, %v2690
      %v2744 = vmul.f32 %v2352, %v2690
      %v2745 = vmul.f32 %v2353, %v2690
      %v2746 = vmul.f32 %v2354, %v2690
      %v2747 = vmul.f32 %v2355, %v2690
      %v2748 = vmul.f32 %v2356, %v2690
      %v2749 = vmul.f32 %v2357, %v2690
      %v2750 = vmul.f32 %v2358, %v2690
      %v2751 = vmul.f32 %v2359, %v2690
      %v2752 = vmul.f32 %v2360, %v2690
      %v2753 = vmul.f32 %v2361, %v2690
      %v2754 = vmul.f32 %v2362, %v2690
      %v2755 = vmul.f32 %v2363, %v2690
      %v2756 = vmul.f32 %v2364, %v2690
      %v2757 = vmul.f32 %v2365, %v2690
      %v2758 = vmul.f32 %v2366, %v2690
      %v2759 = vmul.f32 %v2367, %v2690
      %v2760 = vmul.f32 %v2368, %v2690
      %v2761 = vmul.f32 %v2369, %v2690
      %v2762 = vmul.f32 %v2370, %v2690
      %v2763 = vmul.f32 %v2371, %v2690
      %v2764 = vmul.f32 %v2372, %v2690
      %v2765 = vmul.f32 %v2373, %v2690
      %v2766 = vmul.f32 %v2374, %v2690
      %v2767 = vmul.f32 %v2375, %v2690
      %v2768 = vmul.f32 %v2376, %v2690
      %v2769 = vmul.f32 %v2377, %v2690
      %v2770 = vmul.f32 %v2378, %v2690
      %v2771 = vmul.f32 %v2379, %v2690
      %v2772 = vmul.f32 %v2380, %v2690
      %v2773 = vmul.f32 %v2381, %v2690
      %v2774 = vmul.f32 %v2382, %v2690
      %v2775 = vmul.f32 %v2383, %v2690
      %v2776 = vmul.f32 %v2384, %v2690
      %v2777 = vmul.f32 %v2385, %v2690
      %v2778 = vmul.f32 %v2386, %v2690
      %v2779 = vmul.f32 %v2387, %v2690
      %v2780 = vmul.f32 %v2388, %v2690
      %v2781 = vmul.f32 %v2389, %v2690
      %v2782 = vmul.f32 %v2390, %v2690
      %v2783 = vmul.f32 %v2391, %v2690
      %v2784 = vmul.f32 %v2392, %v2690
      %v2785 = vmul.f32 %v2393, %v2690
      %v2786 = vmul.f32 %v2394, %v2690
      %v2787 = vmul.f32 %v2395, %v2690
      %v2788 = vmul.f32 %v2396, %v2690
      %v2789 = vmul.f32 %v2397, %v2690
      %v2790 = vmul.f32 %v2398, %v2690
      %v2791 = vmul.f32 %v2399, %v2690
      %v2792 = vmul.f32 %v2400, %v2690
      %v2793 = vmul.f32 %v2401, %v2690
      %v2794 = vmul.f32 %v2402, %v2690
      %v2795 = vmul.f32 %v2403, %v2690
      %v2796 = vmul.f32 %v2404, %v2690
      %v2797 = vmul.f32 %v2405, %v2690
      %v2798 = vmul.f32 %v2406, %v2690
      %v2799 = vmul.f32 %v2407, %v2690
      %v2800 = vmul.f32 %v2408, %v2690
      %v2801 = vmul.f32 %v2409, %v2690
      %v2802 = vmul.f32 %v2410, %v2690
      %v2803 = vmul.f32 %v2411, %v2690
      %v2804 = vmul.f32 %v2412, %v2690
      %v2805 = vmul.f32 %v2413, %v2690
      %v2806 = vmul.f32 %v2414, %v2690
      %v2807 = vmul.f32 %v2415, %v2690
      %v2808 = vmul.f32 %v2416, %v2690
      %v2809 = vmul.f32 %v2417, %v2690
      %v2810 = vmul.f32 %v2418, %v2690
      %v2811 = vmul.f32 %v2419, %v2690
      %v2812 = vmul.f32 %v2420, %v2690
      %v2813 = vmul.f32 %v2421, %v2690
      %v2814 = vmul.f32 %v2422, %v2690
      %v2815 = vmul.f32 %v2423, %v2690
      %v2816 = vmul.f32 %v2424, %v2690
      %v2817 = vmul.f32 %v2425, %v2690
      %v2818 = vmul.f32 %v2426, %v2690
      %vm2819 = vcmp.ge.f32.partialorder %v2691, 0.0
      %vm2820 = vcmp.ge.f32.partialorder %v2692, 0.0
      %vm2821 = vcmp.ge.f32.partialorder %v2693, 0.0
      %vm2822 = vcmp.ge.f32.partialorder %v2694, 0.0
      %vm2823 = vcmp.ge.f32.partialorder %v2695, 0.0
      %vm2824 = vcmp.ge.f32.partialorder %v2696, 0.0
      %vm2825 = vcmp.ge.f32.partialorder %v2697, 0.0
      %vm2826 = vcmp.ge.f32.partialorder %v2698, 0.0
      %vm2827 = vcmp.ge.f32.partialorder %v2699, 0.0
      %vm2828 = vcmp.ge.f32.partialorder %v2700, 0.0
      %vm2829 = vcmp.ge.f32.partialorder %v2701, 0.0
      %vm2830 = vcmp.ge.f32.partialorder %v2702, 0.0
      %vm2831 = vcmp.ge.f32.partialorder %v2703, 0.0
      %vm2832 = vcmp.ge.f32.partialorder %v2704, 0.0
      %vm2833 = vcmp.ge.f32.partialorder %v2705, 0.0
      %vm2834 = vcmp.ge.f32.partialorder %v2706, 0.0
      %vm2835 = vcmp.ge.f32.partialorder %v2707, 0.0
      %vm2836 = vcmp.ge.f32.partialorder %v2708, 0.0
      %vm2837 = vcmp.ge.f32.partialorder %v2709, 0.0
      %vm2838 = vcmp.ge.f32.partialorder %v2710, 0.0
      %vm2839 = vcmp.ge.f32.partialorder %v2711, 0.0
      %vm2840 = vcmp.ge.f32.partialorder %v2712, 0.0
      %vm2841 = vcmp.ge.f32.partialorder %v2713, 0.0
      %vm2842 = vcmp.ge.f32.partialorder %v2714, 0.0
      %vm2843 = vcmp.ge.f32.partialorder %v2715, 0.0
      %vm2844 = vcmp.ge.f32.partialorder %v2716, 0.0
      %vm2845 = vcmp.ge.f32.partialorder %v2717, 0.0
      %vm2846 = vcmp.ge.f32.partialorder %v2718, 0.0
      %vm2847 = vcmp.ge.f32.partialorder %v2719, 0.0
      %vm2848 = vcmp.ge.f32.partialorder %v2720, 0.0
      %vm2849 = vcmp.ge.f32.partialorder %v2721, 0.0
      %vm2850 = vcmp.ge.f32.partialorder %v2722, 0.0
      %vm2851 = vcmp.ge.f32.partialorder %v2723, 0.0
      %vm2852 = vcmp.ge.f32.partialorder %v2724, 0.0
      %vm2853 = vcmp.ge.f32.partialorder %v2725, 0.0
      %vm2854 = vcmp.ge.f32.partialorder %v2726, 0.0
      %vm2855 = vcmp.ge.f32.partialorder %v2727, 0.0
      %vm2856 = vcmp.ge.f32.partialorder %v2728, 0.0
      %vm2857 = vcmp.ge.f32.partialorder %v2729, 0.0
      %vm2858 = vcmp.ge.f32.partialorder %v2730, 0.0
      %vm2859 = vcmp.ge.f32.partialorder %v2731, 0.0
      %vm2860 = vcmp.ge.f32.partialorder %v2732, 0.0
      %vm2861 = vcmp.ge.f32.partialorder %v2733, 0.0
      %vm2862 = vcmp.ge.f32.partialorder %v2734, 0.0
      %vm2863 = vcmp.ge.f32.partialorder %v2735, 0.0
      %vm2864 = vcmp.ge.f32.partialorder %v2736, 0.0
      %vm2865 = vcmp.ge.f32.partialorder %v2737, 0.0
      %vm2866 = vcmp.ge.f32.partialorder %v2738, 0.0
      %vm2867 = vcmp.ge.f32.partialorder %v2739, 0.0
      %vm2868 = vcmp.ge.f32.partialorder %v2740, 0.0
      %vm2869 = vcmp.ge.f32.partialorder %v2741, 0.0
      %vm2870 = vcmp.ge.f32.partialorder %v2742, 0.0
      %vm2871 = vcmp.ge.f32.partialorder %v2743, 0.0
      %vm2872 = vcmp.ge.f32.partialorder %v2744, 0.0
      %vm2873 = vcmp.ge.f32.partialorder %v2745, 0.0
      %vm2874 = vcmp.ge.f32.partialorder %v2746, 0.0
      %vm2875 = vcmp.ge.f32.partialorder %v2747, 0.0
      %vm2876 = vcmp.ge.f32.partialorder %v2748, 0.0
      %vm2877 = vcmp.ge.f32.partialorder %v2749, 0.0
      %vm2878 = vcmp.ge.f32.partialorder %v2750, 0.0
      %vm2879 = vcmp.ge.f32.partialorder %v2751, 0.0
      %vm2880 = vcmp.ge.f32.partialorder %v2752, 0.0
      %vm2881 = vcmp.ge.f32.partialorder %v2753, 0.0
      %vm2882 = vcmp.ge.f32.partialorder %v2754, 0.0
      %vm2883 = vcmp.ge.f32.partialorder %v2755, 0.0
      %vm2884 = vcmp.ge.f32.partialorder %v2756, 0.0
      %vm2885 = vcmp.ge.f32.partialorder %v2757, 0.0
      %vm2886 = vcmp.ge.f32.partialorder %v2758, 0.0
      %vm2887 = vcmp.ge.f32.partialorder %v2759, 0.0
      %vm2888 = vcmp.ge.f32.partialorder %v2760, 0.0
      %vm2889 = vcmp.ge.f32.partialorder %v2761, 0.0
      %vm2890 = vcmp.ge.f32.partialorder %v2762, 0.0
      %vm2891 = vcmp.ge.f32.partialorder %v2763, 0.0
      %vm2892 = vcmp.ge.f32.partialorder %v2764, 0.0
      %vm2893 = vcmp.ge.f32.partialorder %v2765, 0.0
      %vm2894 = vcmp.ge.f32.partialorder %v2766, 0.0
      %vm2895 = vcmp.ge.f32.partialorder %v2767, 0.0
      %vm2896 = vcmp.ge.f32.partialorder %v2768, 0.0
      %vm2897 = vcmp.ge.f32.partialorder %v2769, 0.0
      %vm2898 = vcmp.ge.f32.partialorder %v2770, 0.0
      %vm2899 = vcmp.ge.f32.partialorder %v2771, 0.0
      %vm2900 = vcmp.ge.f32.partialorder %v2772, 0.0
      %vm2901 = vcmp.ge.f32.partialorder %v2773, 0.0
      %vm2902 = vcmp.ge.f32.partialorder %v2774, 0.0
      %vm2903 = vcmp.ge.f32.partialorder %v2775, 0.0
      %vm2904 = vcmp.ge.f32.partialorder %v2776, 0.0
      %vm2905 = vcmp.ge.f32.partialorder %v2777, 0.0
      %vm2906 = vcmp.ge.f32.partialorder %v2778, 0.0
      %vm2907 = vcmp.ge.f32.partialorder %v2779, 0.0
      %vm2908 = vcmp.ge.f32.partialorder %v2780, 0.0
      %vm2909 = vcmp.ge.f32.partialorder %v2781, 0.0
      %vm2910 = vcmp.ge.f32.partialorder %v2782, 0.0
      %vm2911 = vcmp.ge.f32.partialorder %v2783, 0.0
      %vm2912 = vcmp.ge.f32.partialorder %v2784, 0.0
      %vm2913 = vcmp.ge.f32.partialorder %v2785, 0.0
      %vm2914 = vcmp.ge.f32.partialorder %v2786, 0.0
      %vm2915 = vcmp.ge.f32.partialorder %v2787, 0.0
      %vm2916 = vcmp.ge.f32.partialorder %v2788, 0.0
      %vm2917 = vcmp.ge.f32.partialorder %v2789, 0.0
      %vm2918 = vcmp.ge.f32.partialorder %v2790, 0.0
      %vm2919 = vcmp.ge.f32.partialorder %v2791, 0.0
      %vm2920 = vcmp.ge.f32.partialorder %v2792, 0.0
      %vm2921 = vcmp.ge.f32.partialorder %v2793, 0.0
      %vm2922 = vcmp.ge.f32.partialorder %v2794, 0.0
      %vm2923 = vcmp.ge.f32.partialorder %v2795, 0.0
      %vm2924 = vcmp.ge.f32.partialorder %v2796, 0.0
      %vm2925 = vcmp.ge.f32.partialorder %v2797, 0.0
      %vm2926 = vcmp.ge.f32.partialorder %v2798, 0.0
      %vm2927 = vcmp.ge.f32.partialorder %v2799, 0.0
      %vm2928 = vcmp.ge.f32.partialorder %v2800, 0.0
      %vm2929 = vcmp.ge.f32.partialorder %v2801, 0.0
      %vm2930 = vcmp.ge.f32.partialorder %v2802, 0.0
      %vm2931 = vcmp.ge.f32.partialorder %v2803, 0.0
      %vm2932 = vcmp.ge.f32.partialorder %v2804, 0.0
      %vm2933 = vcmp.ge.f32.partialorder %v2805, 0.0
      %vm2934 = vcmp.ge.f32.partialorder %v2806, 0.0
      %vm2935 = vcmp.ge.f32.partialorder %v2807, 0.0
      %vm2936 = vcmp.ge.f32.partialorder %v2808, 0.0
      %vm2937 = vcmp.ge.f32.partialorder %v2809, 0.0
      %vm2938 = vcmp.ge.f32.partialorder %v2810, 0.0
      %vm2939 = vcmp.ge.f32.partialorder %v2811, 0.0
      %vm2940 = vcmp.ge.f32.partialorder %v2812, 0.0
      %vm2941 = vcmp.ge.f32.partialorder %v2813, 0.0
      %vm2942 = vcmp.ge.f32.partialorder %v2814, 0.0
      %vm2943 = vcmp.ge.f32.partialorder %v2815, 0.0
      %vm2944 = vcmp.ge.f32.partialorder %v2816, 0.0
      %vm2945 = vcmp.ge.f32.partialorder %v2817, 0.0
      %vm2946 = vcmp.ge.f32.partialorder %v2818, 0.0
      %v2947 = vmul.f32 %v2691, 0.01
      %v2948 = vmul.f32 %v2692, 0.01
      %v2949 = vmul.f32 %v2693, 0.01
      %v2950 = vmul.f32 %v2694, 0.01
      %v2951 = vmul.f32 %v2695, 0.01
      %v2952 = vmul.f32 %v2696, 0.01
      %v2953 = vmul.f32 %v2697, 0.01
      %v2954 = vmul.f32 %v2698, 0.01
      %v2955 = vmul.f32 %v2699, 0.01
      %v2956 = vmul.f32 %v2700, 0.01
      %v2957 = vmul.f32 %v2701, 0.01
      %v2958 = vmul.f32 %v2702, 0.01
      %v2959 = vmul.f32 %v2703, 0.01
      %v2960 = vmul.f32 %v2704, 0.01
      %v2961 = vmul.f32 %v2705, 0.01
      %v2962 = vmul.f32 %v2706, 0.01
      %v2963 = vmul.f32 %v2707, 0.01
      %v2964 = vmul.f32 %v2708, 0.01
      %v2965 = vmul.f32 %v2709, 0.01
      %v2966 = vmul.f32 %v2710, 0.01
      %v2967 = vmul.f32 %v2711, 0.01
      %v2968 = vmul.f32 %v2712, 0.01
      %v2969 = vmul.f32 %v2713, 0.01
      %v2970 = vmul.f32 %v2714, 0.01
      %v2971 = vmul.f32 %v2715, 0.01
      %v2972 = vmul.f32 %v2716, 0.01
      %v2973 = vmul.f32 %v2717, 0.01
      %v2974 = vmul.f32 %v2718, 0.01
      %v2975 = vmul.f32 %v2719, 0.01
      %v2976 = vmul.f32 %v2720, 0.01
      %v2977 = vmul.f32 %v2721, 0.01
      %v2978 = vmul.f32 %v2722, 0.01
      %v2979 = vmul.f32 %v2723, 0.01
      %v2980 = vmul.f32 %v2724, 0.01
      %v2981 = vmul.f32 %v2725, 0.01
      %v2982 = vmul.f32 %v2726, 0.01
      %v2983 = vmul.f32 %v2727, 0.01
      %v2984 = vmul.f32 %v2728, 0.01
      %v2985 = vmul.f32 %v2729, 0.01
      %v2986 = vmul.f32 %v2730, 0.01
      %v2987 = vmul.f32 %v2731, 0.01
      %v2988 = vmul.f32 %v2732, 0.01
      %v2989 = vmul.f32 %v2733, 0.01
      %v2990 = vmul.f32 %v2734, 0.01
      %v2991 = vmul.f32 %v2735, 0.01
      %v2992 = vmul.f32 %v2736, 0.01
      %v2993 = vmul.f32 %v2737, 0.01
      %v2994 = vmul.f32 %v2738, 0.01
      %v2995 = vmul.f32 %v2739, 0.01
      %v2996 = vmul.f32 %v2740, 0.01
      %v2997 = vmul.f32 %v2741, 0.01
      %v2998 = vmul.f32 %v2742, 0.01
      %v2999 = vmul.f32 %v2743, 0.01
      %v3000 = vmul.f32 %v2744, 0.01
      %v3001 = vmul.f32 %v2745, 0.01
      %v3002 = vmul.f32 %v2746, 0.01
      %v3003 = vmul.f32 %v2747, 0.01
      %v3004 = vmul.f32 %v2748, 0.01
      %v3005 = vmul.f32 %v2749, 0.01
      %v3006 = vmul.f32 %v2750, 0.01
      %v3007 = vmul.f32 %v2751, 0.01
      %v3008 = vmul.f32 %v2752, 0.01
      %v3009 = vmul.f32 %v2753, 0.01
      %v3010 = vmul.f32 %v2754, 0.01
      %v3011 = vmul.f32 %v2755, 0.01
      %v3012 = vmul.f32 %v2756, 0.01
      %v3013 = vmul.f32 %v2757, 0.01
      %v3014 = vmul.f32 %v2758, 0.01
      %v3015 = vmul.f32 %v2759, 0.01
      %v3016 = vmul.f32 %v2760, 0.01
      %v3017 = vmul.f32 %v2761, 0.01
      %v3018 = vmul.f32 %v2762, 0.01
      %v3019 = vmul.f32 %v2763, 0.01
      %v3020 = vmul.f32 %v2764, 0.01
      %v3021 = vmul.f32 %v2765, 0.01
      %v3022 = vmul.f32 %v2766, 0.01
      %v3023 = vmul.f32 %v2767, 0.01
      %v3024 = vmul.f32 %v2768, 0.01
      %v3025 = vmul.f32 %v2769, 0.01
      %v3026 = vmul.f32 %v2770, 0.01
      %v3027 = vmul.f32 %v2771, 0.01
      %v3028 = vmul.f32 %v2772, 0.01
      %v3029 = vmul.f32 %v2773, 0.01
      %v3030 = vmul.f32 %v2774, 0.01
      %v3031 = vmul.f32 %v2775, 0.01
      %v3032 = vmul.f32 %v2776, 0.01
      %v3033 = vmul.f32 %v2777, 0.01
      %v3034 = vmul.f32 %v2778, 0.01
      %v3035 = vmul.f32 %v2779, 0.01
      %v3036 = vmul.f32 %v2780, 0.01
      %v3037 = vmul.f32 %v2781, 0.01
      %v3038 = vmul.f32 %v2782, 0.01
      %v3039 = vmul.f32 %v2783, 0.01
      %v3040 = vmul.f32 %v2784, 0.01
      %v3041 = vmul.f32 %v2785, 0.01
      %v3042 = vmul.f32 %v2786, 0.01
      %v3043 = vmul.f32 %v2787, 0.01
      %v3044 = vmul.f32 %v2788, 0.01
      %v3045 = vmul.f32 %v2789, 0.01
      %v3046 = vmul.f32 %v2790, 0.01
      %v3047 = vmul.f32 %v2791, 0.01
      %v3048 = vmul.f32 %v2792, 0.01
      %v3049 = vmul.f32 %v2793, 0.01
      %v3050 = vmul.f32 %v2794, 0.01
      %v3051 = vmul.f32 %v2795, 0.01
      %v3052 = vmul.f32 %v2796, 0.01
      %v3053 = vmul.f32 %v2797, 0.01
      %v3054 = vmul.f32 %v2798, 0.01
      %v3055 = vmul.f32 %v2799, 0.01
      %v3056 = vmul.f32 %v2800, 0.01
      %v3057 = vmul.f32 %v2801, 0.01
      %v3058 = vmul.f32 %v2802, 0.01
      %v3059 = vmul.f32 %v2803, 0.01
      %v3060 = vmul.f32 %v2804, 0.01
      %v3061 = vmul.f32 %v2805, 0.01
      %v3062 = vmul.f32 %v2806, 0.01
      %v3063 = vmul.f32 %v2807, 0.01
      %v3064 = vmul.f32 %v2808, 0.01
      %v3065 = vmul.f32 %v2809, 0.01
      %v3066 = vmul.f32 %v2810, 0.01
      %v3067 = vmul.f32 %v2811, 0.01
      %v3068 = vmul.f32 %v2812, 0.01
      %v3069 = vmul.f32 %v2813, 0.01
      %v3070 = vmul.f32 %v2814, 0.01
      %v3071 = vmul.f32 %v2815, 0.01
      %v3072 = vmul.f32 %v2816, 0.01
      %v3073 = vmul.f32 %v2817, 0.01
      %v3074 = vmul.f32 %v2818, 0.01
      %v3075 = vsel %vm2819, %v2691, %v2947
      %v3076 = vsel %vm2820, %v2692, %v2948
      %v3077 = vsel %vm2821, %v2693, %v2949
      %v3078 = vsel %vm2822, %v2694, %v2950
      %v3079 = vsel %vm2823, %v2695, %v2951
      %v3080 = vsel %vm2824, %v2696, %v2952
      %v3081 = vsel %vm2825, %v2697, %v2953
      %v3082 = vsel %vm2826, %v2698, %v2954
      %v3083 = vsel %vm2827, %v2699, %v2955
      %v3084 = vsel %vm2828, %v2700, %v2956
      %v3085 = vsel %vm2829, %v2701, %v2957
      %v3086 = vsel %vm2830, %v2702, %v2958
      %v3087 = vsel %vm2831, %v2703, %v2959
      %v3088 = vsel %vm2832, %v2704, %v2960
      %v3089 = vsel %vm2833, %v2705, %v2961
      %v3090 = vsel %vm2834, %v2706, %v2962
      %v3091 = vsel %vm2835, %v2707, %v2963
      %v3092 = vsel %vm2836, %v2708, %v2964
      %v3093 = vsel %vm2837, %v2709, %v2965
      %v3094 = vsel %vm2838, %v2710, %v2966
      %v3095 = vsel %vm2839, %v2711, %v2967
      %v3096 = vsel %vm2840, %v2712, %v2968
      %v3097 = vsel %vm2841, %v2713, %v2969
      %v3098 = vsel %vm2842, %v2714, %v2970
      %v3099 = vsel %vm2843, %v2715, %v2971
      %v3100 = vsel %vm2844, %v2716, %v2972
      %v3101 = vsel %vm2845, %v2717, %v2973
      %v3102 = vsel %vm2846, %v2718, %v2974
      %v3103 = vsel %vm2847, %v2719, %v2975
      %v3104 = vsel %vm2848, %v2720, %v2976
      %v3105 = vsel %vm2849, %v2721, %v2977
      %v3106 = vsel %vm2850, %v2722, %v2978
      %v3107 = vsel %vm2851, %v2723, %v2979
      %v3108 = vsel %vm2852, %v2724, %v2980
      %v3109 = vsel %vm2853, %v2725, %v2981
      %v3110 = vsel %vm2854, %v2726, %v2982
      %v3111 = vsel %vm2855, %v2727, %v2983
      %v3112 = vsel %vm2856, %v2728, %v2984
      %v3113 = vsel %vm2857, %v2729, %v2985
      %v3114 = vsel %vm2858, %v2730, %v2986
      %v3115 = vsel %vm2859, %v2731, %v2987
      %v3116 = vsel %vm2860, %v2732, %v2988
      %v3117 = vsel %vm2861, %v2733, %v2989
      %v3118 = vsel %vm2862, %v2734, %v2990
      %v3119 = vsel %vm2863, %v2735, %v2991
      %v3120 = vsel %vm2864, %v2736, %v2992
      %v3121 = vsel %vm2865, %v2737, %v2993
      %v3122 = vsel %vm2866, %v2738, %v2994
      %v3123 = vsel %vm2867, %v2739, %v2995
      %v3124 = vsel %vm2868, %v2740, %v2996
      %v3125 = vsel %vm2869, %v2741, %v2997
      %v3126 = vsel %vm2870, %v2742, %v2998
      %v3127 = vsel %vm2871, %v2743, %v2999
      %v3128 = vsel %vm2872, %v2744, %v3000
      %v3129 = vsel %vm2873, %v2745, %v3001
      %v3130 = vsel %vm2874, %v2746, %v3002
      %v3131 = vsel %vm2875, %v2747, %v3003
      %v3132 = vsel %vm2876, %v2748, %v3004
      %v3133 = vsel %vm2877, %v2749, %v3005
      %v3134 = vsel %vm2878, %v2750, %v3006
      %v3135 = vsel %vm2879, %v2751, %v3007
      %v3136 = vsel %vm2880, %v2752, %v3008
      %v3137 = vsel %vm2881, %v2753, %v3009
      %v3138 = vsel %vm2882, %v2754, %v3010
      %v3139 = vsel %vm2883, %v2755, %v3011
      %v3140 = vsel %vm2884, %v2756, %v3012
      %v3141 = vsel %vm2885, %v2757, %v3013
      %v3142 = vsel %vm2886, %v2758, %v3014
      %v3143 = vsel %vm2887, %v2759, %v3015
      %v3144 = vsel %vm2888, %v2760, %v3016
      %v3145 = vsel %vm2889, %v2761, %v3017
      %v3146 = vsel %vm2890, %v2762, %v3018
      %v3147 = vsel %vm2891, %v2763, %v3019
      %v3148 = vsel %vm2892, %v2764, %v3020
      %v3149 = vsel %vm2893, %v2765, %v3021
      %v3150 = vsel %vm2894, %v2766, %v3022
      %v3151 = vsel %vm2895, %v2767, %v3023
      %v3152 = vsel %vm2896, %v2768, %v3024
      %v3153 = vsel %vm2897, %v2769, %v3025
      %v3154 = vsel %vm2898, %v2770, %v3026
      %v3155 = vsel %vm2899, %v2771, %v3027
      %v3156 = vsel %vm2900, %v2772, %v3028
      %v3157 = vsel %vm2901, %v2773, %v3029
      %v3158 = vsel %vm2902, %v2774, %v3030
      %v3159 = vsel %vm2903, %v2775, %v3031
      %v3160 = vsel %vm2904, %v2776, %v3032
      %v3161 = vsel %vm2905, %v2777, %v3033
      %v3162 = vsel %vm2906, %v2778, %v3034
      %v3163 = vsel %vm2907, %v2779, %v3035
      %v3164 = vsel %vm2908, %v2780, %v3036
      %v3165 = vsel %vm2909, %v2781, %v3037
      %v3166 = vsel %vm2910, %v2782, %v3038
      %v3167 = vsel %vm2911, %v2783, %v3039
      %v3168 = vsel %vm2912, %v2784, %v3040
      %v3169 = vsel %vm2913, %v2785, %v3041
      %v3170 = vsel %vm2914, %v2786, %v3042
      %v3171 = vsel %vm2915, %v2787, %v3043
      %v3172 = vsel %vm2916, %v2788, %v3044
      %v3173 = vsel %vm2917, %v2789, %v3045
      %v3174 = vsel %vm2918, %v2790, %v3046
      %v3175 = vsel %vm2919, %v2791, %v3047
      %v3176 = vsel %vm2920, %v2792, %v3048
      %v3177 = vsel %vm2921, %v2793, %v3049
      %v3178 = vsel %vm2922, %v2794, %v3050
      %v3179 = vsel %vm2923, %v2795, %v3051
      %v3180 = vsel %vm2924, %v2796, %v3052
      %v3181 = vsel %vm2925, %v2797, %v3053
      %v3182 = vsel %vm2926, %v2798, %v3054
      %v3183 = vsel %vm2927, %v2799, %v3055
      %v3184 = vsel %vm2928, %v2800, %v3056
      %v3185 = vsel %vm2929, %v2801, %v3057
      %v3186 = vsel %vm2930, %v2802, %v3058
      %v3187 = vsel %vm2931, %v2803, %v3059
      %v3188 = vsel %vm2932, %v2804, %v3060
      %v3189 = vsel %vm2933, %v2805, %v3061
      %v3190 = vsel %vm2934, %v2806, %v3062
      %v3191 = vsel %vm2935, %v2807, %v3063
      %v3192 = vsel %vm2936, %v2808, %v3064
      %v3193 = vsel %vm2937, %v2809, %v3065
      %v3194 = vsel %vm2938, %v2810, %v3066
      %v3195 = vsel %vm2939, %v2811, %v3067
      %v3196 = vsel %vm2940, %v2812, %v3068
      %v3197 = vsel %vm2941, %v2813, %v3069
      %v3198 = vsel %vm2942, %v2814, %v3070
      %v3199 = vsel %vm2943, %v2815, %v3071
      %v3200 = vsel %vm2944, %v2816, %v3072
      %v3201 = vsel %vm2945, %v2817, %v3073
      %v3202 = vsel %vm2946, %v2818, %v3074
      %3203 = vst [vmem:[%s170] sm:$0xff] %v3075
      %3204 = vst [vmem:[%s170 + $0x8] sm:$0xff] %v3076
      %3205 = vst [vmem:[%s170 + $0x10] sm:$0xff] %v3077
      %3206 = vst [vmem:[%s170 + $0x18] sm:$0xff] %v3078
      %3207 = vst [vmem:[%s170 + $0x20] sm:$0xff] %v3079
      %3208 = vst [vmem:[%s170 + $0x28] sm:$0xff] %v3080
      %3209 = vst [vmem:[%s170 + $0x30] sm:$0xff] %v3081
      %3210 = vst [vmem:[%s170 + $0x38] sm:$0xff] %v3082
      %3211 = vst [vmem:[%s170 + $0x40] sm:$0xff] %v3083
      %3212 = vst [vmem:[%s170 + $0x48] sm:$0xff] %v3084
      %3213 = vst [vmem:[%s170 + $0x50] sm:$0xff] %v3085
      %3214 = vst [vmem:[%s170 + $0x58] sm:$0xff] %v3086
      %3215 = vst [vmem:[%s170 + $0x60] sm:$0xff] %v3087
      %3216 = vst [vmem:[%s170 + $0x68] sm:$0xff] %v3088
      %3217 = vst [vmem:[%s170 + $0x70] sm:$0xff] %v3089
      %3218 = vst [vmem:[%s170 + $0x78] sm:$0xff] %v3090
      %3219 = vst [vmem:[%s170 + $0x80] sm:$0xff] %v3091
      %3220 = vst [vmem:[%s170 + $0x88] sm:$0xff] %v3092
      %3221 = vst [vmem:[%s170 + $0x90] sm:$0xff] %v3093
      %3222 = vst [vmem:[%s170 + $0x98] sm:$0xff] %v3094
      %3223 = vst [vmem:[%s170 + $0xa0] sm:$0xff] %v3095
      %3224 = vst [vmem:[%s170 + $0xa8] sm:$0xff] %v3096
      %3225 = vst [vmem:[%s170 + $0xb0] sm:$0xff] %v3097
      %3226 = vst [vmem:[%s170 + $0xb8] sm:$0xff] %v3098
      %3227 = vst [vmem:[%s170 + $0xc0] sm:$0xff] %v3099
      %3228 = vst [vmem:[%s170 + $0xc8] sm:$0xff] %v3100
      %3229 = vst [vmem:[%s170 + $0xd0] sm:$0xff] %v3101
      %3230 = vst [vmem:[%s170 + $0xd8] sm:$0xff] %v3102
      %3231 = vst [vmem:[%s170 + $0xe0] sm:$0xff] %v3103
      %3232 = vst [vmem:[%s170 + $0xe8] sm:$0xff] %v3104
      %3233 = vst [vmem:[%s170 + $0xf0] sm:$0xff] %v3105
      %3234 = vst [vmem:[%s170 + $0xf8] sm:$0xff] %v3106
      %3235 = vst [vmem:[%s170 + $0x100] sm:$0xff] %v3107
      %3236 = vst [vmem:[%s170 + $0x108] sm:$0xff] %v3108
      %3237 = vst [vmem:[%s170 + $0x110] sm:$0xff] %v3109
      %3238 = vst [vmem:[%s170 + $0x118] sm:$0xff] %v3110
      %3239 = vst [vmem:[%s170 + $0x120] sm:$0xff] %v3111
      %3240 = vst [vmem:[%s170 + $0x128] sm:$0xff] %v3112
      %3241 = vst [vmem:[%s170 + $0x130] sm:$0xff] %v3113
      %3242 = vst [vmem:[%s170 + $0x138] sm:$0xff] %v3114
      %3243 = vst [vmem:[%s170 + $0x140] sm:$0xff] %v3115
      %3244 = vst [vmem:[%s170 + $0x148] sm:$0xff] %v3116
      %3245 = vst [vmem:[%s170 + $0x150] sm:$0xff] %v3117
      %3246 = vst [vmem:[%s170 + $0x158] sm:$0xff] %v3118
      %3247 = vst [vmem:[%s170 + $0x160] sm:$0xff] %v3119
      %3248 = vst [vmem:[%s170 + $0x168] sm:$0xff] %v3120
      %3249 = vst [vmem:[%s170 + $0x170] sm:$0xff] %v3121
      %3250 = vst [vmem:[%s170 + $0x178] sm:$0xff] %v3122
      %3251 = vst [vmem:[%s170 + $0x180] sm:$0xff] %v3123
      %3252 = vst [vmem:[%s170 + $0x188] sm:$0xff] %v3124
      %3253 = vst [vmem:[%s170 + $0x190] sm:$0xff] %v3125
      %3254 = vst [vmem:[%s170 + $0x198] sm:$0xff] %v3126
      %3255 = vst [vmem:[%s170 + $0x1a0] sm:$0xff] %v3127
      %3256 = vst [vmem:[%s170 + $0x1a8] sm:$0xff] %v3128
      %3257 = vst [vmem:[%s170 + $0x1b0] sm:$0xff] %v3129
      %3258 = vst [vmem:[%s170 + $0x1b8] sm:$0xff] %v3130
      %3259 = vst [vmem:[%s170 + $0x1c0] sm:$0xff] %v3131
      %3260 = vst [vmem:[%s170 + $0x1c8] sm:$0xff] %v3132
      %3261 = vst [vmem:[%s170 + $0x1d0] sm:$0xff] %v3133
      %3262 = vst [vmem:[%s170 + $0x1d8] sm:$0xff] %v3134
      %3263 = vst [vmem:[%s170 + $0x1e0] sm:$0xff] %v3135
      %3264 = vst [vmem:[%s170 + $0x1e8] sm:$0xff] %v3136
      %3265 = vst [vmem:[%s170 + $0x1f0] sm:$0xff] %v3137
      %3266 = vst [vmem:[%s170 + $0x1f8] sm:$0xff] %v3138
      %3267 = vst [vmem:[%s170 + $0x200] sm:$0xff] %v3139
      %3268 = vst [vmem:[%s170 + $0x208] sm:$0xff] %v3140
      %3269 = vst [vmem:[%s170 + $0x210] sm:$0xff] %v3141
      %3270 = vst [vmem:[%s170 + $0x218] sm:$0xff] %v3142
      %3271 = vst [vmem:[%s170 + $0x220] sm:$0xff] %v3143
      %3272 = vst [vmem:[%s170 + $0x228] sm:$0xff] %v3144
      %3273 = vst [vmem:[%s170 + $0x230] sm:$0xff] %v3145
      %3274 = vst [vmem:[%s170 + $0x238] sm:$0xff] %v3146
      %3275 = vst [vmem:[%s170 + $0x240] sm:$0xff] %v3147
      %3276 = vst [vmem:[%s170 + $0x248] sm:$0xff] %v3148
      %3277 = vst [vmem:[%s170 + $0x250] sm:$0xff] %v3149
      %3278 = vst [vmem:[%s170 + $0x258] sm:$0xff] %v3150
      %3279 = vst [vmem:[%s170 + $0x260] sm:$0xff] %v3151
      %3280 = vst [vmem:[%s170 + $0x268] sm:$0xff] %v3152
      %3281 = vst [vmem:[%s170 + $0x270] sm:$0xff] %v3153
      %3282 = vst [vmem:[%s170 + $0x278] sm:$0xff] %v3154
      %3283 = vst [vmem:[%s170 + $0x280] sm:$0xff] %v3155
      %3284 = vst [vmem:[%s170 + $0x288] sm:$0xff] %v3156
      %3285 = vst [vmem:[%s170 + $0x290] sm:$0xff] %v3157
      %3286 = vst [vmem:[%s170 + $0x298] sm:$0xff] %v3158
      %3287 = vst [vmem:[%s170 + $0x2a0] sm:$0xff] %v3159
      %3288 = vst [vmem:[%s170 + $0x2a8] sm:$0xff] %v3160
      %3289 = vst [vmem:[%s170 + $0x2b0] sm:$0xff] %v3161
      %3290 = vst [vmem:[%s170 + $0x2b8] sm:$0xff] %v3162
      %3291 = vst [vmem:[%s170 + $0x2c0] sm:$0xff] %v3163
      %3292 = vst [vmem:[%s170 + $0x2c8] sm:$0xff] %v3164
      %3293 = vst [vmem:[%s170 + $0x2d0] sm:$0xff] %v3165
      %3294 = vst [vmem:[%s170 + $0x2d8] sm:$0xff] %v3166
      %3295 = vst [vmem:[%s170 + $0x2e0] sm:$0xff] %v3167
      %3296 = vst [vmem:[%s170 + $0x2e8] sm:$0xff] %v3168
      %3297 = vst [vmem:[%s170 + $0x2f0] sm:$0xff] %v3169
      %3298 = vst [vmem:[%s170 + $0x2f8] sm:$0xff] %v3170
      %3299 = vst [vmem:[%s170 + $0x300] sm:$0xff] %v3171
      %3300 = vst [vmem:[%s170 + $0x308] sm:$0xff] %v3172
      %3301 = vst [vmem:[%s170 + $0x310] sm:$0xff] %v3173
      %3302 = vst [vmem:[%s170 + $0x318] sm:$0xff] %v3174
      %3303 = vst [vmem:[%s170 + $0x320] sm:$0xff] %v3175
      %3304 = vst [vmem:[%s170 + $0x328] sm:$0xff] %v3176
      %3305 = vst [vmem:[%s170 + $0x330] sm:$0xff] %v3177
      %3306 = vst [vmem:[%s170 + $0x338] sm:$0xff] %v3178
      %3307 = vst [vmem:[%s170 + $0x340] sm:$0xff] %v3179
      %3308 = vst [vmem:[%s170 + $0x348] sm:$0xff] %v3180
      %3309 = vst [vmem:[%s170 + $0x350] sm:$0xff] %v3181
      %3310 = vst [vmem:[%s170 + $0x358] sm:$0xff] %v3182
      %3311 = vst [vmem:[%s170 + $0x360] sm:$0xff] %v3183
      %3312 = vst [vmem:[%s170 + $0x368] sm:$0xff] %v3184
      %3313 = vst [vmem:[%s170 + $0x370] sm:$0xff] %v3185
      %3314 = vst [vmem:[%s170 + $0x378] sm:$0xff] %v3186
      %3315 = vst [vmem:[%s170 + $0x380] sm:$0xff] %v3187
      %3316 = vst [vmem:[%s170 + $0x388] sm:$0xff] %v3188
      %3317 = vst [vmem:[%s170 + $0x390] sm:$0xff] %v3189
      %3318 = vst [vmem:[%s170 + $0x398] sm:$0xff] %v3190
      %3319 = vst [vmem:[%s170 + $0x3a0] sm:$0xff] %v3191
      %3320 = vst [vmem:[%s170 + $0x3a8] sm:$0xff] %v3192
      %3321 = vst [vmem:[%s170 + $0x3b0] sm:$0xff] %v3193
      %3322 = vst [vmem:[%s170 + $0x3b8] sm:$0xff] %v3194
      %3323 = vst [vmem:[%s170 + $0x3c0] sm:$0xff] %v3195
      %3324 = vst [vmem:[%s170 + $0x3c8] sm:$0xff] %v3196
      %3325 = vst [vmem:[%s170 + $0x3d0] sm:$0xff] %v3197
      %3326 = vst [vmem:[%s170 + $0x3d8] sm:$0xff] %v3198
      %3327 = vst [vmem:[%s170 + $0x3e0] sm:$0xff] %v3199
      %3328 = vst [vmem:[%s170 + $0x3e8] sm:$0xff] %v3200
      %3329 = vst [vmem:[%s170 + $0x3f0] sm:$0xff] %v3201
      %3330 = vst [vmem:[%s170 + $0x3f8] sm:$0xff] %v3202
      %p3331 = scmp.lt.s32.totalorder %s14, 1
      %s3332 = scalar_select %p3331, %s14, 1
      %s3333 = smul.addr %s3332, 128
      %s3334 = smul.addr %s3333, 8
      %s3335 = scalar_lea.vmem %s3, %s3334
      // Predicated region
      $region33: #{up_forward.1} parent=31 // pred_check
        %p3336 = pneg %p100
      $region34: #{up_forward.1} parent=31 // pred_check_branch
        %3338 = sbr.rel (%p3336) target = $region36
      $region35: #{up_forward.1} parent=31 // pred_region
        _
      $region36: #{up_forward.1} parent=31 // pred_fallthru
        _
    $region32: #{up_forward.1} parent=5 // pred_fallthru
      _
    %p3339 = scmp.le.s32.totalorder 2, %s9
    // Predicated region
    $region37: #{up_forward.1} parent=5 // pred_check
      %p3340 = pneg %p3339
    $region38: #{up_forward.1} parent=5 // pred_check_branch
      %3342 = sbr.rel (%p3340) target = $region40
    $region39: #{up_forward.1} parent=5 // pred_region
      %s3343 = ssub.s32 %s9, 2
      // Predicated region
      $region41: #{up_forward.1} parent=39 // pred_check
        %p3344 = pneg %p106
      $region42: #{up_forward.1} parent=39 // pred_check_branch
        %3346 = sbr.rel (%p3344) target = $region44
      $region43: #{up_forward.1} parent=39 // pred_region
        %p3347 = scmp.lt.s32.totalorder %s15, 1
        %s3348 = scalar_select %p3347, %s15, 1
        %s3349 = smul.addr %s3348, 128
        %s3350 = smul.addr %s3349, 8
        %s3351 = scalar_lea.vmem %s3, %s3350
      $region44: #{up_forward.1} parent=39 // pred_fallthru
        _
    $region40: #{up_forward.1} parent=5 // pred_fallthru
      _
  $region6: #{up_forward.1} parent=0 // loop_footer
    %s13 = sadd.s32 1, %s9
  $region7: #{up_forward.1} parent=0 // loop_footer_branch
    %8 = sbr.rel target = $region3
  $region8: #{up_forward.1} parent=0 // loop_exit
    _

</llo_original>
